<compile_context>
chip_gen: v7x
topology: tpu7x:2x2x1
jax: 0.10.0
libtpu: 0.0.40
codegen_flags: <defaults>
</compile_context>

<pallas_src>
import numpy as np
import jax
import jax.numpy as jnp
from jax import lax
from jax.experimental import pallas as pl
from jax.experimental.pallas import tpu as pltpu

# ---------------- config (small shapes consistent with the module) ----------------
INPUT_DIM = 4
HIDDEN = 32
OUTPUT_DIM = 1            # head below is specialized to a 1-wide output column
SEQ_LEN = 8
BATCH = 2
BLOCK_SIZE = 3
AGGREGATE = "last"        # module default path; "mean" also supported
KEEP_SELF_LOOPS = False
ENFORCE_CONSECUTIVE = False
H2 = HIDDEN // 2
BN_EPS = 1e-5

N_NODES = BATCH * SEQ_LEN                 # 16 (batch folded into matmul M dim)

# compat shim for older releases that still call it TPUCompilerParams
_CompilerParams = getattr(pltpu, "CompilerParams", None) or getattr(pltpu, "TPUCompilerParams")


def _conv_offsets(ksize, dilation):
    # PyTorch Conv1d padding='same' (odd kernel): tap k reads x[i + (k - k//2)*dilation]
    return [(k - ksize // 2) * dilation for k in range(ksize)]


# Unique tap offsets that can ever touch a valid position (for S=8: -5,-3,0,3,5;
# the +-10 taps of the k=5/dil=5 conv never land in-range and fold away).
TAP_OFFSETS = tuple(sorted({
    o for o in _conv_offsets(3, 3) + _conv_offsets(5, 5) + [0]
    if any(0 <= i + o < SEQ_LEN for i in range(SEQ_LEN))
}))
N_TAPS = len(TAP_OFFSETS)

# rows of the packed (32, 32) vector slab
ROW_B1, ROW_WD = 0, 1
ROW_GAMMA, ROW_BETA = 2, 5          # 3 rows each
ROW_BFE, ROW_WOUT = 8, 9
ROW_GW, ROW_GWB, ROW_BOUT = 10, 13, 14
ROW_WFE = 16                         # rows 16..31: fc_extra weight^T
VSLAB_ROWS = 32


# ---------------- the single fused kernel ----------------
def _timegnn_kernel(data_ref, gplus_ref, tapmask_ref, gstack_ref, posb_ref,
                    wuv_ref, kf_ref, wcat_ref, vslab_ref, out_ref):
    f32 = jnp.float32
    B, S, H, N = BATCH, SEQ_LEN, HIDDEN, N_NODES

    # ---- stage 1: folded temporal convs + fc_final -> ONE matmul ----
    d = data_ref[0]                                            # (N, Din)
    dd = jnp.concatenate([d, d], axis=0)                       # row-doubled: cheap static "rolls"
    pieces = []
    for off in TAP_OFFSETS:
        if off == 0:
            pieces.append(d)
        else:
            k = off % N
            pieces.append(dd[k:k + N, :])                      # row i holds d[(i+off) mod N]
    dcat = jnp.concatenate(pieces, axis=1) * tapmask_ref[...]  # (N, N_TAPS*Din), zero-padded taps
    x = jnp.maximum(jnp.dot(dcat, gstack_ref[...], preferred_element_type=f32)
                    + posb_ref[...], 0.0)                      # (N, H) node features

    # ---- stage 2: edge MLP + hard Gumbel-softmax -> normalized (B,S,S) adjacency ----
    uv = jnp.dot(x, wuv_ref[...], preferred_element_type=f32)  # (N, 2H): sender | receiver proj
    u3 = uv[:, :H].reshape(B, S, H)                            # sender projection
    v3 = uv[:, H:].reshape(B, S, H)                            # receiver projection
    b1 = vslab_ref[ROW_B1:ROW_B1 + 1, :]
    # hid[b, c, r, :] corresponds to dense-adj entry (row r, col c): sender = c, receiver = r
    hid = jnp.maximum(u3[:, :, None, :] + v3[:, None, :, :] + b1, 0.0)        # (B,S,S,H)
    wd = vslab_ref[ROW_WD:ROW_WD + 1, :]                        # fc2 logit-difference column
    score = jnp.sum(hid * wd, axis=-1) + gplus_ref[0]           # (B,S,S), target-major (adj^T)
    ind = (score >= 0.0).astype(f32)                            # hard Gumbel argmax == sign test
    adjt = ind * kf_ref[0][None] + kf_ref[1][None]              # tri/diag keep + consecutive force
    deg = jnp.sum(adjt, axis=-1, keepdims=True)                 # in-degree per target node
    adjn = adjt / jnp.maximum(deg, 1.0)                         # exact mean-aggregation operator

    # ---- stage 3: SAGE blocks (lin_l|lin_r fused) + train-mode BatchNorm + combine ----
    cur = x
    comb = None
    for i in range(BLOCK_SIZE):
        agg = jnp.einsum('bts,bsh->bth', adjn, cur.reshape(B, S, H),
                         preferred_element_type=f32).reshape(N, H)
        cat = jnp.concatenate([agg, cur], axis=1)               # (N, 2H)
        h = jnp.dot(cat, wcat_ref[:, i * H:(i + 1) * H], preferred_element_type=f32)
        # SAGE lin_l bias dropped: train-mode BatchNorm removes any constant shift exactly.
        s1 = jnp.sum(h, axis=0, keepdims=True)                  # two independent reductions
        s2 = jnp.sum(h * h, axis=0, keepdims=True)
        mean = s1 * (1.0 / N)
        var = s2 * (1.0 / N) - mean * mean                      # biased (training-mode) variance
        scale = vslab_ref[ROW_GAMMA + i:ROW_GAMMA + i + 1, :] * lax.rsqrt(var + BN_EPS)
        h = h * scale + (vslab_ref[ROW_BETA + i:ROW_BETA + i + 1, :] - mean * scale)
        term = h * vslab_ref[ROW_GW + i:ROW_GW + i + 1, :]      # gnn_weights[i], pre-broadcast row
        comb = term if comb is None else comb + term
        cur = h

    xr = jnp.maximum(comb + vslab_ref[ROW_GWB:ROW_GWB + 1, :], 0.0)           # (N, H)

    # ---- head: aggregate -> fc_extra -> output, via VPU broadcast + lane reduce ----
    if AGGREGATE == "mean":
        pooled = jnp.mean(xr.reshape(B, S, H), axis=1)          # (B, H)
    else:                                                       # 'last': static row gather
        pooled = jnp.concatenate(
            [xr[b * S + S - 1:b * S + S, :] for b in range(B)], axis=0)       # (B, H)
    wfe = vslab_ref[ROW_WFE:ROW_WFE + H2, :]                    # (H2, H) = fc_extra weight^T
    fe = jnp.maximum(jnp.sum(pooled[:, None, :] * wfe[None, :, :], axis=-1)
                     + vslab_ref[ROW_BFE:ROW_BFE + 1, :H2], 0.0)              # (B, H2)
    out = (jnp.sum(fe * vslab_ref[ROW_WOUT:ROW_WOUT + 1, :H2], axis=-1, keepdims=True)
           + vslab_ref[ROW_BOUT:ROW_BOUT + 1, 0:1])                            # (B, 1)
    out_ref[...] = out[None]


# ---------------- parameter init (same structure as the module, random weights) ----------------
def _init_params(key):
    def nrm(k, shape, scale=0.2):
        return scale * jax.random.normal(k, shape, dtype=jnp.float32)

    ks = jax.random.split(key, 28)
    p = {}
    p["w11t"] = nrm(ks[0], (INPUT_DIM, HIDDEN));  p["b11"] = nrm(ks[1], (1, HIDDEN), 0.05)
    p["w12t"] = nrm(ks[2], (3, HIDDEN, HIDDEN));  p["b12"] = nrm(ks[3], (1, HIDDEN), 0.05)
    p["w21t"] = nrm(ks[4], (INPUT_DIM, HIDDEN));  p["b21"] = nrm(ks[5], (1, HIDDEN), 0.05)
    p["w22t"] = nrm(ks[6], (5, HIDDEN, HIDDEN));  p["b22"] = nrm(ks[7], (1, HIDDEN), 0.05)
    p["w31t"] = nrm(ks[8], (INPUT_DIM, HIDDEN));  p["b31"] = nrm(ks[9], (1, HIDDEN), 0.05)
    p["wf1t"] = nrm(ks[10], (HIDDEN, HIDDEN))
    p["wf2t"] = nrm(ks[11], (HIDDEN, HIDDEN))
    p["wf3t"] = nrm(ks[12], (HIDDEN, HIDDEN));    p["bf"] = nrm(ks[13], (1, HIDDEN), 0.05)
    p["w1st"] = nrm(ks[14], (HIDDEN, HIDDEN))     # fc1 weight, sender half (transposed)
    p["w1rt"] = nrm(ks[15], (HIDDEN, HIDDEN))     # fc1 weight, receiver half (transposed)
    p["b1"] = nrm(ks[16], (1, HIDDEN), 0.05)
    # fc2 (H -> 2) folded into a single logit-difference projection (row0 - row1)
    p["wdt"] = nrm(ks[17], (HIDDEN, 1));          p["bd"] = nrm(ks[18], (1, 1), 0.05)
    p["wlt"] = nrm(ks[19], (BLOCK_SIZE, HIDDEN, HIDDEN))   # SAGE lin_l (transposed)
    p["bl"] = nrm(ks[20], (BLOCK_SIZE, 1, HIDDEN), 0.05)   # cancels exactly under train-mode BN
    p["wrt"] = nrm(ks[21], (BLOCK_SIZE, HIDDEN, HIDDEN))   # SAGE lin_r (transposed, no bias)
    p["gamma"] = jnp.ones((BLOCK_SIZE, HIDDEN), jnp.float32)
    p["beta"] = jnp.zeros((BLOCK_SIZE, HIDDEN), jnp.float32)
    p["gw"] = nrm(ks[22], (1, BLOCK_SIZE));       p["gwb"] = nrm(ks[23], (1, 1), 0.05)
    p["wfet"] = nrm(ks[24], (HIDDEN, H2));        p["bfe"] = nrm(ks[25], (1, H2), 0.05)
    p["woutt"] = nrm(ks[26], (H2, OUTPUT_DIM));   p["bout"] = nrm(ks[27], (1, OUTPUT_DIM), 0.05)
    return p


# ---------------- one-time algebraic pre-folding & lane-dense packing ----------------
def _fold_params(p):
    S, Din, H = SEQ_LEN, INPUT_DIM, HIDDEN
    wf = (p["wf1t"], p["wf2t"], p["wf3t"])

    # temporal branches: x_pre = (shifted-data concat * mask) @ gstack + posb, then ReLU
    g_off = {off: jnp.zeros((Din, H), jnp.float32) for off in TAP_OFFSETS}
    posb_s = jnp.tile(p["b12"] @ wf[0] + p["b22"] @ wf[1] + p["b31"] @ wf[2] + p["bf"], (S, 1))
    branches = (
        (p["w11t"], p["b11"], p["w12t"], wf[0], 3, 3),   # conv11 -> conv12 (k=3, dil=3) -> fc slice 1
        (p["w21t"], p["b21"], p["w22t"], wf[1], 5, 5),   # conv21 -> conv22 (k=5, dil=5) -> fc slice 2
    )
    for w_in, b_in, w_tap, w_fc, ksize, dil in branches:
        for k in range(ksize):
            off = (k - ksize // 2) * dil
            proj = w_tap[k] @ w_fc                                       # (H, H)
            if off in g_off:
                g_off[off] = g_off[off] + w_in @ proj                    # data path
            valid = np.array([1.0 if 0 <= i + off < S else 0.0 for i in range(S)],
                             np.float32)[:, None]
            posb_s = posb_s + jnp.asarray(valid) * (b_in @ proj)         # zero-padded bias path
    g_off[0] = g_off[0] + p["w31t"] @ wf[2]                              # conv31 (1x1) -> fc slice 3
    gstack = jnp.concatenate([g_off[o] for o in TAP_OFFSETS], axis=0)    # (N_TAPS*Din, H)
    posb = jnp.tile(posb_s, (BATCH, 1))                                  # (B*S, H)

    # per-tap validity mask for the shifted-data concatenation (zero 'same' padding)
    tmask = np.zeros((N_NODES, N_TAPS * Din), np.float32)
    for t, off in enumerate(TAP_OFFSETS):
        for b in range(BATCH):
            for i in range(S):
                if 0 <= i + off < S:
                    tmask[b * S + i, t * Din:(t + 1) * Din] = 1.0

    # graph masks (module order: tri_mask->0, consecutive->1, diagonal->0), stored TRANSPOSED
    # (target, source) so the kernel builds adj^T directly without an in-kernel transpose
    keep = np.zeros((S, S), np.float32)
    force = np.zeros((S, S), np.float32)
    for r in range(S):
        for c in range(S):
            if ENFORCE_CONSECUTIVE and c == r + 1:
                force[r, c] = 1.0
                continue
            if r > c:                                   # strictly-lower tri mask
                continue
            if (not KEEP_SELF_LOOPS) and r == c:        # drop self loops
                continue
            keep[r, c] = 1.0
    kf = jnp.asarray(np.stack([keep.T, force.T], axis=0))               # (2, S, S)

    # fused fc1 (sender | receiver halves side by side)
    wuv = jnp.concatenate([p["w1st"], p["w1rt"]], axis=1)               # (H, 2H)

    # fused SAGE lin_l|lin_r weights, 3 blocks packed along lanes -> (2H, 3H) slab
    wcat = jnp.concatenate(
        [jnp.concatenate([p["wlt"][i], p["wrt"][i]], axis=0) for i in range(BLOCK_SIZE)],
        axis=1)                                                          # (64, 96)

    # lane-dense (32, 32) vector slab holding all small row constants + head weights
    vs = jnp.zeros((VSLAB_ROWS, HIDDEN), jnp.float32)
    vs = vs.at[ROW_B1, :].set(p["b1"][0])
    vs = vs.at[ROW_WD, :].set(p["wdt"][:, 0])
    vs = vs.at[ROW_GAMMA:ROW_GAMMA + BLOCK_SIZE, :].set(p["gamma"])
    vs = vs.at[ROW_BETA:ROW_BETA + BLOCK_SIZE, :].set(p["beta"])
    vs = vs.at[ROW_BFE, :H2].set(p["bfe"][0])
    vs = vs.at[ROW_WOUT, :H2].set(p["woutt"][:, 0])
    vs = vs.at[ROW_GW:ROW_GW + BLOCK_SIZE, :].set(
        jnp.broadcast_to(p["gw"][0][:, None], (BLOCK_SIZE, HIDDEN)))
    vs = vs.at[ROW_GWB, :].set(p["gwb"][0, 0])
    vs = vs.at[ROW_BOUT, :].set(p["bout"][0, 0])
    vs = vs.at[ROW_WFE:ROW_WFE + H2, :].set(p["wfet"].T)

    return dict(tapmask=jnp.asarray(tmask), gstack=gstack, posb=posb,
                wuv=wuv, kf=kf, wcat=wcat, vslab=vs)


def _sample_gumbel_inputs(key, bd, n_windows):
    # F.gumbel_softmax(tau=0.5, hard=True) over 2 classes: the hard argmax depends only on
    # (logit0 - logit1) + (g0 - g1); tau > 0 never changes it.  Sample the Gumbel-noise
    # difference per candidate edge, fold in the fc2 bias difference, and transpose the last
    # two dims so the kernel consumes it in the target-major (adj^T) layout.
    g = jax.random.gumbel(key, (n_windows, BATCH, SEQ_LEN, SEQ_LEN, 2), dtype=jnp.float32)
    gdiff = g[..., 0] - g[..., 1] + bd[0, 0]                  # [w, b, row r, col c]
    return jnp.swapaxes(gdiff, -1, -2)                        # [w, b, c, r]


@jax.jit
def timegnn_forward(data, gplus_t, kin):
    """data: (W, B, S, INPUT_DIM) channels-last; gplus_t: (W, B, S, S) gumbel diff (transposed)."""
    nw = data.shape[0]
    data_flat = data.reshape(nw, N_NODES, INPUT_DIM)

    in_specs = [
        pl.BlockSpec((1, N_NODES, INPUT_DIM), lambda w: (w, 0, 0)),            # data (per window)
        pl.BlockSpec((1, BATCH, SEQ_LEN, SEQ_LEN), lambda w: (w, 0, 0, 0)),    # gumbel (per window)
        pl.BlockSpec((N_NODES, N_TAPS * INPUT_DIM), lambda w: (0, 0)),         # tap validity mask
        pl.BlockSpec((N_TAPS * INPUT_DIM, HIDDEN), lambda w: (0, 0)),          # folded conv weights
        pl.BlockSpec((N_NODES, HIDDEN), lambda w: (0, 0)),                     # position bias
        pl.BlockSpec((HIDDEN, 2 * HIDDEN), lambda w: (0, 0)),                  # fused fc1
        pl.BlockSpec((2, SEQ_LEN, SEQ_LEN), lambda w: (0, 0, 0)),              # keep^T / force^T
        pl.BlockSpec((2 * HIDDEN, BLOCK_SIZE * HIDDEN), lambda w: (0, 0)),     # fused SAGE weights
        pl.BlockSpec((VSLAB_ROWS, HIDDEN), lambda w: (0, 0)),                  # vector slab
    ]
    out = pl.pallas_call(
        _timegnn_kernel,
        out_shape=jax.ShapeDtypeStruct((nw, BATCH, OUTPUT_DIM), jnp.float32),
        grid=(nw,),
        in_specs=in_specs,
        out_specs=pl.BlockSpec((1, BATCH, OUTPUT_DIM), lambda w: (w, 0, 0)),
        compiler_params=_CompilerParams(dimension_semantics=("parallel",)),
    )(data_flat, gplus_t,
      kin["tapmask"], kin["gstack"], kin["posb"],
      kin["wuv"], kin["kf"], kin["wcat"], kin["vslab"])
    if OUTPUT_DIM > 1:
        out = out[:, :, None, :]                               # matches torch .unsqueeze(1)
    return out


if __name__ == "__main__":
    key = jax.random.PRNGKey(0)
    k_data, k_param, k_gumbel = jax.random.split(key, 3)

    N_WINDOWS = 4                                              # independent forward passes, one call
    data = jax.random.normal(k_data, (N_WINDOWS, BATCH, SEQ_LEN, INPUT_DIM), dtype=jnp.float32)
    params = _init_params(k_param)
    kin = _fold_params(params)                                 # one-time setup, off the hot path
    gplus_t = _sample_gumbel_inputs(k_gumbel, params["bd"], N_WINDOWS)

    # TODO(synk): BatchNorm running-stat updates (eval-mode BN) and return_graphs=True path
    # are not modeled; train-mode batch statistics are assumed as in a freshly built module.
    out = timegnn_forward(data, gplus_t, kin)
    out = jax.block_until_ready(out)
    assert out.shape == (N_WINDOWS, BATCH, OUTPUT_DIM)
    assert bool(jnp.all(jnp.isfinite(out)))
    print("KERNEL_OK")
</pallas_src>

<mosaic_0001>
module attributes {stable_mosaic.version = 11 : i64} {
  func.func @_timegnn_kernel(%arg0: i32, %arg1: memref<1x16x4xf32, #tpu.memory_space<vmem>>, %arg2: memref<1x2x8x8xf32, #tpu.memory_space<vmem>>, %arg3: memref<16x20xf32, #tpu.memory_space<vmem>>, %arg4: memref<20x32xf32, #tpu.memory_space<vmem>>, %arg5: memref<16x32xf32, #tpu.memory_space<vmem>>, %arg6: memref<32x64xf32, #tpu.memory_space<vmem>>, %arg7: memref<2x8x8xf32, #tpu.memory_space<vmem>>, %arg8: memref<64x96xf32, #tpu.memory_space<vmem>>, %arg9: memref<32x32xf32, #tpu.memory_space<vmem>>, %arg10: memref<1x2x1xf32, #tpu.memory_space<vmem>>) attributes {dimension_semantics = [#tpu.dimension_semantics<parallel>], iteration_bounds = array<i64: 4>, scalar_prefetch = 0 : i64, scratch_operands = 0 : i64, tpu.core_type = #tpu.core_type<tc>, window_params = [{transform_indices = @transform_0, window_bounds = array<i64: 1, 16, 4>}, {transform_indices = @transform_1, window_bounds = array<i64: 1, 2, 8, 8>}, {pipeline_mode = #tpu.pipeline_mode<synchronous>, transform_indices = @transform_2, window_bounds = array<i64: 16, 20>}, {pipeline_mode = #tpu.pipeline_mode<synchronous>, transform_indices = @transform_3, window_bounds = array<i64: 20, 32>}, {pipeline_mode = #tpu.pipeline_mode<synchronous>, transform_indices = @transform_4, window_bounds = array<i64: 16, 32>}, {pipeline_mode = #tpu.pipeline_mode<synchronous>, transform_indices = @transform_5, window_bounds = array<i64: 32, 64>}, {pipeline_mode = #tpu.pipeline_mode<synchronous>, transform_indices = @transform_6, window_bounds = array<i64: 2, 8, 8>}, {pipeline_mode = #tpu.pipeline_mode<synchronous>, transform_indices = @transform_7, window_bounds = array<i64: 64, 96>}, {pipeline_mode = #tpu.pipeline_mode<synchronous>, transform_indices = @transform_8, window_bounds = array<i64: 32, 32>}, {transform_indices = @transform_9, window_bounds = array<i64: 1, 2, 1>}]} {
    %c0 = arith.constant 0 : index
    %c0_0 = arith.constant 0 : index
    %c0_1 = arith.constant 0 : index
    %0 = vector.load %arg1[%c0, %c0_0, %c0_1] : memref<1x16x4xf32, #tpu.memory_space<vmem>>, vector<1x16x4xf32>
    %1 = vector.shape_cast %0 : vector<1x16x4xf32> to vector<16x4xf32>
    %2 = tpu.concatenate %1, %1 in 0 : vector<16x4xf32>, vector<16x4xf32> -> vector<32x4xf32>
    %3 = vector.extract_strided_slice %2 {offsets = [11, 0], sizes = [16, 4], strides = [1, 1]} : vector<32x4xf32> to vector<16x4xf32>
    %4 = vector.extract_strided_slice %2 {offsets = [13, 0], sizes = [16, 4], strides = [1, 1]} : vector<32x4xf32> to vector<16x4xf32>
    %5 = vector.extract_strided_slice %2 {offsets = [3, 0], sizes = [16, 4], strides = [1, 1]} : vector<32x4xf32> to vector<16x4xf32>
    %6 = vector.extract_strided_slice %2 {offsets = [5, 0], sizes = [16, 4], strides = [1, 1]} : vector<32x4xf32> to vector<16x4xf32>
    %7 = tpu.concatenate %3, %4, %1, %5, %6 in 1 : vector<16x4xf32>, vector<16x4xf32>, vector<16x4xf32>, vector<16x4xf32>, vector<16x4xf32> -> vector<16x20xf32>
    %c0_2 = arith.constant 0 : index
    %c0_3 = arith.constant 0 : index
    %8 = vector.load %arg3[%c0_2, %c0_3] : memref<16x20xf32, #tpu.memory_space<vmem>>, vector<16x20xf32>
    %9 = arith.mulf %7, %8 : vector<16x20xf32>
    %c0_4 = arith.constant 0 : index
    %c0_5 = arith.constant 0 : index
    %10 = vector.load %arg4[%c0_4, %c0_5] : memref<20x32xf32, #tpu.memory_space<vmem>>, vector<20x32xf32>
    %cst = arith.constant dense<0.000000e+00> : vector<16x32xf32>
    %11 = tpu.matmul %9, %10, %cst {dimension_numbers = #tpu.dot_dimension_numbers<[1], [0], [0], [1], [0, 0, 1, 1], [], []>} : vector<16x20xf32>, vector<20x32xf32>, vector<16x32xf32> -> vector<16x32xf32>
    %c0_6 = arith.constant 0 : index
    %c0_7 = arith.constant 0 : index
    %12 = vector.load %arg5[%c0_6, %c0_7] : memref<16x32xf32, #tpu.memory_space<vmem>>, vector<16x32xf32>
    %13 = arith.addf %11, %12 : vector<16x32xf32>
    %cst_8 = arith.constant 0.000000e+00 : f32
    %14 = vector.broadcast %cst_8 : f32 to vector<16x32xf32>
    %15 = arith.maximumf %13, %14 : vector<16x32xf32>
    %c0_9 = arith.constant 0 : index
    %c0_10 = arith.constant 0 : index
    %16 = vector.load %arg6[%c0_9, %c0_10] : memref<32x64xf32, #tpu.memory_space<vmem>>, vector<32x64xf32>
    %cst_11 = arith.constant dense<0.000000e+00> : vector<16x64xf32>
    %17 = tpu.matmul %15, %16, %cst_11 {dimension_numbers = #tpu.dot_dimension_numbers<[1], [0], [0], [1], [0, 0, 1, 1], [], []>} : vector<16x32xf32>, vector<32x64xf32>, vector<16x64xf32> -> vector<16x64xf32>
    %18 = vector.extract_strided_slice %17 {offsets = [0, 0], sizes = [16, 32], strides = [1, 1]} : vector<16x64xf32> to vector<16x32xf32>
    %19 = vector.shape_cast %18 : vector<16x32xf32> to vector<2x8x32xf32>
    %20 = vector.extract_strided_slice %17 {offsets = [0, 32], sizes = [16, 32], strides = [1, 1]} : vector<16x64xf32> to vector<16x32xf32>
    %21 = vector.shape_cast %20 : vector<16x32xf32> to vector<2x8x32xf32>
    %c0_12 = arith.constant 0 : index
    %c0_13 = arith.constant 0 : index
    %22 = vector.load %arg9[%c0_12, %c0_13] : memref<32x32xf32, #tpu.memory_space<vmem>>, vector<1x32xf32>
    %23 = vector.shape_cast %19 : vector<2x8x32xf32> to vector<2x8x1x32xf32>
    %24 = vector.shape_cast %21 : vector<2x8x32xf32> to vector<2x1x8x32xf32>
    %25 = vector.broadcast %23 : vector<2x8x1x32xf32> to vector<2x8x8x32xf32>
    %26 = vector.broadcast %24 : vector<2x1x8x32xf32> to vector<2x8x8x32xf32>
    %27 = arith.addf %25, %26 : vector<2x8x8x32xf32>
    %28 = vector.shape_cast %22 : vector<1x32xf32> to vector<1x1x1x32xf32>
    %29 = vector.broadcast %28 : vector<1x1x1x32xf32> to vector<2x8x8x32xf32>
    %30 = arith.addf %27, %29 : vector<2x8x8x32xf32>
    %cst_14 = arith.constant 0.000000e+00 : f32
    %31 = vector.broadcast %cst_14 : f32 to vector<2x8x8x32xf32>
    %32 = arith.maximumf %30, %31 : vector<2x8x8x32xf32>
    %c1 = arith.constant 1 : index
    %c0_15 = arith.constant 0 : index
    %33 = vector.load %arg9[%c1, %c0_15] : memref<32x32xf32, #tpu.memory_space<vmem>>, vector<1x32xf32>
    %34 = vector.shape_cast %33 : vector<1x32xf32> to vector<1x1x1x32xf32>
    %35 = vector.broadcast %34 : vector<1x1x1x32xf32> to vector<2x8x8x32xf32>
    %36 = arith.mulf %32, %35 : vector<2x8x8x32xf32>
    %cst_16 = arith.constant dense<0.000000e+00> : vector<2x8x8xf32>
    %37 = vector.multi_reduction <add>, %36, %cst_16 [3] : vector<2x8x8x32xf32> to vector<2x8x8xf32>
    %c0_17 = arith.constant 0 : index
    %c0_18 = arith.constant 0 : index
    %c0_19 = arith.constant 0 : index
    %c0_20 = arith.constant 0 : index
    %38 = vector.load %arg2[%c0_17, %c0_18, %c0_19, %c0_20] : memref<1x2x8x8xf32, #tpu.memory_space<vmem>>, vector<1x2x8x8xf32>
    %39 = vector.shape_cast %38 : vector<1x2x8x8xf32> to vector<2x8x8xf32>
    %40 = arith.addf %37, %39 : vector<2x8x8xf32>
    %cst_21 = arith.constant 0.000000e+00 : f32
    %41 = vector.broadcast %cst_21 : f32 to vector<2x8x8xf32>
    %42 = arith.cmpf oge, %40, %41 : vector<2x8x8xf32>
    %43 = arith.extui %42 : vector<2x8x8xi1> to vector<2x8x8xi32>
    %44 = arith.sitofp %43 : vector<2x8x8xi32> to vector<2x8x8xf32>
    %c0_22 = arith.constant 0 : index
    %c0_23 = arith.constant 0 : index
    %c0_24 = arith.constant 0 : index
    %45 = vector.load %arg7[%c0_22, %c0_23, %c0_24] : memref<2x8x8xf32, #tpu.memory_space<vmem>>, vector<1x8x8xf32>
    %46 = vector.shape_cast %45 : vector<1x8x8xf32> to vector<8x8xf32>
    %47 = vector.shape_cast %46 : vector<8x8xf32> to vector<1x8x8xf32>
    %48 = vector.broadcast %47 : vector<1x8x8xf32> to vector<2x8x8xf32>
    %49 = arith.mulf %44, %48 : vector<2x8x8xf32>
    %c1_25 = arith.constant 1 : index
    %c0_26 = arith.constant 0 : index
    %c0_27 = arith.constant 0 : index
    %50 = vector.load %arg7[%c1_25, %c0_26, %c0_27] : memref<2x8x8xf32, #tpu.memory_space<vmem>>, vector<1x8x8xf32>
    %51 = vector.shape_cast %50 : vector<1x8x8xf32> to vector<8x8xf32>
    %52 = vector.shape_cast %51 : vector<8x8xf32> to vector<1x8x8xf32>
    %53 = vector.broadcast %52 : vector<1x8x8xf32> to vector<2x8x8xf32>
    %54 = arith.addf %49, %53 : vector<2x8x8xf32>
    %cst_28 = arith.constant dense<0.000000e+00> : vector<2x8xf32>
    %55 = vector.multi_reduction <add>, %54, %cst_28 [2] : vector<2x8x8xf32> to vector<2x8xf32>
    %56 = vector.shape_cast %55 : vector<2x8xf32> to vector<2x8x1xf32>
    %cst_29 = arith.constant 1.000000e+00 : f32
    %57 = vector.broadcast %cst_29 : f32 to vector<2x8x1xf32>
    %58 = arith.maximumf %56, %57 : vector<2x8x1xf32>
    %59 = vector.broadcast %58 : vector<2x8x1xf32> to vector<2x8x8xf32>
    %60 = arith.divf %54, %59 : vector<2x8x8xf32>
    %61 = vector.shape_cast %15 : vector<16x32xf32> to vector<2x8x32xf32>
    "tpu.trace_start"() <{level = 10 : i32, message = "bts,bsh->bth"}> : () -> ()
    %cst_30 = arith.constant dense<0.000000e+00> : vector<2x8x32xf32>
    %62 = tpu.matmul %60, %61, %cst_30 {dimension_numbers = #tpu.dot_dimension_numbers<[2], [1], [1], [2], [0, 0, 0, 1, 1, 2], [0], [0]>} : vector<2x8x8xf32>, vector<2x8x32xf32>, vector<2x8x32xf32> -> vector<2x8x32xf32>
    "tpu.trace_stop"() : () -> ()
    %63 = vector.shape_cast %62 : vector<2x8x32xf32> to vector<16x32xf32>
    %64 = tpu.concatenate %63, %15 in 1 : vector<16x32xf32>, vector<16x32xf32> -> vector<16x64xf32>
    %c0_31 = arith.constant 0 : index
    %c0_32 = arith.constant 0 : index
    %65 = vector.load %arg8[%c0_31, %c0_32] : memref<64x96xf32, #tpu.memory_space<vmem>>, vector<64x32xf32>
    %cst_33 = arith.constant dense<0.000000e+00> : vector<16x32xf32>
    %66 = tpu.matmul %64, %65, %cst_33 {dimension_numbers = #tpu.dot_dimension_numbers<[1], [0], [0], [1], [0, 0, 1, 1], [], []>} : vector<16x64xf32>, vector<64x32xf32>, vector<16x32xf32> -> vector<16x32xf32>
    %cst_34 = arith.constant dense<0.000000e+00> : vector<32xf32>
    %67 = vector.multi_reduction <add>, %66, %cst_34 [0] : vector<16x32xf32> to vector<32xf32>
    %68 = vector.shape_cast %67 : vector<32xf32> to vector<1x32xf32>
    %69 = arith.mulf %66, %66 : vector<16x32xf32>
    %cst_35 = arith.constant dense<0.000000e+00> : vector<32xf32>
    %70 = vector.multi_reduction <add>, %69, %cst_35 [0] : vector<16x32xf32> to vector<32xf32>
    %71 = vector.shape_cast %70 : vector<32xf32> to vector<1x32xf32>
    %cst_36 = arith.constant 6.250000e-02 : f32
    %72 = vector.broadcast %cst_36 : f32 to vector<1x32xf32>
    %73 = arith.mulf %68, %72 : vector<1x32xf32>
    %cst_37 = arith.constant 6.250000e-02 : f32
    %74 = vector.broadcast %cst_37 : f32 to vector<1x32xf32>
    %75 = arith.mulf %71, %74 : vector<1x32xf32>
    %76 = arith.mulf %73, %73 : vector<1x32xf32>
    %77 = arith.subf %75, %76 : vector<1x32xf32>
    %c2 = arith.constant 2 : index
    %c0_38 = arith.constant 0 : index
    %78 = vector.load %arg9[%c2, %c0_38] : memref<32x32xf32, #tpu.memory_space<vmem>>, vector<1x32xf32>
    %cst_39 = arith.constant 9.99999974E-6 : f32
    %79 = vector.broadcast %cst_39 : f32 to vector<1x32xf32>
    %80 = arith.addf %77, %79 : vector<1x32xf32>
    %81 = math.rsqrt %80 : vector<1x32xf32>
    %82 = arith.mulf %78, %81 : vector<1x32xf32>
    %83 = vector.broadcast %82 : vector<1x32xf32> to vector<16x32xf32>
    %84 = arith.mulf %66, %83 : vector<16x32xf32>
    %c5 = arith.constant 5 : index
    %c0_40 = arith.constant 0 : index
    %85 = vector.load %arg9[%c5, %c0_40] : memref<32x32xf32, #tpu.memory_space<vmem>>, vector<1x32xf32>
    %86 = arith.mulf %73, %82 : vector<1x32xf32>
    %87 = arith.subf %85, %86 : vector<1x32xf32>
    %88 = vector.broadcast %87 : vector<1x32xf32> to vector<16x32xf32>
    %89 = arith.addf %84, %88 : vector<16x32xf32>
    %c10 = arith.constant 10 : index
    %c0_41 = arith.constant 0 : index
    %90 = vector.load %arg9[%c10, %c0_41] : memref<32x32xf32, #tpu.memory_space<vmem>>, vector<1x32xf32>
    %91 = vector.broadcast %90 : vector<1x32xf32> to vector<16x32xf32>
    %92 = arith.mulf %89, %91 : vector<16x32xf32>
    %93 = vector.shape_cast %89 : vector<16x32xf32> to vector<2x8x32xf32>
    "tpu.trace_start"() <{level = 10 : i32, message = "bts,bsh->bth"}> : () -> ()
    %cst_42 = arith.constant dense<0.000000e+00> : vector<2x8x32xf32>
    %94 = tpu.matmul %60, %93, %cst_42 {dimension_numbers = #tpu.dot_dimension_numbers<[2], [1], [1], [2], [0, 0, 0, 1, 1, 2], [0], [0]>} : vector<2x8x8xf32>, vector<2x8x32xf32>, vector<2x8x32xf32> -> vector<2x8x32xf32>
    "tpu.trace_stop"() : () -> ()
    %95 = vector.shape_cast %94 : vector<2x8x32xf32> to vector<16x32xf32>
    %96 = tpu.concatenate %95, %89 in 1 : vector<16x32xf32>, vector<16x32xf32> -> vector<16x64xf32>
    %c0_43 = arith.constant 0 : index
    %c32 = arith.constant 32 : index
    %97 = vector.load %arg8[%c0_43, %c32] : memref<64x96xf32, #tpu.memory_space<vmem>>, vector<64x32xf32>
    %cst_44 = arith.constant dense<0.000000e+00> : vector<16x32xf32>
    %98 = tpu.matmul %96, %97, %cst_44 {dimension_numbers = #tpu.dot_dimension_numbers<[1], [0], [0], [1], [0, 0, 1, 1], [], []>} : vector<16x64xf32>, vector<64x32xf32>, vector<16x32xf32> -> vector<16x32xf32>
    %cst_45 = arith.constant dense<0.000000e+00> : vector<32xf32>
    %99 = vector.multi_reduction <add>, %98, %cst_45 [0] : vector<16x32xf32> to vector<32xf32>
    %100 = vector.shape_cast %99 : vector<32xf32> to vector<1x32xf32>
    %101 = arith.mulf %98, %98 : vector<16x32xf32>
    %cst_46 = arith.constant dense<0.000000e+00> : vector<32xf32>
    %102 = vector.multi_reduction <add>, %101, %cst_46 [0] : vector<16x32xf32> to vector<32xf32>
    %103 = vector.shape_cast %102 : vector<32xf32> to vector<1x32xf32>
    %cst_47 = arith.constant 6.250000e-02 : f32
    %104 = vector.broadcast %cst_47 : f32 to vector<1x32xf32>
    %105 = arith.mulf %100, %104 : vector<1x32xf32>
    %cst_48 = arith.constant 6.250000e-02 : f32
    %106 = vector.broadcast %cst_48 : f32 to vector<1x32xf32>
    %107 = arith.mulf %103, %106 : vector<1x32xf32>
    %108 = arith.mulf %105, %105 : vector<1x32xf32>
    %109 = arith.subf %107, %108 : vector<1x32xf32>
    %c3 = arith.constant 3 : index
    %c0_49 = arith.constant 0 : index
    %110 = vector.load %arg9[%c3, %c0_49] : memref<32x32xf32, #tpu.memory_space<vmem>>, vector<1x32xf32>
    %cst_50 = arith.constant 9.99999974E-6 : f32
    %111 = vector.broadcast %cst_50 : f32 to vector<1x32xf32>
    %112 = arith.addf %109, %111 : vector<1x32xf32>
    %113 = math.rsqrt %112 : vector<1x32xf32>
    %114 = arith.mulf %110, %113 : vector<1x32xf32>
    %115 = vector.broadcast %114 : vector<1x32xf32> to vector<16x32xf32>
    %116 = arith.mulf %98, %115 : vector<16x32xf32>
    %c6 = arith.constant 6 : index
    %c0_51 = arith.constant 0 : index
    %117 = vector.load %arg9[%c6, %c0_51] : memref<32x32xf32, #tpu.memory_space<vmem>>, vector<1x32xf32>
    %118 = arith.mulf %105, %114 : vector<1x32xf32>
    %119 = arith.subf %117, %118 : vector<1x32xf32>
    %120 = vector.broadcast %119 : vector<1x32xf32> to vector<16x32xf32>
    %121 = arith.addf %116, %120 : vector<16x32xf32>
    %c11 = arith.constant 11 : index
    %c0_52 = arith.constant 0 : index
    %122 = vector.load %arg9[%c11, %c0_52] : memref<32x32xf32, #tpu.memory_space<vmem>>, vector<1x32xf32>
    %123 = vector.broadcast %122 : vector<1x32xf32> to vector<16x32xf32>
    %124 = arith.mulf %121, %123 : vector<16x32xf32>
    %125 = arith.addf %92, %124 : vector<16x32xf32>
    %126 = vector.shape_cast %121 : vector<16x32xf32> to vector<2x8x32xf32>
    "tpu.trace_start"() <{level = 10 : i32, message = "bts,bsh->bth"}> : () -> ()
    %cst_53 = arith.constant dense<0.000000e+00> : vector<2x8x32xf32>
    %127 = tpu.matmul %60, %126, %cst_53 {dimension_numbers = #tpu.dot_dimension_numbers<[2], [1], [1], [2], [0, 0, 0, 1, 1, 2], [0], [0]>} : vector<2x8x8xf32>, vector<2x8x32xf32>, vector<2x8x32xf32> -> vector<2x8x32xf32>
    "tpu.trace_stop"() : () -> ()
    %128 = vector.shape_cast %127 : vector<2x8x32xf32> to vector<16x32xf32>
    %129 = tpu.concatenate %128, %121 in 1 : vector<16x32xf32>, vector<16x32xf32> -> vector<16x64xf32>
    %c0_54 = arith.constant 0 : index
    %c64 = arith.constant 64 : index
    %130 = vector.load %arg8[%c0_54, %c64] : memref<64x96xf32, #tpu.memory_space<vmem>>, vector<64x32xf32>
    %cst_55 = arith.constant dense<0.000000e+00> : vector<16x32xf32>
    %131 = tpu.matmul %129, %130, %cst_55 {dimension_numbers = #tpu.dot_dimension_numbers<[1], [0], [0], [1], [0, 0, 1, 1], [], []>} : vector<16x64xf32>, vector<64x32xf32>, vector<16x32xf32> -> vector<16x32xf32>
    %cst_56 = arith.constant dense<0.000000e+00> : vector<32xf32>
    %132 = vector.multi_reduction <add>, %131, %cst_56 [0] : vector<16x32xf32> to vector<32xf32>
    %133 = vector.shape_cast %132 : vector<32xf32> to vector<1x32xf32>
    %134 = arith.mulf %131, %131 : vector<16x32xf32>
    %cst_57 = arith.constant dense<0.000000e+00> : vector<32xf32>
    %135 = vector.multi_reduction <add>, %134, %cst_57 [0] : vector<16x32xf32> to vector<32xf32>
    %136 = vector.shape_cast %135 : vector<32xf32> to vector<1x32xf32>
    %cst_58 = arith.constant 6.250000e-02 : f32
    %137 = vector.broadcast %cst_58 : f32 to vector<1x32xf32>
    %138 = arith.mulf %133, %137 : vector<1x32xf32>
    %cst_59 = arith.constant 6.250000e-02 : f32
    %139 = vector.broadcast %cst_59 : f32 to vector<1x32xf32>
    %140 = arith.mulf %136, %139 : vector<1x32xf32>
    %141 = arith.mulf %138, %138 : vector<1x32xf32>
    %142 = arith.subf %140, %141 : vector<1x32xf32>
    %c4 = arith.constant 4 : index
    %c0_60 = arith.constant 0 : index
    %143 = vector.load %arg9[%c4, %c0_60] : memref<32x32xf32, #tpu.memory_space<vmem>>, vector<1x32xf32>
    %cst_61 = arith.constant 9.99999974E-6 : f32
    %144 = vector.broadcast %cst_61 : f32 to vector<1x32xf32>
    %145 = arith.addf %142, %144 : vector<1x32xf32>
    %146 = math.rsqrt %145 : vector<1x32xf32>
    %147 = arith.mulf %143, %146 : vector<1x32xf32>
    %148 = vector.broadcast %147 : vector<1x32xf32> to vector<16x32xf32>
    %149 = arith.mulf %131, %148 : vector<16x32xf32>
    %c7 = arith.constant 7 : index
    %c0_62 = arith.constant 0 : index
    %150 = vector.load %arg9[%c7, %c0_62] : memref<32x32xf32, #tpu.memory_space<vmem>>, vector<1x32xf32>
    %151 = arith.mulf %138, %147 : vector<1x32xf32>
    %152 = arith.subf %150, %151 : vector<1x32xf32>
    %153 = vector.broadcast %152 : vector<1x32xf32> to vector<16x32xf32>
    %154 = arith.addf %149, %153 : vector<16x32xf32>
    %c12 = arith.constant 12 : index
    %c0_63 = arith.constant 0 : index
    %155 = vector.load %arg9[%c12, %c0_63] : memref<32x32xf32, #tpu.memory_space<vmem>>, vector<1x32xf32>
    %156 = vector.broadcast %155 : vector<1x32xf32> to vector<16x32xf32>
    %157 = arith.mulf %154, %156 : vector<16x32xf32>
    %158 = arith.addf %125, %157 : vector<16x32xf32>
    %c13 = arith.constant 13 : index
    %c0_64 = arith.constant 0 : index
    %159 = vector.load %arg9[%c13, %c0_64] : memref<32x32xf32, #tpu.memory_space<vmem>>, vector<1x32xf32>
    %160 = vector.broadcast %159 : vector<1x32xf32> to vector<16x32xf32>
    %161 = arith.addf %158, %160 : vector<16x32xf32>
    %cst_65 = arith.constant 0.000000e+00 : f32
    %162 = vector.broadcast %cst_65 : f32 to vector<16x32xf32>
    %163 = arith.maximumf %161, %162 : vector<16x32xf32>
    %164 = vector.extract_strided_slice %163 {offsets = [7, 0], sizes = [1, 32], strides = [1, 1]} : vector<16x32xf32> to vector<1x32xf32>
    %165 = vector.extract_strided_slice %163 {offsets = [15, 0], sizes = [1, 32], strides = [1, 1]} : vector<16x32xf32> to vector<1x32xf32>
    %166 = tpu.concatenate %164, %165 in 0 : vector<1x32xf32>, vector<1x32xf32> -> vector<2x32xf32>
    %c16 = arith.constant 16 : index
    %c0_66 = arith.constant 0 : index
    %167 = vector.load %arg9[%c16, %c0_66] : memref<32x32xf32, #tpu.memory_space<vmem>>, vector<16x32xf32>
    %168 = vector.shape_cast %166 : vector<2x32xf32> to vector<2x1x32xf32>
    %169 = vector.shape_cast %167 : vector<16x32xf32> to vector<1x16x32xf32>
    %170 = vector.broadcast %168 : vector<2x1x32xf32> to vector<2x16x32xf32>
    %171 = vector.broadcast %169 : vector<1x16x32xf32> to vector<2x16x32xf32>
    %172 = arith.mulf %170, %171 : vector<2x16x32xf32>
    %cst_67 = arith.constant dense<0.000000e+00> : vector<2x16xf32>
    %173 = vector.multi_reduction <add>, %172, %cst_67 [2] : vector<2x16x32xf32> to vector<2x16xf32>
    %c8 = arith.constant 8 : index
    %c0_68 = arith.constant 0 : index
    %174 = vector.load %arg9[%c8, %c0_68] : memref<32x32xf32, #tpu.memory_space<vmem>>, vector<1x16xf32>
    %175 = vector.broadcast %174 : vector<1x16xf32> to vector<2x16xf32>
    %176 = arith.addf %173, %175 : vector<2x16xf32>
    %cst_69 = arith.constant 0.000000e+00 : f32
    %177 = vector.broadcast %cst_69 : f32 to vector<2x16xf32>
    %178 = arith.maximumf %176, %177 : vector<2x16xf32>
    %c9 = arith.constant 9 : index
    %c0_70 = arith.constant 0 : index
    %179 = vector.load %arg9[%c9, %c0_70] : memref<32x32xf32, #tpu.memory_space<vmem>>, vector<1x16xf32>
    %180 = vector.broadcast %179 : vector<1x16xf32> to vector<2x16xf32>
    %181 = arith.mulf %178, %180 : vector<2x16xf32>
    %cst_71 = arith.constant dense<0.000000e+00> : vector<2xf32>
    %182 = vector.multi_reduction <add>, %181, %cst_71 [1] : vector<2x16xf32> to vector<2xf32>
    %183 = vector.shape_cast %182 : vector<2xf32> to vector<2x1xf32>
    %c14 = arith.constant 14 : index
    %c0_72 = arith.constant 0 : index
    %184 = vector.load %arg9[%c14, %c0_72] : memref<32x32xf32, #tpu.memory_space<vmem>>, vector<1x1xf32>
    %185 = vector.broadcast %184 : vector<1x1xf32> to vector<2x1xf32>
    %186 = arith.addf %183, %185 : vector<2x1xf32>
    %187 = vector.shape_cast %186 : vector<2x1xf32> to vector<1x2x1xf32>
    %c0_73 = arith.constant 0 : index
    %c0_74 = arith.constant 0 : index
    %c0_75 = arith.constant 0 : index
    %188 = vector.load %arg10[%c0_73, %c0_74, %c0_75] : memref<1x2x1xf32, #tpu.memory_space<vmem>>, vector<1x2x1xf32>
    tpu.vector_store %arg10[%c0_73, %c0_74, %c0_75], %187 {strides = array<i32>} : memref<1x2x1xf32, #tpu.memory_space<vmem>>, vector<1x2x1xf32>,
    return
  }
  func.func @transform_0(%arg0: i32) -> (i32, i32, i32) {
    %c0_i32 = arith.constant 0 : i32
    %c0_i32_0 = arith.constant 0 : i32
    %c0_i32_1 = arith.constant 0 : i32
    return %arg0, %c0_i32, %c0_i32_0 : i32, i32, i32
  }
  func.func @transform_1(%arg0: i32) -> (i32, i32, i32, i32) {
    %c0_i32 = arith.constant 0 : i32
    %c0_i32_0 = arith.constant 0 : i32
    %c0_i32_1 = arith.constant 0 : i32
    %c0_i32_2 = arith.constant 0 : i32
    return %arg0, %c0_i32, %c0_i32_0, %c0_i32_1 : i32, i32, i32, i32
  }
  func.func @transform_2(%arg0: i32) -> (i32, i32) {
    %c0_i32 = arith.constant 0 : i32
    %c0_i32_0 = arith.constant 0 : i32
    %c0_i32_1 = arith.constant 0 : i32
    return %c0_i32, %c0_i32_0 : i32, i32
  }
  func.func @transform_3(%arg0: i32) -> (i32, i32) {
    %c0_i32 = arith.constant 0 : i32
    %c0_i32_0 = arith.constant 0 : i32
    %c0_i32_1 = arith.constant 0 : i32
    return %c0_i32, %c0_i32_0 : i32, i32
  }
  func.func @transform_4(%arg0: i32) -> (i32, i32) {
    %c0_i32 = arith.constant 0 : i32
    %c0_i32_0 = arith.constant 0 : i32
    %c0_i32_1 = arith.constant 0 : i32
    return %c0_i32, %c0_i32_0 : i32, i32
  }
  func.func @transform_5(%arg0: i32) -> (i32, i32) {
    %c0_i32 = arith.constant 0 : i32
    %c0_i32_0 = arith.constant 0 : i32
    %c0_i32_1 = arith.constant 0 : i32
    return %c0_i32, %c0_i32_0 : i32, i32
  }
  func.func @transform_6(%arg0: i32) -> (i32, i32, i32) {
    %c0_i32 = arith.constant 0 : i32
    %c0_i32_0 = arith.constant 0 : i32
    %c0_i32_1 = arith.constant 0 : i32
    %c0_i32_2 = arith.constant 0 : i32
    return %c0_i32, %c0_i32_0, %c0_i32_1 : i32, i32, i32
  }
  func.func @transform_7(%arg0: i32) -> (i32, i32) {
    %c0_i32 = arith.constant 0 : i32
    %c0_i32_0 = arith.constant 0 : i32
    %c0_i32_1 = arith.constant 0 : i32
    return %c0_i32, %c0_i32_0 : i32, i32
  }
  func.func @transform_8(%arg0: i32) -> (i32, i32) {
    %c0_i32 = arith.constant 0 : i32
    %c0_i32_0 = arith.constant 0 : i32
    %c0_i32_1 = arith.constant 0 : i32
    return %c0_i32, %c0_i32_0 : i32, i32
  }
  func.func @transform_9(%arg0: i32) -> (i32, i32, i32) {
    %c0_i32 = arith.constant 0 : i32
    %c0_i32_0 = arith.constant 0 : i32
    %c0_i32_1 = arith.constant 0 : i32
    return %arg0, %c0_i32, %c0_i32_0 : i32, i32, i32
  }
}

</mosaic_0001>

<llo_original>
// kernel: timegnn_forward.1
$region0: #{timegnn_forward.1}
  #allocation0 [shape = 'u32[]', space=smem, size = 0x4, offset = 0x4, fixed_abs, tag = 'smem constant byte address 0x4 - core index']
  #allocation1 [shape = 'u32[144,128]{1,0:T(1,128)}', space=vmem, size = 0x12000, scoped, tag = 'internal scratch']
  %s0 = inlined_call_operand.vmem [shape: f32[4,16,4], index: 0, kind: input, shape index: {}]
  %s1 = inlined_call_operand.vmem [shape: f32[4,2,8,8], index: 1, kind: input, shape index: {}]
  %s2 = inlined_call_operand.vmem [shape: f32[16,20], index: 2, kind: input, shape index: {}]
  %s3 = inlined_call_operand.hbm [shape: f32[20,32], index: 3, kind: input, shape index: {}]
  %s4 = inlined_call_operand.hbm [shape: f32[16,32], index: 4, kind: input, shape index: {}]
  %s5 = inlined_call_operand.vmem [shape: f32[32,64], index: 5, kind: input, shape index: {}]
  %s6 = inlined_call_operand.hbm [shape: f32[2,8,8], index: 6, kind: input, shape index: {}]
  %s7 = inlined_call_operand.hbm [shape: f32[64,96], index: 7, kind: input, shape index: {}]
  %s8 = inlined_call_operand.hbm [shape: f32[32,32], index: 8, kind: input, shape index: {}]
  %s9 = inlined_call_operand.vmem [shape: f32[4,2,1], index: 9, kind: output, shape index: {}]
  %s10 = sld [smem:[#allocation0]]
  $region89: #{timegnn_forward.1} parent=0
    _
  %s12 = ssub.s32 1, %s10
  %s13 = scalar_select 0, %s12, %s10
  $region1: #{timegnn_forward.1} parent=0
    #allocation2 [shape = 'u8[12288]{0}', space=vmem, size = 0x3000, scoped, tag = 'input window, operand 3, single buffered']
    #allocation3 [shape = 's32[2]{0}', space=sflag, size = 0x8, scoped, tag = 'scoped memory for timegnn_forward.1']
    #allocation4 [shape = 'u8[8192]{0}', space=vmem, size = 0x2000, scoped, tag = 'input window, operand 4, single buffered']
    #allocation5 [shape = 's32[1]{0}', space=sflag, size = 0x4, scoped, tag = 'scoped memory for timegnn_forward.1']
    #allocation6 [shape = 'u8[8192]{0}', space=vmem, size = 0x2000, scoped, tag = 'input window, operand 6, single buffered']
    #allocation7 [shape = 'u8[32768]{0}', space=vmem, size = 0x8000, scoped, tag = 'input window, operand 7, single buffered']
    #allocation8 [shape = 's32[1]{0}', space=sflag, size = 0x4, scoped, tag = 'scoped memory for timegnn_forward.1']
    #allocation9 [shape = 'u8[16384]{0}', space=vmem, size = 0x4000, scoped, tag = 'input window, operand 8, single buffered']
    %14 = vsyncpa [#allocation3], 0
    %15 = vsyncpa [#allocation5], 0
    %16 = vsyncpa [#allocation8], 0
    loop: start=0, step=1, limit=6
    $region2: #{timegnn_forward.1} parent=1 // loop_pre_header
      _
    $region3: #{timegnn_forward.1} parent=1 // loop_header
      %s18 = sphi 0, %s22
      %p19 = scmp.ge.s32.totalorder %s18, 6
      %s28 = sphi 0, %s30
      %s31 = sphi 0, %s28
      %s32 = sphi 0, %s31
      %s48 = sphi 0, %s32
      %s54 = sphi 0, %s56
      %s57 = sphi 0, %s54
      %s58 = sphi 0, %s57
      %s74 = sphi 0, %s58
      %s78 = sphi 0, %s78
      %s80 = sphi 0, %s78
      %s81 = sphi 0, %s80
      %s95 = sphi 0, %s81
      %s99 = sphi 0, %s99
      %s101 = sphi 0, %s99
      %s102 = sphi 0, %s101
      %s116 = sphi 0, %s102
      %s120 = sphi 0, %s120
      %s122 = sphi 0, %s120
      %s123 = sphi 0, %s122
      %s137 = sphi 0, %s123
      %s141 = sphi 0, %s141
      %s143 = sphi 0, %s141
      %s144 = sphi 0, %s143
      %s158 = sphi 0, %s144
      %s162 = sphi 0, %s162
      %s164 = sphi 0, %s162
      %s165 = sphi 0, %s164
      %s179 = sphi 0, %s165
      %s183 = sphi 0, %s183
      %s185 = sphi 0, %s183
      %s186 = sphi 0, %s185
      %s200 = sphi 0, %s186
      %s204 = sphi 0, %s204
      %s206 = sphi 0, %s204
      %s207 = sphi 0, %s206
      %s221 = sphi 0, %s207
      %s227 = sphi 0, %s229
      %s230 = sphi 0, %s227
      %s231 = sphi 0, %s230
      %s247 = sphi 0, %s231
    $region4: #{timegnn_forward.1} parent=1 // loop_header_branch
      %21 = sbr.rel (%p19) target = $region8
    $region5: #{timegnn_forward.1} parent=1 // loop_body
      %s23 = ssub.s32 %s18, 1
      %s24 = ssub.s32 %s18, 2
      %s25 = sadd.s32 %s18, 1
      %s26 = ssub.s32 %s18, %s25
      %p27 = scmp.eq.s32.totalorder %s26, 0
      %s29 = sadd.s32 %s28, 1
      %s30 = scalar_select %p27, %s28, %s29
      %p33 = pneg %p27
      %p34 = scmp.eq.s32.totalorder %s18, 3
      %p35 = por %p33, %p34
      %p36 = scmp.ne.s32.totalorder %s28, %s31
      %p37 = scmp.eq.s32.totalorder %s18, 0
      %p38 = por %p36, %p37
      %p39 = scmp.ne.s32.totalorder %s28, %s31
      %p40 = scmp.eq.s32.totalorder %s23, 3
      %p41 = por %p39, %p40
      %p42 = scmp.ne.s32.totalorder %s31, %s32
      %p43 = scmp.eq.s32.totalorder %s23, 0
      %p44 = por %p42, %p43
      %p45 = scmp.ne.s32.totalorder %s31, %s32
      %p46 = scmp.eq.s32.totalorder %s24, 3
      %p47 = por %p45, %p46
      %p49 = scmp.ne.s32.totalorder %s32, %s48
      %p50 = scmp.eq.s32.totalorder %s24, 0
      %p51 = por %p49, %p50
      %s52 = ssub.s32 %s18, %s25
      %p53 = scmp.eq.s32.totalorder %s52, 0
      %s55 = sadd.s32 %s54, 1
      %s56 = scalar_select %p53, %s54, %s55
      %p59 = pneg %p53
      %p60 = scmp.eq.s32.totalorder %s18, 3
      %p61 = por %p59, %p60
      %p62 = scmp.ne.s32.totalorder %s54, %s57
      %p63 = scmp.eq.s32.totalorder %s18, 0
      %p64 = por %p62, %p63
      %p65 = scmp.ne.s32.totalorder %s54, %s57
      %p66 = scmp.eq.s32.totalorder %s23, 3
      %p67 = por %p65, %p66
      %p68 = scmp.ne.s32.totalorder %s57, %s58
      %p69 = scmp.eq.s32.totalorder %s23, 0
      %p70 = por %p68, %p69
      %p71 = scmp.ne.s32.totalorder %s57, %s58
      %p72 = scmp.eq.s32.totalorder %s24, 3
      %p73 = por %p71, %p72
      %p75 = scmp.ne.s32.totalorder %s58, %s74
      %p76 = scmp.eq.s32.totalorder %s24, 0
      %p77 = por %p75, %p76
      %s79 = sadd.s32 %s78, 1
      %p82 = scmp.eq.s32.totalorder %s18, 3
      %p83 = scmp.ne.s32.totalorder %s78, %s80
      %p84 = scmp.eq.s32.totalorder %s18, 0
      %p85 = por %p83, %p84
      %p86 = scmp.ne.s32.totalorder %s78, %s80
      %p87 = scmp.eq.s32.totalorder %s23, 3
      %p88 = por %p86, %p87
      %p89 = scmp.ne.s32.totalorder %s80, %s81
      %p90 = scmp.eq.s32.totalorder %s23, 0
      %p91 = por %p89, %p90
      %p92 = scmp.ne.s32.totalorder %s80, %s81
      %p93 = scmp.eq.s32.totalorder %s24, 3
      %p94 = por %p92, %p93
      %p96 = scmp.ne.s32.totalorder %s81, %s95
      %p97 = scmp.eq.s32.totalorder %s24, 0
      %p98 = por %p96, %p97
      %s100 = sadd.s32 %s99, 1
      %p103 = scmp.eq.s32.totalorder %s18, 3
      %p104 = scmp.ne.s32.totalorder %s99, %s101
      %p105 = scmp.eq.s32.totalorder %s18, 0
      %p106 = por %p104, %p105
      %p107 = scmp.ne.s32.totalorder %s99, %s101
      %p108 = scmp.eq.s32.totalorder %s23, 3
      %p109 = por %p107, %p108
      %p110 = scmp.ne.s32.totalorder %s101, %s102
      %p111 = scmp.eq.s32.totalorder %s23, 0
      %p112 = por %p110, %p111
      %p113 = scmp.ne.s32.totalorder %s101, %s102
      %p114 = scmp.eq.s32.totalorder %s24, 3
      %p115 = por %p113, %p114
      %p117 = scmp.ne.s32.totalorder %s102, %s116
      %p118 = scmp.eq.s32.totalorder %s24, 0
      %p119 = por %p117, %p118
      %s121 = sadd.s32 %s120, 1
      %p124 = scmp.eq.s32.totalorder %s18, 3
      %p125 = scmp.ne.s32.totalorder %s120, %s122
      %p126 = scmp.eq.s32.totalorder %s18, 0
      %p127 = por %p125, %p126
      %p128 = scmp.ne.s32.totalorder %s120, %s122
      %p129 = scmp.eq.s32.totalorder %s23, 3
      %p130 = por %p128, %p129
      %p131 = scmp.ne.s32.totalorder %s122, %s123
      %p132 = scmp.eq.s32.totalorder %s23, 0
      %p133 = por %p131, %p132
      %p134 = scmp.ne.s32.totalorder %s122, %s123
      %p135 = scmp.eq.s32.totalorder %s24, 3
      %p136 = por %p134, %p135
      %p138 = scmp.ne.s32.totalorder %s123, %s137
      %p139 = scmp.eq.s32.totalorder %s24, 0
      %p140 = por %p138, %p139
      %s142 = sadd.s32 %s141, 1
      %p145 = scmp.eq.s32.totalorder %s18, 3
      %p146 = scmp.ne.s32.totalorder %s141, %s143
      %p147 = scmp.eq.s32.totalorder %s18, 0
      %p148 = por %p146, %p147
      %p149 = scmp.ne.s32.totalorder %s141, %s143
      %p150 = scmp.eq.s32.totalorder %s23, 3
      %p151 = por %p149, %p150
      %p152 = scmp.ne.s32.totalorder %s143, %s144
      %p153 = scmp.eq.s32.totalorder %s23, 0
      %p154 = por %p152, %p153
      %p155 = scmp.ne.s32.totalorder %s143, %s144
      %p156 = scmp.eq.s32.totalorder %s24, 3
      %p157 = por %p155, %p156
      %p159 = scmp.ne.s32.totalorder %s144, %s158
      %p160 = scmp.eq.s32.totalorder %s24, 0
      %p161 = por %p159, %p160
      %s163 = sadd.s32 %s162, 1
      %p166 = scmp.eq.s32.totalorder %s18, 3
      %p167 = scmp.ne.s32.totalorder %s162, %s164
      %p168 = scmp.eq.s32.totalorder %s18, 0
      %p169 = por %p167, %p168
      %p170 = scmp.ne.s32.totalorder %s162, %s164
      %p171 = scmp.eq.s32.totalorder %s23, 3
      %p172 = por %p170, %p171
      %p173 = scmp.ne.s32.totalorder %s164, %s165
      %p174 = scmp.eq.s32.totalorder %s23, 0
      %p175 = por %p173, %p174
      %p176 = scmp.ne.s32.totalorder %s164, %s165
      %p177 = scmp.eq.s32.totalorder %s24, 3
      %p178 = por %p176, %p177
      %p180 = scmp.ne.s32.totalorder %s165, %s179
      %p181 = scmp.eq.s32.totalorder %s24, 0
      %p182 = por %p180, %p181
      %s184 = sadd.s32 %s183, 1
      %p187 = scmp.eq.s32.totalorder %s18, 3
      %p188 = scmp.ne.s32.totalorder %s183, %s185
      %p189 = scmp.eq.s32.totalorder %s18, 0
      %p190 = por %p188, %p189
      %p191 = scmp.ne.s32.totalorder %s183, %s185
      %p192 = scmp.eq.s32.totalorder %s23, 3
      %p193 = por %p191, %p192
      %p194 = scmp.ne.s32.totalorder %s185, %s186
      %p195 = scmp.eq.s32.totalorder %s23, 0
      %p196 = por %p194, %p195
      %p197 = scmp.ne.s32.totalorder %s185, %s186
      %p198 = scmp.eq.s32.totalorder %s24, 3
      %p199 = por %p197, %p198
      %p201 = scmp.ne.s32.totalorder %s186, %s200
      %p202 = scmp.eq.s32.totalorder %s24, 0
      %p203 = por %p201, %p202
      %s205 = sadd.s32 %s204, 1
      %p208 = scmp.eq.s32.totalorder %s18, 3
      %p209 = scmp.ne.s32.totalorder %s204, %s206
      %p210 = scmp.eq.s32.totalorder %s18, 0
      %p211 = por %p209, %p210
      %p212 = scmp.ne.s32.totalorder %s204, %s206
      %p213 = scmp.eq.s32.totalorder %s23, 3
      %p214 = por %p212, %p213
      %p215 = scmp.ne.s32.totalorder %s206, %s207
      %p216 = scmp.eq.s32.totalorder %s23, 0
      %p217 = por %p215, %p216
      %p218 = scmp.ne.s32.totalorder %s206, %s207
      %p219 = scmp.eq.s32.totalorder %s24, 3
      %p220 = por %p218, %p219
      %p222 = scmp.ne.s32.totalorder %s207, %s221
      %p223 = scmp.eq.s32.totalorder %s24, 0
      %p224 = por %p222, %p223
      %s225 = ssub.s32 %s18, %s25
      %p226 = scmp.eq.s32.totalorder %s225, 0
      %s228 = sadd.s32 %s227, 1
      %s229 = scalar_select %p226, %s227, %s228
      %p232 = pneg %p226
      %p233 = scmp.eq.s32.totalorder %s18, 3
      %p234 = por %p232, %p233
      %p235 = scmp.ne.s32.totalorder %s227, %s230
      %p236 = scmp.eq.s32.totalorder %s18, 0
      %p237 = por %p235, %p236
      %p238 = scmp.ne.s32.totalorder %s227, %s230
      %p239 = scmp.eq.s32.totalorder %s23, 3
      %p240 = por %p238, %p239
      %p241 = scmp.ne.s32.totalorder %s230, %s231
      %p242 = scmp.eq.s32.totalorder %s23, 0
      %p243 = por %p241, %p242
      %p244 = scmp.ne.s32.totalorder %s230, %s231
      %p245 = scmp.eq.s32.totalorder %s24, 3
      %p246 = por %p244, %p245
      %p248 = scmp.ne.s32.totalorder %s231, %s247
      %p249 = scmp.eq.s32.totalorder %s24, 0
      %p250 = por %p248, %p249
      %p251 = scmp.le.s32.totalorder 1, %s18
      %p252 = scmp.lt.s32.totalorder %s18, 5
      %p253 = pnand %p251, %p252
      %p254 = pneg %p253
      // Predicated region
      $region9: #{timegnn_forward.1} parent=5 // pred_check
        _
      $region10: #{timegnn_forward.1} parent=5 // pred_check_branch
        %256 = sbr.rel (%p253) target = $region12
      $region11: #{timegnn_forward.1} parent=5 // pred_region
        %s257 = ssub.s32 %s18, 1
        // Predicated region
        $region13: #{timegnn_forward.1} parent=11 // pred_check
          %p258 = pneg %p91
        $region14: #{timegnn_forward.1} parent=11 // pred_check_branch
          %260 = sbr.rel (%p258) target = $region16
        $region15: #{timegnn_forward.1} parent=11 // pred_region
          _
        $region16: #{timegnn_forward.1} parent=11 // pred_fallthru
          _
        // Predicated region
        $region17: #{timegnn_forward.1} parent=11 // pred_check
          %p261 = pneg %p112
        $region18: #{timegnn_forward.1} parent=11 // pred_check_branch
          %263 = sbr.rel (%p261) target = $region20
        $region19: #{timegnn_forward.1} parent=11 // pred_region
          %s265 = ssub.s32 384, 384
          %266 = vsyncadd [#allocation3], %s265
          %s267 = sshll.u32 [#allocation2], 4
          %s268 = int_to_ptr.vmem [resolvable:$true] %s267
          %273 = dma.hbm_to_vmem [thread:$0]  %s3, 384, %s268, [#allocation3], 128, 128, 8
        $region20: #{timegnn_forward.1} parent=11 // pred_fallthru
          _
        // Predicated region
        $region21: #{timegnn_forward.1} parent=11 // pred_check
          %p274 = pneg %p133
        $region22: #{timegnn_forward.1} parent=11 // pred_check_branch
          %276 = sbr.rel (%p274) target = $region24
        $region23: #{timegnn_forward.1} parent=11 // pred_region
          %s278 = ssub.s32 256, 256
          %279 = vsyncadd [#allocation5], %s278
          %s280 = sshll.u32 [#allocation4], 4
          %s281 = int_to_ptr.vmem [resolvable:$true] %s280
          %286 = dma.hbm_to_vmem [thread:$0]  %s4, 256, %s281, [#allocation5], 128, 128, 8
        $region24: #{timegnn_forward.1} parent=11 // pred_fallthru
          _
        // Predicated region
        $region25: #{timegnn_forward.1} parent=11 // pred_check
          %p287 = pneg %p154
        $region26: #{timegnn_forward.1} parent=11 // pred_check_branch
          %289 = sbr.rel (%p287) target = $region28
        $region27: #{timegnn_forward.1} parent=11 // pred_region
          _
        $region28: #{timegnn_forward.1} parent=11 // pred_fallthru
          _
        // Predicated region
        $region29: #{timegnn_forward.1} parent=11 // pred_check
          %p290 = pneg %p175
        $region30: #{timegnn_forward.1} parent=11 // pred_check_branch
          %292 = sbr.rel (%p290) target = $region32
        $region31: #{timegnn_forward.1} parent=11 // pred_region
          %s294 = ssub.s32 256, 256
          %295 = vsyncadd [#allocation5], %s294
          %s296 = sshll.u32 [#allocation6], 4
          %s297 = int_to_ptr.vmem [resolvable:$true] %s296
          %302 = dma.hbm_to_vmem [thread:$0]  %s6, 256, %s297, [#allocation5], 128, 128, 8
        $region32: #{timegnn_forward.1} parent=11 // pred_fallthru
          _
        // Predicated region
        $region33: #{timegnn_forward.1} parent=11 // pred_check
          %p303 = pneg %p196
        $region34: #{timegnn_forward.1} parent=11 // pred_check_branch
          %305 = sbr.rel (%p303) target = $region36
        $region35: #{timegnn_forward.1} parent=11 // pred_region
          %s307 = ssub.s32 1024, 1024
          %308 = vsyncadd [#allocation8], %s307
          %s309 = sshll.u32 [#allocation7], 4
          %s310 = int_to_ptr.vmem [resolvable:$true] %s309
          %315 = dma.hbm_to_vmem [thread:$0]  %s7, 1024, %s310, [#allocation8], 128, 128, 8
        $region36: #{timegnn_forward.1} parent=11 // pred_fallthru
          _
        // Predicated region
        $region37: #{timegnn_forward.1} parent=11 // pred_check
          %p316 = pneg %p217
        $region38: #{timegnn_forward.1} parent=11 // pred_check_branch
          %318 = sbr.rel (%p316) target = $region40
        $region39: #{timegnn_forward.1} parent=11 // pred_region
          %s320 = ssub.s32 512, 512
          %321 = vsyncadd [#allocation8], %s320
          %s322 = sshll.u32 [#allocation9], 4
          %s323 = int_to_ptr.vmem [resolvable:$true] %s322
          %328 = dma.hbm_to_vmem [thread:$0]  %s8, 512, %s323, [#allocation8], 128, 128, 8
        $region40: #{timegnn_forward.1} parent=11 // pred_fallthru
          _
      $region12: #{timegnn_forward.1} parent=5 // pred_fallthru
        _
      %p329 = scmp.lt.s32.totalorder %s18, 4
      // Predicated region
      $region41: #{timegnn_forward.1} parent=5 // pred_check
        %p330 = pneg %p329
      $region42: #{timegnn_forward.1} parent=5 // pred_check_branch
        %332 = sbr.rel (%p330) target = $region44
      $region43: #{timegnn_forward.1} parent=5 // pred_region
        // Predicated region
        $region45: #{timegnn_forward.1} parent=43 // pred_check
          %p333 = pneg %p38
        $region46: #{timegnn_forward.1} parent=43 // pred_check_branch
          %335 = sbr.rel (%p333) target = $region48
        $region47: #{timegnn_forward.1} parent=43 // pred_region
          %p336 = scmp.lt.s32.totalorder %s18, 3
          %s337 = scalar_select %p336, %s18, 3
          %s338 = smul.addr %s337, 2
          %s339 = smul.addr %s338, 8
          %s340 = scalar_lea.vmem %s0, %s339
        $region48: #{timegnn_forward.1} parent=43 // pred_fallthru
          _
        // Predicated region
        $region49: #{timegnn_forward.1} parent=43 // pred_check
          %p341 = pneg %p64
        $region50: #{timegnn_forward.1} parent=43 // pred_check_branch
          %343 = sbr.rel (%p341) target = $region52
        $region51: #{timegnn_forward.1} parent=43 // pred_region
          %p344 = scmp.lt.s32.totalorder %s18, 3
          %s345 = scalar_select %p344, %s18, 3
          %s346 = smul.addr %s345, 2
          %s347 = smul.addr %s346, 8
          %s348 = scalar_lea.vmem %s1, %s347
        $region52: #{timegnn_forward.1} parent=43 // pred_fallthru
          _
      $region44: #{timegnn_forward.1} parent=5 // pred_fallthru
        _
      %p349 = scmp.le.s32.totalorder 1, %s18
      %p350 = scmp.lt.s32.totalorder %s18, 5
      %p351 = pnand %p349, %p350
      %p352 = pneg %p351
      // Predicated region
      $region53: #{timegnn_forward.1} parent=5 // pred_check
        _
      $region54: #{timegnn_forward.1} parent=5 // pred_check_branch
        %354 = sbr.rel (%p351) target = $region56
      $region55: #{timegnn_forward.1} parent=5 // pred_region
        %s355 = ssub.s32 %s18, 1
        // Predicated region
        $region57: #{timegnn_forward.1} parent=55 // pred_check
          %p356 = pneg %p112
        $region58: #{timegnn_forward.1} parent=55 // pred_check_branch
          %358 = sbr.rel (%p356) target = $region60
        $region59: #{timegnn_forward.1} parent=55 // pred_region
          %359 = dma.done [#allocation3], 384
        $region60: #{timegnn_forward.1} parent=55 // pred_fallthru
          _
        // Predicated region
        $region61: #{timegnn_forward.1} parent=55 // pred_check
          %p360 = pneg %p133
        $region62: #{timegnn_forward.1} parent=55 // pred_check_branch
          %362 = sbr.rel (%p360) target = $region64
        $region63: #{timegnn_forward.1} parent=55 // pred_region
          %363 = dma.done [#allocation5], 256
        $region64: #{timegnn_forward.1} parent=55 // pred_fallthru
          _
        // Predicated region
        $region65: #{timegnn_forward.1} parent=55 // pred_check
          %p364 = pneg %p175
        $region66: #{timegnn_forward.1} parent=55 // pred_check_branch
          %366 = sbr.rel (%p364) target = $region68
        $region67: #{timegnn_forward.1} parent=55 // pred_region
          %367 = dma.done [#allocation5], 256
        $region68: #{timegnn_forward.1} parent=55 // pred_fallthru
          _
        // Predicated region
        $region69: #{timegnn_forward.1} parent=55 // pred_check
          %p368 = pneg %p196
        $region70: #{timegnn_forward.1} parent=55 // pred_check_branch
          %370 = sbr.rel (%p368) target = $region72
        $region71: #{timegnn_forward.1} parent=55 // pred_region
          %371 = dma.done [#allocation8], 1024
        $region72: #{timegnn_forward.1} parent=55 // pred_fallthru
          _
        // Predicated region
        $region73: #{timegnn_forward.1} parent=55 // pred_check
          %p372 = pneg %p217
        $region74: #{timegnn_forward.1} parent=55 // pred_check_branch
          %374 = sbr.rel (%p372) target = $region76
        $region75: #{timegnn_forward.1} parent=55 // pred_region
          %375 = dma.done [#allocation8], 512
        $region76: #{timegnn_forward.1} parent=55 // pred_fallthru
          _
        %p376 = scmp.lt.s32.totalorder %s23, 3
        %s377 = scalar_select %p376, %s23, 3
        %s378 = smul.addr %s377, 2
        %s379 = smul.addr %s378, 8
        %s380 = scalar_lea.vmem %s0, %s379
        %p381 = pneg %p44
        %p382 = pneg %p41
        %p383 = scmp.lt.s32.totalorder %s23, 3
        %s384 = scalar_select %p383, %s23, 3
        %s385 = smul.addr %s384, 2
        %s386 = smul.addr %s385, 8
        %s387 = scalar_lea.vmem %s1, %s386
        %p388 = pneg %p70
        %p389 = pneg %p67
        %p390 = pneg %p91
        %p391 = pneg %p88
        %p392 = pneg %p112
        %p393 = pneg %p109
        %p394 = pneg %p133
        %p395 = pneg %p130
        %p396 = pneg %p154
        %p397 = pneg %p151
        %p398 = pneg %p175
        %p399 = pneg %p172
        %p400 = pneg %p196
        %p401 = pneg %p193
        %p402 = pneg %p217
        %p403 = pneg %p214
        %p404 = pneg %p243
        %p405 = pneg %p240
        %p406 = scmp.lt.s32.totalorder %s23, 3
        %s407 = scalar_select %p406, %s23, 3
        %s408 = smul.addr %s407, 2
        %s409 = scalar_lea.vmem %s9, %s408
        %p410 = scmp.lt.s32.totalorder %s23, 3
        %s411 = scalar_select %p410, %s23, 3
        %s412 = smul.addr %s411, 2
        %s413 = smul.addr %s412, 8
        %s414 = scalar_lea.vmem %s0, %s413
        %p415 = scmp.lt.s32.totalorder %s23, 3
        %s416 = scalar_select %p415, %s23, 3
        %s417 = smul.addr %s416, 2
        %s418 = smul.addr %s417, 8
        %s419 = scalar_lea.vmem %s1, %s418
        %p420 = scmp.lt.s32.totalorder %s23, 3
        %s421 = scalar_select %p420, %s23, 3
        %s422 = smul.addr %s421, 2
        %s423 = scalar_lea.vmem %s9, %s422
        %v424 = vld [vmem:[%s414] sm:$0xff]
        %v425 = vld [vmem:[%s414 + $0x8] sm:$0xff]
        %vm428 = vcmask 1045504
        %v429 = vrot.slane %v425, 2
        %v430 = vrot.slane %v424, 2
        %v431 = vsel %vm428, %v429, %v430
        %v432 = vsel %vm428, %v430, %v429
        %433 = vrot.lane.b32.xlu0 %v431, 4
        %v434 = vpop.permute.xlu0 %433
        %435 = vrot.lane.b32.xlu0 %v432, 4
        %v436 = vpop.permute.xlu0 %435
        %437 = vrot.lane.b32.xlu0 %v429, 4
        %v438 = vpop.permute.xlu0 %437
        %vm442 = vcmask 1042432
        %v443 = vrot.slane %v424, 5
        %v444 = vrot.slane %v425, 5
        %v445 = vsel %vm442, %v443, %v444
        %446 = vrot.lane.b32.xlu0 %v443, 8
        %v447 = vpop.permute.xlu0 %446
        %448 = vrot.lane.b32.xlu0 %v445, 8
        %v449 = vpop.permute.xlu0 %448
        %450 = vrot.lane.b32.xlu0 %v444, 8
        %v451 = vpop.permute.xlu0 %450
        %455 = vrot.lane.b32.xlu0 %v424, 12
        %v456 = vpop.permute.xlu0 %455
        %457 = vrot.lane.b32.xlu0 %v425, 12
        %v458 = vpop.permute.xlu0 %457
        %461 = vrot.lane.b32.xlu0 %v432, 16
        %v462 = vpop.permute.xlu0 %461
        %463 = vrot.lane.b32.xlu0 %v431, 16
        %v464 = vpop.permute.xlu0 %463
        %465 = vrot.lane.b32.xlu0 %v430, 16
        %v466 = vpop.permute.xlu0 %465
        %vm470 = vcmask 31744
        %v471 = vsel %vm470, %v425, %v434
        %v472 = vsel %vm470, %v424, %v436
        %v473 = vsel %vm470, %v425, %v438
        %vm474 = vcmask 64512
        %v475 = vsel %vm474, %v471, %v447
        %v476 = vsel %vm474, %v472, %v449
        %v477 = vsel %vm474, %v473, %v451
        %vm478 = vcmask 97280
        %v479 = vsel %vm478, %v475, %v456
        %v480 = vsel %vm478, %v476, %v458
        %v481 = vsel %vm478, %v477, %v456
        %vm482 = vcmask 130048
        %v483 = vsel %vm482, %v479, %v462
        %v484 = vsel %vm482, %v480, %v464
        %v485 = vsel %vm482, %v481, %v466
        %v486 = vld [vmem:[%s2] sm:$0xff]
        %v487 = vld [vmem:[%s2 + $0x8] sm:$0xff]
        %v490 = vrot.slane %v486, 5
        %v491 = vrot.slane %v487, 5
        %v492 = vsel %vm442, %v490, %v491
        %v496 = vmul.f32 %v483, %v490
        %v497 = vmul.f32 %v484, %v492
        %v498 = vmul.f32 %v485, %v491
        %v499 = vld [vmem:[#allocation2] sm:$0xff]
        %v500 = vld [vmem:[#allocation2 + $0x8] sm:$0xff]
        %v501 = vld [vmem:[#allocation2 + $0x10] sm:$0xf]
        %v502 = vld [vmem:[#allocation4] sm:$0xff]
        %v503 = vld [vmem:[#allocation4 + $0x8] sm:$0xff]
        %vm507 = vcmask 1044480
        %v508 = vrot.slane %v496, 3
        %v509 = vrot.slane %v497, 3
        %v510 = vsel %vm507, %v508, %v509
        %v511 = vrot.slane %v498, 3
        %v512 = vsel %vm507, %v509, %v511
        %vm513 = vcmask 162816
        %v514 = vsel %vm513, %v510, 0
        %v516 = vsel %vm513, %v512, 0
        %vm518 = vcmask 1043456
        %v520 = vsel %vm518, %v501, 0
        %522 = vmatprep.subr.mxu0 0.0
        %523 = vmatpush1.msra.mxu0 %v499
        %524 = vmatprep.subr.mxu0 0.0
        %525 = vmatpush1.msra.mxu0 %v500
        %526 = vmatprep.subr.mxu0 0.0
        %527 = vmatpush1.msra.mxu0 %v520
        %528 = vmatprep.subr.mxu0 0.0
        %529 = vmatpush1.msra.mxu0 0.0
        %530 = vmatprep.subr.mxu0 0.0
        %531 = vmatpush1.msra.mxu0 0.0
        %532 = vmatprep.subr.mxu0 0.0
        %533 = vmatpush1.msra.mxu0 0.0
        %534 = vmatprep.subr.mxu0 0.0
        %535 = vmatpush1.msra.mxu0 0.0
        %536 = vmatprep.subr.mxu0 0.0
        %537 = vmatpush1.msra.mxu0 0.0
        %538 = vmatprep.subr.mxu0 0.0
        %539 = vmatpush1.msra.mxu0 0.0
        %540 = vmatprep.subr.mxu0 0.0
        %541 = vmatpush1.msra.mxu0 0.0
        %542 = vmatprep.subr.mxu0 0.0
        %543 = vmatpush1.msra.mxu0 0.0
        %544 = vmatprep.subr.mxu0 0.0
        %545 = vmatpush1.msra.mxu0 0.0
        %546 = vmatprep.subr.mxu0 0.0
        %547 = vmatpush1.msra.mxu0 0.0
        %548 = vmatprep.subr.mxu0 0.0
        %549 = vmatpush1.msra.mxu0 0.0
        %550 = vmatprep.subr.mxu0 0.0
        %551 = vmatpush1.msra.mxu0 0.0
        %552 = vmatprep.subr.mxu0 0.0
        %553 = vmatpush1.msra.mxu0 0.0
        %554 = vmatprep.subr.mxu0 0.0
        %555 = vmatpush1.msra.mxu0 0.0
        %556 = vmatprep.subr.mxu0 0.0
        %557 = vmatpush1.msra.mxu0 0.0
        %558 = vmatprep.subr.mxu0 0.0
        %559 = vmatpush1.msra.mxu0 0.0
        %560 = vmatprep.subr.mxu0 0.0
        %561 = vmatpush1.msra.mxu0 0.0
        %562 = vmatprep.subr.mxu0 0.0
        %563 = vmatpush1.msra.mxu0 0.0
        %564 = vmatprep.subr.mxu0 0.0
        %565 = vmatpush1.msra.mxu0 0.0
        %566 = vmatprep.subr.mxu0 0.0
        %567 = vmatpush1.msra.mxu0 0.0
        %568 = vmatprep.subr.mxu0 0.0
        %569 = vmatpush1.msra.mxu0 0.0
        %570 = vmatprep.subr.mxu0 0.0
        %571 = vmatpush1.msra.mxu0 0.0
        %572 = vmatprep.subr.mxu0 0.0
        %573 = vmatpush1.msra.mxu0 0.0
        %574 = vmatprep.subr.mxu0 0.0
        %575 = vmatpush1.msra.mxu0 0.0
        %576 = vmatprep.subr.mxu0 0.0
        %577 = vmatpush1.msra.mxu0 0.0
        %578 = vmatprep.subr.mxu0 0.0
        %579 = vmatpush1.msra.mxu0 0.0
        %580 = vmatprep.subr.mxu0 0.0
        %581 = vmatpush1.msra.mxu0 0.0
        %582 = vmatprep.subr.mxu0 0.0
        %583 = vmatpush1.msra.mxu0 0.0
        %584 = vmatprep.subr.mxu0 0.0
        %585 = vmatpush1.msra.mxu0 0.0
        %586 = vmatprep.mubr.f32.mxu0 0.0
        %587 = vmatmul.mubr.f32.gmra.mrb[0].mxu0 %v514
        %v588 = vpop.f32.mrb[0].mxu0
        %v589 = vadd.f32 %v502, %v588
        %v590 = vpop.f32.mrb[0].mxu0
        %591 = vmatprep.mubr.f32.mxu0 0.0
        %592 = vmatmul.mubr.f32.gmra.mrb[0].mxu0 %v516
        %v593 = vpop.f32.mrb[0].mxu0
        %v594 = vadd.f32 %v503, %v593
        %v595 = vpop.f32.mrb[0].mxu0
        %596 = vdwg.mxu0
        %v597 = vmax.f32 %v589, 0.0
        %v598 = vmax.f32 %v594, 0.0
        %v599 = vld [vmem:[%s5] sm:$0xff]
        %v600 = vld [vmem:[%s5 + $0x8] sm:$0xff]
        %v601 = vld [vmem:[%s5 + $0x10] sm:$0xff]
        %v602 = vld [vmem:[%s5 + $0x18] sm:$0xff]
        %vm603 = vcmask 261120
        %v605 = vsel %vm603, %v597, 0
        %v608 = vsel %vm603, %v598, 0
        %610 = vmatprep.subr.mxu0 0.0
        %611 = vmatpush1.msra.mxu0 %v599
        %612 = vmatprep.subr.mxu0 0.0
        %613 = vmatpush1.msra.mxu0 %v600
        %614 = vmatprep.subr.mxu0 0.0
        %615 = vmatpush1.msra.mxu0 %v601
        %616 = vmatprep.subr.mxu0 0.0
        %617 = vmatpush1.msra.mxu0 %v602
        %618 = vmatprep.subr.mxu0 0.0
        %619 = vmatpush1.msra.mxu0 0.0
        %620 = vmatprep.subr.mxu0 0.0
        %621 = vmatpush1.msra.mxu0 0.0
        %622 = vmatprep.subr.mxu0 0.0
        %623 = vmatpush1.msra.mxu0 0.0
        %624 = vmatprep.subr.mxu0 0.0
        %625 = vmatpush1.msra.mxu0 0.0
        %626 = vmatprep.subr.mxu0 0.0
        %627 = vmatpush1.msra.mxu0 0.0
        %628 = vmatprep.subr.mxu0 0.0
        %629 = vmatpush1.msra.mxu0 0.0
        %630 = vmatprep.subr.mxu0 0.0
        %631 = vmatpush1.msra.mxu0 0.0
        %632 = vmatprep.subr.mxu0 0.0
        %633 = vmatpush1.msra.mxu0 0.0
        %634 = vmatprep.subr.mxu0 0.0
        %635 = vmatpush1.msra.mxu0 0.0
        %636 = vmatprep.subr.mxu0 0.0
        %637 = vmatpush1.msra.mxu0 0.0
        %638 = vmatprep.subr.mxu0 0.0
        %639 = vmatpush1.msra.mxu0 0.0
        %640 = vmatprep.subr.mxu0 0.0
        %641 = vmatpush1.msra.mxu0 0.0
        %642 = vmatprep.subr.mxu0 0.0
        %643 = vmatpush1.msra.mxu0 0.0
        %644 = vmatprep.subr.mxu0 0.0
        %645 = vmatpush1.msra.mxu0 0.0
        %646 = vmatprep.subr.mxu0 0.0
        %647 = vmatpush1.msra.mxu0 0.0
        %648 = vmatprep.subr.mxu0 0.0
        %649 = vmatpush1.msra.mxu0 0.0
        %650 = vmatprep.subr.mxu0 0.0
        %651 = vmatpush1.msra.mxu0 0.0
        %652 = vmatprep.subr.mxu0 0.0
        %653 = vmatpush1.msra.mxu0 0.0
        %654 = vmatprep.subr.mxu0 0.0
        %655 = vmatpush1.msra.mxu0 0.0
        %656 = vmatprep.subr.mxu0 0.0
        %657 = vmatpush1.msra.mxu0 0.0
        %658 = vmatprep.subr.mxu0 0.0
        %659 = vmatpush1.msra.mxu0 0.0
        %660 = vmatprep.subr.mxu0 0.0
        %661 = vmatpush1.msra.mxu0 0.0
        %662 = vmatprep.subr.mxu0 0.0
        %663 = vmatpush1.msra.mxu0 0.0
        %664 = vmatprep.subr.mxu0 0.0
        %665 = vmatpush1.msra.mxu0 0.0
        %666 = vmatprep.subr.mxu0 0.0
        %667 = vmatpush1.msra.mxu0 0.0
        %668 = vmatprep.subr.mxu0 0.0
        %669 = vmatpush1.msra.mxu0 0.0
        %670 = vmatprep.subr.mxu0 0.0
        %671 = vmatpush1.msra.mxu0 0.0
        %672 = vmatprep.subr.mxu0 0.0
        %673 = vmatpush1.msra.mxu0 0.0
        %674 = vmatprep.mubr.f32.mxu0 0.0
        %675 = vmatmul.mubr.f32.gmra.mrb[0].mxu0 %v605
        %v676 = vpop.f32.mrb[0].mxu0
        %v677 = vadd.f32 0.0, %v676
        %v678 = vpop.f32.mrb[0].mxu0
        %679 = vmatprep.mubr.f32.mxu0 0.0
        %680 = vmatmul.mubr.f32.gmra.mrb[0].mxu0 %v608
        %v681 = vpop.f32.mrb[0].mxu0
        %v682 = vadd.f32 0.0, %v681
        %v683 = vpop.f32.mrb[0].mxu0
        %684 = vdwg.mxu0
        %v685 = vld [vmem:[#allocation9] sm:$0x1]
        %v688 = vcombine.high %v677, %v677
        %v690 = vunpack.c.l.s4 1966171168
        %v691 = vunpack.c.0.s8 %v690
        %v692 = vlaneseq
        %v693 = vshrl.u32 %v692, 7
        %v694 = vsub.s32 %v691, %v693
        %v695 = vrot.slane %v677, %v694
        %v697 = vunpack.c.l.s4 1966171168
        %v698 = vunpack.c.0.s8 %v697
        %v699 = vlaneseq
        %v700 = vshrl.u32 %v699, 7
        %v701 = vsub.s32 %v698, %v700
        %v702 = vrot.slane %v688, %v701
        %v703 = vcombine.high %v695, %v695
        %v704 = vcombine.high %v702, %v702
        %v706 = vunpack.c.l.s4 1966171168
        %v707 = vunpack.c.0.s8 %v706
        %v708 = vlaneseq
        %v709 = vshrl.u32 %v708, 7
        %v710 = vsub.s32 %v707, %v709
        %v711 = vrot.slane %v695, %v710
        %v713 = vunpack.c.l.s4 1966171168
        %v714 = vunpack.c.0.s8 %v713
        %v715 = vlaneseq
        %v716 = vshrl.u32 %v715, 7
        %v717 = vsub.s32 %v714, %v716
        %v718 = vrot.slane %v702, %v717
        %v720 = vunpack.c.l.s4 1966171168
        %v721 = vunpack.c.0.s8 %v720
        %v722 = vlaneseq
        %v723 = vshrl.u32 %v722, 7
        %v724 = vsub.s32 %v721, %v723
        %v725 = vrot.slane %v703, %v724
        %v727 = vunpack.c.l.s4 1966171168
        %v728 = vunpack.c.0.s8 %v727
        %v729 = vlaneseq
        %v730 = vshrl.u32 %v729, 7
        %v731 = vsub.s32 %v728, %v730
        %v732 = vrot.slane %v704, %v731
        %v733 = vcombine.high %v711, %v711
        %v734 = vcombine.high %v718, %v718
        %v735 = vcombine.high %v725, %v725
        %v736 = vcombine.high %v732, %v732
        %v737 = vcombine.high %v682, %v682
        %v739 = vunpack.c.l.s4 1966171168
        %v740 = vunpack.c.0.s8 %v739
        %v741 = vlaneseq
        %v742 = vshrl.u32 %v741, 7
        %v743 = vsub.s32 %v740, %v742
        %v744 = vrot.slane %v682, %v743
        %v746 = vunpack.c.l.s4 1966171168
        %v747 = vunpack.c.0.s8 %v746
        %v748 = vlaneseq
        %v749 = vshrl.u32 %v748, 7
        %v750 = vsub.s32 %v747, %v749
        %v751 = vrot.slane %v737, %v750
        %v752 = vcombine.high %v744, %v744
        %v753 = vcombine.high %v751, %v751
        %v755 = vunpack.c.l.s4 1966171168
        %v756 = vunpack.c.0.s8 %v755
        %v757 = vlaneseq
        %v758 = vshrl.u32 %v757, 7
        %v759 = vsub.s32 %v756, %v758
        %v760 = vrot.slane %v744, %v759
        %v762 = vunpack.c.l.s4 1966171168
        %v763 = vunpack.c.0.s8 %v762
        %v764 = vlaneseq
        %v765 = vshrl.u32 %v764, 7
        %v766 = vsub.s32 %v763, %v765
        %v767 = vrot.slane %v751, %v766
        %v769 = vunpack.c.l.s4 1966171168
        %v770 = vunpack.c.0.s8 %v769
        %v771 = vlaneseq
        %v772 = vshrl.u32 %v771, 7
        %v773 = vsub.s32 %v770, %v772
        %v774 = vrot.slane %v752, %v773
        %v776 = vunpack.c.l.s4 1966171168
        %v777 = vunpack.c.0.s8 %v776
        %v778 = vlaneseq
        %v779 = vshrl.u32 %v778, 7
        %v780 = vsub.s32 %v777, %v779
        %v781 = vrot.slane %v753, %v780
        %v782 = vcombine.high %v760, %v760
        %v783 = vcombine.high %v767, %v767
        %v784 = vcombine.high %v774, %v774
        %v785 = vcombine.high %v781, %v781
        %v786 = vlaneseq
        %v787 = vshrl.u32 %v786, 7
        %v788 = vsub.s32 0, %v787
        %v789 = vrot.slane %v711, %v788
        %v790 = vlaneseq
        %v791 = vshrl.u32 %v790, 7
        %v792 = vsub.s32 0, %v791
        %v793 = vrot.slane %v725, %v792
        %v794 = vlaneseq
        %v795 = vshrl.u32 %v794, 7
        %v796 = vsub.s32 0, %v795
        %v797 = vrot.slane %v733, %v796
        %v798 = vlaneseq
        %v799 = vshrl.u32 %v798, 7
        %v800 = vsub.s32 0, %v799
        %v801 = vrot.slane %v735, %v800
        %v802 = vlaneseq
        %v803 = vshrl.u32 %v802, 7
        %v804 = vsub.s32 0, %v803
        %v805 = vrot.slane %v718, %v804
        %v806 = vlaneseq
        %v807 = vshrl.u32 %v806, 7
        %v808 = vsub.s32 0, %v807
        %v809 = vrot.slane %v732, %v808
        %v810 = vlaneseq
        %v811 = vshrl.u32 %v810, 7
        %v812 = vsub.s32 0, %v811
        %v813 = vrot.slane %v734, %v812
        %v814 = vlaneseq
        %v815 = vshrl.u32 %v814, 7
        %v816 = vsub.s32 0, %v815
        %v817 = vrot.slane %v736, %v816
        %v818 = vlaneseq
        %v819 = vshrl.u32 %v818, 7
        %v820 = vsub.s32 0, %v819
        %v821 = vrot.slane %v760, %v820
        %v822 = vlaneseq
        %v823 = vshrl.u32 %v822, 7
        %v824 = vsub.s32 0, %v823
        %v825 = vrot.slane %v774, %v824
        %v826 = vlaneseq
        %v827 = vshrl.u32 %v826, 7
        %v828 = vsub.s32 0, %v827
        %v829 = vrot.slane %v782, %v828
        %v830 = vlaneseq
        %v831 = vshrl.u32 %v830, 7
        %v832 = vsub.s32 0, %v831
        %v833 = vrot.slane %v784, %v832
        %v834 = vlaneseq
        %v835 = vshrl.u32 %v834, 7
        %v836 = vsub.s32 0, %v835
        %v837 = vrot.slane %v767, %v836
        %v838 = vlaneseq
        %v839 = vshrl.u32 %v838, 7
        %v840 = vsub.s32 0, %v839
        %v841 = vrot.slane %v781, %v840
        %v842 = vlaneseq
        %v843 = vshrl.u32 %v842, 7
        %v844 = vsub.s32 0, %v843
        %v845 = vrot.slane %v783, %v844
        %v846 = vlaneseq
        %v847 = vshrl.u32 %v846, 7
        %v848 = vsub.s32 0, %v847
        %v849 = vrot.slane %v785, %v848
        %866 = vrot.lane.b32.xlu0 %v677, 96
        %v867 = vpop.permute.xlu0 %866
        %868 = vrot.lane.b32.xlu0 %v682, 96
        %v869 = vpop.permute.xlu0 %868
        %v872 = vadd.f32 %v789, %v867
        %v873 = vadd.f32 %v793, %v867
        %v874 = vadd.f32 %v797, %v867
        %v875 = vadd.f32 %v801, %v867
        %v876 = vadd.f32 %v805, %v867
        %v877 = vadd.f32 %v809, %v867
        %v878 = vadd.f32 %v813, %v867
        %v879 = vadd.f32 %v817, %v867
        %v880 = vadd.f32 %v821, %v869
        %v881 = vadd.f32 %v825, %v869
        %v882 = vadd.f32 %v829, %v869
        %v883 = vadd.f32 %v833, %v869
        %v884 = vadd.f32 %v837, %v869
        %v885 = vadd.f32 %v841, %v869
        %v886 = vadd.f32 %v845, %v869
        %v887 = vadd.f32 %v849, %v869
        %v888 = vlaneseq
        %v889 = vshrl.u32 %v888, 7
        %v890 = vsub.s32 0, %v889
        %v891 = vrot.slane %v685, %v890
        %v892 = vadd.f32 %v872, %v891
        %v893 = vadd.f32 %v873, %v891
        %v894 = vadd.f32 %v874, %v891
        %v895 = vadd.f32 %v875, %v891
        %v896 = vadd.f32 %v876, %v891
        %v897 = vadd.f32 %v877, %v891
        %v898 = vadd.f32 %v878, %v891
        %v899 = vadd.f32 %v879, %v891
        %v900 = vadd.f32 %v880, %v891
        %v901 = vadd.f32 %v881, %v891
        %v902 = vadd.f32 %v882, %v891
        %v903 = vadd.f32 %v883, %v891
        %v904 = vadd.f32 %v884, %v891
        %v905 = vadd.f32 %v885, %v891
        %v906 = vadd.f32 %v886, %v891
        %v907 = vadd.f32 %v887, %v891
        %v908 = vmax.f32 %v892, 0.0
        %v909 = vmax.f32 %v893, 0.0
        %v910 = vmax.f32 %v894, 0.0
        %v911 = vmax.f32 %v895, 0.0
        %v912 = vmax.f32 %v896, 0.0
        %v913 = vmax.f32 %v897, 0.0
        %v914 = vmax.f32 %v898, 0.0
        %v915 = vmax.f32 %v899, 0.0
        %v916 = vmax.f32 %v900, 0.0
        %v917 = vmax.f32 %v901, 0.0
        %v918 = vmax.f32 %v902, 0.0
        %v919 = vmax.f32 %v903, 0.0
        %v920 = vmax.f32 %v904, 0.0
        %v921 = vmax.f32 %v905, 0.0
        %v922 = vmax.f32 %v906, 0.0
        %v923 = vmax.f32 %v907, 0.0
        %v924 = vld [vmem:[#allocation9 + $0x1] sm:$0x1]
        %v925 = vlaneseq
        %v926 = vshrl.u32 %v925, 7
        %v927 = vsub.s32 0, %v926
        %v928 = vrot.slane %v924, %v927
        %v929 = vmul.f32 %v908, %v928
        %v930 = vmul.f32 %v909, %v928
        %v931 = vmul.f32 %v910, %v928
        %v932 = vmul.f32 %v911, %v928
        %v933 = vmul.f32 %v912, %v928
        %v934 = vmul.f32 %v913, %v928
        %v935 = vmul.f32 %v914, %v928
        %v936 = vmul.f32 %v915, %v928
        %v937 = vmul.f32 %v916, %v928
        %v938 = vmul.f32 %v917, %v928
        %v939 = vmul.f32 %v918, %v928
        %v940 = vmul.f32 %v919, %v928
        %v941 = vmul.f32 %v920, %v928
        %v942 = vmul.f32 %v921, %v928
        %v943 = vmul.f32 %v922, %v928
        %v944 = vmul.f32 %v923, %v928
        %v945 = vsel %vm603, %v929, 0.0
        %946 = vadd.xlane.f32.xlu0 %v945
        %v947 = vpop.xlane.xlu0 %946
        %v948 = vsel %vm603, %v930, 0.0
        %949 = vadd.xlane.f32.xlu0 %v948
        %v950 = vpop.xlane.xlu0 %949
        %v951 = vsel %vm603, %v931, 0.0
        %952 = vadd.xlane.f32.xlu0 %v951
        %v953 = vpop.xlane.xlu0 %952
        %v954 = vsel %vm603, %v932, 0.0
        %955 = vadd.xlane.f32.xlu0 %v954
        %v956 = vpop.xlane.xlu0 %955
        %v957 = vsel %vm603, %v933, 0.0
        %958 = vadd.xlane.f32.xlu0 %v957
        %v959 = vpop.xlane.xlu0 %958
        %v960 = vsel %vm603, %v934, 0.0
        %961 = vadd.xlane.f32.xlu0 %v960
        %v962 = vpop.xlane.xlu0 %961
        %v963 = vsel %vm603, %v935, 0.0
        %964 = vadd.xlane.f32.xlu0 %v963
        %v965 = vpop.xlane.xlu0 %964
        %v966 = vsel %vm603, %v936, 0.0
        %967 = vadd.xlane.f32.xlu0 %v966
        %v968 = vpop.xlane.xlu0 %967
        %v969 = vsel %vm603, %v937, 0.0
        %970 = vadd.xlane.f32.xlu0 %v969
        %v971 = vpop.xlane.xlu0 %970
        %v972 = vsel %vm603, %v938, 0.0
        %973 = vadd.xlane.f32.xlu0 %v972
        %v974 = vpop.xlane.xlu0 %973
        %v975 = vsel %vm603, %v939, 0.0
        %976 = vadd.xlane.f32.xlu0 %v975
        %v977 = vpop.xlane.xlu0 %976
        %v978 = vsel %vm603, %v940, 0.0
        %979 = vadd.xlane.f32.xlu0 %v978
        %v980 = vpop.xlane.xlu0 %979
        %v981 = vsel %vm603, %v941, 0.0
        %982 = vadd.xlane.f32.xlu0 %v981
        %v983 = vpop.xlane.xlu0 %982
        %v984 = vsel %vm603, %v942, 0.0
        %985 = vadd.xlane.f32.xlu0 %v984
        %v986 = vpop.xlane.xlu0 %985
        %v987 = vsel %vm603, %v943, 0.0
        %988 = vadd.xlane.f32.xlu0 %v987
        %v989 = vpop.xlane.xlu0 %988
        %v990 = vsel %vm603, %v944, 0.0
        %991 = vadd.xlane.f32.xlu0 %v990
        %v992 = vpop.xlane.xlu0 %991
        %v993 = vld [vmem:[%s419] sm:$0xff]
        %v994 = vld [vmem:[%s419 + $0x8] sm:$0xff]
        %v997 = vlaneseq
        %v998 = vshrl.u32 %v997, 7
        %v999 = vsub.s32 0, %v998
        %v1000 = vrot.slane %v993, %v999
        %1002 = vbcast.lane.b32.xlu0 %v1000, 256
        %v1003 = vpop.permute.xlu0 %1002
        %v1004 = vlaneseq
        %v1005 = vshrl.u32 %v1004, 7
        %v1006 = vsub.s32 1, %v1005
        %v1007 = vrot.slane %v993, %v1006
        %1009 = vbcast.lane.b32.xlu0 %v1007, 256
        %v1010 = vpop.permute.xlu0 %1009
        %v1011 = vlaneseq
        %v1012 = vshrl.u32 %v1011, 7
        %v1013 = vsub.s32 2, %v1012
        %v1014 = vrot.slane %v993, %v1013
        %1016 = vbcast.lane.b32.xlu0 %v1014, 256
        %v1017 = vpop.permute.xlu0 %1016
        %v1018 = vlaneseq
        %v1019 = vshrl.u32 %v1018, 7
        %v1020 = vsub.s32 3, %v1019
        %v1021 = vrot.slane %v993, %v1020
        %1023 = vbcast.lane.b32.xlu0 %v1021, 256
        %v1024 = vpop.permute.xlu0 %1023
        %v1025 = vlaneseq
        %v1026 = vshrl.u32 %v1025, 7
        %v1027 = vsub.s32 4, %v1026
        %v1028 = vrot.slane %v993, %v1027
        %1030 = vbcast.lane.b32.xlu0 %v1028, 256
        %v1031 = vpop.permute.xlu0 %1030
        %v1032 = vlaneseq
        %v1033 = vshrl.u32 %v1032, 7
        %v1034 = vsub.s32 5, %v1033
        %v1035 = vrot.slane %v993, %v1034
        %1037 = vbcast.lane.b32.xlu0 %v1035, 256
        %v1038 = vpop.permute.xlu0 %1037
        %v1039 = vlaneseq
        %v1040 = vshrl.u32 %v1039, 7
        %v1041 = vsub.s32 6, %v1040
        %v1042 = vrot.slane %v993, %v1041
        %1044 = vbcast.lane.b32.xlu0 %v1042, 256
        %v1045 = vpop.permute.xlu0 %1044
        %v1046 = vlaneseq
        %v1047 = vshrl.u32 %v1046, 7
        %v1048 = vsub.s32 7, %v1047
        %v1049 = vrot.slane %v993, %v1048
        %1051 = vbcast.lane.b32.xlu0 %v1049, 256
        %v1052 = vpop.permute.xlu0 %1051
        %v1053 = vlaneseq
        %v1054 = vshrl.u32 %v1053, 7
        %v1055 = vsub.s32 0, %v1054
        %v1056 = vrot.slane %v994, %v1055
        %1058 = vbcast.lane.b32.xlu0 %v1056, 256
        %v1059 = vpop.permute.xlu0 %1058
        %v1060 = vlaneseq
        %v1061 = vshrl.u32 %v1060, 7
        %v1062 = vsub.s32 1, %v1061
        %v1063 = vrot.slane %v994, %v1062
        %1065 = vbcast.lane.b32.xlu0 %v1063, 256
        %v1066 = vpop.permute.xlu0 %1065
        %v1067 = vlaneseq
        %v1068 = vshrl.u32 %v1067, 7
        %v1069 = vsub.s32 2, %v1068
        %v1070 = vrot.slane %v994, %v1069
        %1072 = vbcast.lane.b32.xlu0 %v1070, 256
        %v1073 = vpop.permute.xlu0 %1072
        %v1074 = vlaneseq
        %v1075 = vshrl.u32 %v1074, 7
        %v1076 = vsub.s32 3, %v1075
        %v1077 = vrot.slane %v994, %v1076
        %1079 = vbcast.lane.b32.xlu0 %v1077, 256
        %v1080 = vpop.permute.xlu0 %1079
        %v1081 = vlaneseq
        %v1082 = vshrl.u32 %v1081, 7
        %v1083 = vsub.s32 4, %v1082
        %v1084 = vrot.slane %v994, %v1083
        %1086 = vbcast.lane.b32.xlu0 %v1084, 256
        %v1087 = vpop.permute.xlu0 %1086
        %v1088 = vlaneseq
        %v1089 = vshrl.u32 %v1088, 7
        %v1090 = vsub.s32 5, %v1089
        %v1091 = vrot.slane %v994, %v1090
        %1093 = vbcast.lane.b32.xlu0 %v1091, 256
        %v1094 = vpop.permute.xlu0 %1093
        %v1095 = vlaneseq
        %v1096 = vshrl.u32 %v1095, 7
        %v1097 = vsub.s32 6, %v1096
        %v1098 = vrot.slane %v994, %v1097
        %1100 = vbcast.lane.b32.xlu0 %v1098, 256
        %v1101 = vpop.permute.xlu0 %1100
        %v1102 = vlaneseq
        %v1103 = vshrl.u32 %v1102, 7
        %v1104 = vsub.s32 7, %v1103
        %v1105 = vrot.slane %v994, %v1104
        %1107 = vbcast.lane.b32.xlu0 %v1105, 256
        %v1108 = vpop.permute.xlu0 %1107
        %v1125 = vadd.f32 %v947, %v1003
        %v1126 = vadd.f32 %v950, %v1010
        %v1127 = vadd.f32 %v953, %v1017
        %v1128 = vadd.f32 %v956, %v1024
        %v1129 = vadd.f32 %v959, %v1031
        %v1130 = vadd.f32 %v962, %v1038
        %v1131 = vadd.f32 %v965, %v1045
        %v1132 = vadd.f32 %v968, %v1052
        %v1133 = vadd.f32 %v971, %v1059
        %v1134 = vadd.f32 %v974, %v1066
        %v1135 = vadd.f32 %v977, %v1073
        %v1136 = vadd.f32 %v980, %v1080
        %v1137 = vadd.f32 %v983, %v1087
        %v1138 = vadd.f32 %v986, %v1094
        %v1139 = vadd.f32 %v989, %v1101
        %v1140 = vadd.f32 %v992, %v1108
        %vm1141 = vcmp.ge.f32.partialorder %v1125, 0.0
        %vm1142 = vcmp.ge.f32.partialorder %v1126, 0.0
        %vm1143 = vcmp.ge.f32.partialorder %v1127, 0.0
        %vm1144 = vcmp.ge.f32.partialorder %v1128, 0.0
        %vm1145 = vcmp.ge.f32.partialorder %v1129, 0.0
        %vm1146 = vcmp.ge.f32.partialorder %v1130, 0.0
        %vm1147 = vcmp.ge.f32.partialorder %v1131, 0.0
        %vm1148 = vcmp.ge.f32.partialorder %v1132, 0.0
        %vm1149 = vcmp.ge.f32.partialorder %v1133, 0.0
        %vm1150 = vcmp.ge.f32.partialorder %v1134, 0.0
        %vm1151 = vcmp.ge.f32.partialorder %v1135, 0.0
        %vm1152 = vcmp.ge.f32.partialorder %v1136, 0.0
        %vm1153 = vcmp.ge.f32.partialorder %v1137, 0.0
        %vm1154 = vcmp.ge.f32.partialorder %v1138, 0.0
        %vm1155 = vcmp.ge.f32.partialorder %v1139, 0.0
        %vm1156 = vcmp.ge.f32.partialorder %v1140, 0.0
        %v1157 = vsel %vm1141, 1, 0
        %v1158 = vsel %vm1142, 1, 0
        %v1159 = vsel %vm1143, 1, 0
        %v1160 = vsel %vm1144, 1, 0
        %v1161 = vsel %vm1145, 1, 0
        %v1162 = vsel %vm1146, 1, 0
        %v1163 = vsel %vm1147, 1, 0
        %v1164 = vsel %vm1148, 1, 0
        %v1165 = vsel %vm1149, 1, 0
        %v1166 = vsel %vm1150, 1, 0
        %v1167 = vsel %vm1151, 1, 0
        %v1168 = vsel %vm1152, 1, 0
        %v1169 = vsel %vm1153, 1, 0
        %v1170 = vsel %vm1154, 1, 0
        %v1171 = vsel %vm1155, 1, 0
        %v1172 = vsel %vm1156, 1, 0
        %v1173 = vcvt.s32.f32 %v1157
        %v1174 = vcvt.s32.f32 %v1158
        %v1175 = vcvt.s32.f32 %v1159
        %v1176 = vcvt.s32.f32 %v1160
        %v1177 = vcvt.s32.f32 %v1161
        %v1178 = vcvt.s32.f32 %v1162
        %v1179 = vcvt.s32.f32 %v1163
        %v1180 = vcvt.s32.f32 %v1164
        %v1181 = vcvt.s32.f32 %v1165
        %v1182 = vcvt.s32.f32 %v1166
        %v1183 = vcvt.s32.f32 %v1167
        %v1184 = vcvt.s32.f32 %v1168
        %v1185 = vcvt.s32.f32 %v1169
        %v1186 = vcvt.s32.f32 %v1170
        %v1187 = vcvt.s32.f32 %v1171
        %v1188 = vcvt.s32.f32 %v1172
        %v1189 = vld [vmem:[#allocation6] sm:$0xff]
        %v1191 = vlaneseq
        %v1192 = vshrl.u32 %v1191, 7
        %v1193 = vsub.s32 0, %v1192
        %v1194 = vrot.slane %v1189, %v1193
        %1196 = vbcast.lane.b32.xlu0 %v1194, 256
        %v1197 = vpop.permute.xlu0 %1196
        %v1198 = vlaneseq
        %v1199 = vshrl.u32 %v1198, 7
        %v1200 = vsub.s32 1, %v1199
        %v1201 = vrot.slane %v1189, %v1200
        %1203 = vbcast.lane.b32.xlu0 %v1201, 256
        %v1204 = vpop.permute.xlu0 %1203
        %v1205 = vlaneseq
        %v1206 = vshrl.u32 %v1205, 7
        %v1207 = vsub.s32 2, %v1206
        %v1208 = vrot.slane %v1189, %v1207
        %1210 = vbcast.lane.b32.xlu0 %v1208, 256
        %v1211 = vpop.permute.xlu0 %1210
        %v1212 = vlaneseq
        %v1213 = vshrl.u32 %v1212, 7
        %v1214 = vsub.s32 3, %v1213
        %v1215 = vrot.slane %v1189, %v1214
        %1217 = vbcast.lane.b32.xlu0 %v1215, 256
        %v1218 = vpop.permute.xlu0 %1217
        %v1219 = vlaneseq
        %v1220 = vshrl.u32 %v1219, 7
        %v1221 = vsub.s32 4, %v1220
        %v1222 = vrot.slane %v1189, %v1221
        %1224 = vbcast.lane.b32.xlu0 %v1222, 256
        %v1225 = vpop.permute.xlu0 %1224
        %v1226 = vlaneseq
        %v1227 = vshrl.u32 %v1226, 7
        %v1228 = vsub.s32 5, %v1227
        %v1229 = vrot.slane %v1189, %v1228
        %1231 = vbcast.lane.b32.xlu0 %v1229, 256
        %v1232 = vpop.permute.xlu0 %1231
        %v1233 = vlaneseq
        %v1234 = vshrl.u32 %v1233, 7
        %v1235 = vsub.s32 6, %v1234
        %v1236 = vrot.slane %v1189, %v1235
        %1238 = vbcast.lane.b32.xlu0 %v1236, 256
        %v1239 = vpop.permute.xlu0 %1238
        %v1240 = vlaneseq
        %v1241 = vshrl.u32 %v1240, 7
        %v1242 = vsub.s32 7, %v1241
        %v1243 = vrot.slane %v1189, %v1242
        %1245 = vbcast.lane.b32.xlu0 %v1243, 256
        %v1246 = vpop.permute.xlu0 %1245
        %v1255 = vmul.f32 %v1173, %v1197
        %v1256 = vmul.f32 %v1174, %v1204
        %v1257 = vmul.f32 %v1175, %v1211
        %v1258 = vmul.f32 %v1176, %v1218
        %v1259 = vmul.f32 %v1177, %v1225
        %v1260 = vmul.f32 %v1178, %v1232
        %v1261 = vmul.f32 %v1179, %v1239
        %v1262 = vmul.f32 %v1180, %v1246
        %v1263 = vmul.f32 %v1181, %v1197
        %v1264 = vmul.f32 %v1182, %v1204
        %v1265 = vmul.f32 %v1183, %v1211
        %v1266 = vmul.f32 %v1184, %v1218
        %v1267 = vmul.f32 %v1185, %v1225
        %v1268 = vmul.f32 %v1186, %v1232
        %v1269 = vmul.f32 %v1187, %v1239
        %v1270 = vmul.f32 %v1188, %v1246
        %s1271 = scalar_lea.vmem [#allocation6], 8
        %v1272 = vld [vmem:[%s1271] sm:$0xff]
        %v1274 = vlaneseq
        %v1275 = vshrl.u32 %v1274, 7
        %v1276 = vsub.s32 0, %v1275
        %v1277 = vrot.slane %v1272, %v1276
        %1279 = vbcast.lane.b32.xlu0 %v1277, 256
        %v1280 = vpop.permute.xlu0 %1279
        %v1281 = vlaneseq
        %v1282 = vshrl.u32 %v1281, 7
        %v1283 = vsub.s32 1, %v1282
        %v1284 = vrot.slane %v1272, %v1283
        %1286 = vbcast.lane.b32.xlu0 %v1284, 256
        %v1287 = vpop.permute.xlu0 %1286
        %v1288 = vlaneseq
        %v1289 = vshrl.u32 %v1288, 7
        %v1290 = vsub.s32 2, %v1289
        %v1291 = vrot.slane %v1272, %v1290
        %1293 = vbcast.lane.b32.xlu0 %v1291, 256
        %v1294 = vpop.permute.xlu0 %1293
        %v1295 = vlaneseq
        %v1296 = vshrl.u32 %v1295, 7
        %v1297 = vsub.s32 3, %v1296
        %v1298 = vrot.slane %v1272, %v1297
        %1300 = vbcast.lane.b32.xlu0 %v1298, 256
        %v1301 = vpop.permute.xlu0 %1300
        %v1302 = vlaneseq
        %v1303 = vshrl.u32 %v1302, 7
        %v1304 = vsub.s32 4, %v1303
        %v1305 = vrot.slane %v1272, %v1304
        %1307 = vbcast.lane.b32.xlu0 %v1305, 256
        %v1308 = vpop.permute.xlu0 %1307
        %v1309 = vlaneseq
        %v1310 = vshrl.u32 %v1309, 7
        %v1311 = vsub.s32 5, %v1310
        %v1312 = vrot.slane %v1272, %v1311
        %1314 = vbcast.lane.b32.xlu0 %v1312, 256
        %v1315 = vpop.permute.xlu0 %1314
        %v1316 = vlaneseq
        %v1317 = vshrl.u32 %v1316, 7
        %v1318 = vsub.s32 6, %v1317
        %v1319 = vrot.slane %v1272, %v1318
        %1321 = vbcast.lane.b32.xlu0 %v1319, 256
        %v1322 = vpop.permute.xlu0 %1321
        %v1323 = vlaneseq
        %v1324 = vshrl.u32 %v1323, 7
        %v1325 = vsub.s32 7, %v1324
        %v1326 = vrot.slane %v1272, %v1325
        %1328 = vbcast.lane.b32.xlu0 %v1326, 256
        %v1329 = vpop.permute.xlu0 %1328
        %v1338 = vadd.f32 %v1255, %v1280
        %v1339 = vadd.f32 %v1256, %v1287
        %v1340 = vadd.f32 %v1257, %v1294
        %v1341 = vadd.f32 %v1258, %v1301
        %v1342 = vadd.f32 %v1259, %v1308
        %v1343 = vadd.f32 %v1260, %v1315
        %v1344 = vadd.f32 %v1261, %v1322
        %v1345 = vadd.f32 %v1262, %v1329
        %v1346 = vadd.f32 %v1263, %v1280
        %v1347 = vadd.f32 %v1264, %v1287
        %v1348 = vadd.f32 %v1265, %v1294
        %v1349 = vadd.f32 %v1266, %v1301
        %v1350 = vadd.f32 %v1267, %v1308
        %v1351 = vadd.f32 %v1268, %v1315
        %v1352 = vadd.f32 %v1269, %v1322
        %v1353 = vadd.f32 %v1270, %v1329
        %1370 = vset.pattern.permute.xlu0 0
        %1371 = vperm.xlu0 %1370, %v1338
        %v1372 = vpop.permute.xlu0 %1371
        %1373 = vset.pattern.permute.xlu0 0
        %1374 = vperm.xlu0 %1373, %v1339
        %v1375 = vpop.permute.xlu0 %1374
        %1376 = vset.pattern.permute.xlu0 0
        %1377 = vperm.xlu0 %1376, %v1340
        %v1378 = vpop.permute.xlu0 %1377
        %1379 = vset.pattern.permute.xlu0 0
        %1380 = vperm.xlu0 %1379, %v1341
        %v1381 = vpop.permute.xlu0 %1380
        %1382 = vset.pattern.permute.xlu0 0
        %1383 = vperm.xlu0 %1382, %v1342
        %v1384 = vpop.permute.xlu0 %1383
        %1385 = vset.pattern.permute.xlu0 0
        %1386 = vperm.xlu0 %1385, %v1343
        %v1387 = vpop.permute.xlu0 %1386
        %1388 = vset.pattern.permute.xlu0 0
        %1389 = vperm.xlu0 %1388, %v1344
        %v1390 = vpop.permute.xlu0 %1389
        %1391 = vset.pattern.permute.xlu0 0
        %1392 = vperm.xlu0 %1391, %v1345
        %v1393 = vpop.permute.xlu0 %1392
        %1394 = vset.pattern.permute.xlu0 0
        %1395 = vperm.xlu0 %1394, %v1346
        %v1396 = vpop.permute.xlu0 %1395
        %1397 = vset.pattern.permute.xlu0 0
        %1398 = vperm.xlu0 %1397, %v1347
        %v1399 = vpop.permute.xlu0 %1398
        %1400 = vset.pattern.permute.xlu0 0
        %1401 = vperm.xlu0 %1400, %v1348
        %v1402 = vpop.permute.xlu0 %1401
        %1403 = vset.pattern.permute.xlu0 0
        %1404 = vperm.xlu0 %1403, %v1349
        %v1405 = vpop.permute.xlu0 %1404
        %1406 = vset.pattern.permute.xlu0 0
        %1407 = vperm.xlu0 %1406, %v1350
        %v1408 = vpop.permute.xlu0 %1407
        %1409 = vset.pattern.permute.xlu0 0
        %1410 = vperm.xlu0 %1409, %v1351
        %v1411 = vpop.permute.xlu0 %1410
        %1412 = vset.pattern.permute.xlu0 0
        %1413 = vperm.xlu0 %1412, %v1352
        %v1414 = vpop.permute.xlu0 %1413
        %1415 = vset.pattern.permute.xlu0 0
        %1416 = vperm.xlu0 %1415, %v1353
        %v1417 = vpop.permute.xlu0 %1416
        %v1418 = vlaneseq
        %v1419 = vand.u32 %v1418, 127
        %v1420 = vlaneseq
        %v1421 = vshrl.u32 %v1420, 7
        %v1422 = vsub.s32 %v1419, %v1421
        %v1423 = vrot.slane %v1372, %v1422
        %v1424 = vlaneseq
        %v1425 = vshrl.u32 %v1424, 7
        %v1426 = vsub.s32 %v1419, %v1425
        %v1427 = vrot.slane %v1375, %v1426
        %v1428 = vlaneseq
        %v1429 = vshrl.u32 %v1428, 7
        %v1430 = vsub.s32 %v1419, %v1429
        %v1431 = vrot.slane %v1378, %v1430
        %v1432 = vlaneseq
        %v1433 = vshrl.u32 %v1432, 7
        %v1434 = vsub.s32 %v1419, %v1433
        %v1435 = vrot.slane %v1381, %v1434
        %v1436 = vlaneseq
        %v1437 = vshrl.u32 %v1436, 7
        %v1438 = vsub.s32 %v1419, %v1437
        %v1439 = vrot.slane %v1384, %v1438
        %v1440 = vlaneseq
        %v1441 = vshrl.u32 %v1440, 7
        %v1442 = vsub.s32 %v1419, %v1441
        %v1443 = vrot.slane %v1387, %v1442
        %v1444 = vlaneseq
        %v1445 = vshrl.u32 %v1444, 7
        %v1446 = vsub.s32 %v1419, %v1445
        %v1447 = vrot.slane %v1390, %v1446
        %v1448 = vlaneseq
        %v1449 = vshrl.u32 %v1448, 7
        %v1450 = vsub.s32 %v1419, %v1449
        %v1451 = vrot.slane %v1393, %v1450
        %v1452 = vlaneseq
        %v1453 = vshrl.u32 %v1452, 7
        %v1454 = vsub.s32 %v1419, %v1453
        %v1455 = vrot.slane %v1396, %v1454
        %v1456 = vlaneseq
        %v1457 = vshrl.u32 %v1456, 7
        %v1458 = vsub.s32 %v1419, %v1457
        %v1459 = vrot.slane %v1399, %v1458
        %v1460 = vlaneseq
        %v1461 = vshrl.u32 %v1460, 7
        %v1462 = vsub.s32 %v1419, %v1461
        %v1463 = vrot.slane %v1402, %v1462
        %v1464 = vlaneseq
        %v1465 = vshrl.u32 %v1464, 7
        %v1466 = vsub.s32 %v1419, %v1465
        %v1467 = vrot.slane %v1405, %v1466
        %v1468 = vlaneseq
        %v1469 = vshrl.u32 %v1468, 7
        %v1470 = vsub.s32 %v1419, %v1469
        %v1471 = vrot.slane %v1408, %v1470
        %v1472 = vlaneseq
        %v1473 = vshrl.u32 %v1472, 7
        %v1474 = vsub.s32 %v1419, %v1473
        %v1475 = vrot.slane %v1411, %v1474
        %v1476 = vlaneseq
        %v1477 = vshrl.u32 %v1476, 7
        %v1478 = vsub.s32 %v1419, %v1477
        %v1479 = vrot.slane %v1414, %v1478
        %v1480 = vlaneseq
        %v1481 = vshrl.u32 %v1480, 7
        %v1482 = vsub.s32 %v1419, %v1481
        %v1483 = vrot.slane %v1417, %v1482
        %vm1484 = vcmask 1041409
        %v1485 = vsel %vm1484, %v1427, %v1423
        %vm1486 = vcmask 1042434
        %v1487 = vsel %vm1486, %v1431, %v1485
        %vm1488 = vcmask 1043459
        %v1489 = vsel %vm1488, %v1435, %v1487
        %vm1490 = vcmask 1044484
        %v1491 = vsel %vm1490, %v1439, %v1489
        %vm1492 = vcmask 1045509
        %v1493 = vsel %vm1492, %v1443, %v1491
        %vm1494 = vcmask 1046534
        %v1495 = vsel %vm1494, %v1447, %v1493
        %vm1496 = vcmask 1047559
        %v1497 = vsel %vm1496, %v1451, %v1495
        %v1498 = vsel %vm1484, %v1459, %v1455
        %v1499 = vsel %vm1486, %v1463, %v1498
        %v1500 = vsel %vm1488, %v1467, %v1499
        %v1501 = vsel %vm1490, %v1471, %v1500
        %v1502 = vsel %vm1492, %v1475, %v1501
        %v1503 = vsel %vm1494, %v1479, %v1502
        %v1504 = vsel %vm1496, %v1483, %v1503
        %v1507 = vsel %vm474, %v1497, 0.0
        %1508 = vadd.xlane.f32.xlu0 %v1507
        %v1509 = vpop.xlane.xlu0 %1508
        %v1510 = vsel %vm474, %v1504, 0.0
        %1511 = vadd.xlane.f32.xlu0 %v1510
        %v1512 = vpop.xlane.xlu0 %1511
        %v1513 = vmax.f32 %v1509, 1.0
        %v1514 = vmax.f32 %v1512, 1.0
        %v1517 = vlaneseq
        %v1518 = vshrl.u32 %v1517, 7
        %v1519 = vsub.s32 0, %v1518
        %v1520 = vrot.slane %v1513, %v1519
        %v1521 = vlaneseq
        %v1522 = vshrl.u32 %v1521, 7
        %v1523 = vsub.s32 1, %v1522
        %v1524 = vrot.slane %v1513, %v1523
        %v1525 = vlaneseq
        %v1526 = vshrl.u32 %v1525, 7
        %v1527 = vsub.s32 2, %v1526
        %v1528 = vrot.slane %v1513, %v1527
        %v1529 = vlaneseq
        %v1530 = vshrl.u32 %v1529, 7
        %v1531 = vsub.s32 3, %v1530
        %v1532 = vrot.slane %v1513, %v1531
        %v1533 = vlaneseq
        %v1534 = vshrl.u32 %v1533, 7
        %v1535 = vsub.s32 4, %v1534
        %v1536 = vrot.slane %v1513, %v1535
        %v1537 = vlaneseq
        %v1538 = vshrl.u32 %v1537, 7
        %v1539 = vsub.s32 5, %v1538
        %v1540 = vrot.slane %v1513, %v1539
        %v1541 = vlaneseq
        %v1542 = vshrl.u32 %v1541, 7
        %v1543 = vsub.s32 6, %v1542
        %v1544 = vrot.slane %v1513, %v1543
        %v1545 = vlaneseq
        %v1546 = vshrl.u32 %v1545, 7
        %v1547 = vsub.s32 7, %v1546
        %v1548 = vrot.slane %v1513, %v1547
        %v1549 = vlaneseq
        %v1550 = vshrl.u32 %v1549, 7
        %v1551 = vsub.s32 0, %v1550
        %v1552 = vrot.slane %v1514, %v1551
        %v1553 = vlaneseq
        %v1554 = vshrl.u32 %v1553, 7
        %v1555 = vsub.s32 1, %v1554
        %v1556 = vrot.slane %v1514, %v1555
        %v1557 = vlaneseq
        %v1558 = vshrl.u32 %v1557, 7
        %v1559 = vsub.s32 2, %v1558
        %v1560 = vrot.slane %v1514, %v1559
        %v1561 = vlaneseq
        %v1562 = vshrl.u32 %v1561, 7
        %v1563 = vsub.s32 3, %v1562
        %v1564 = vrot.slane %v1514, %v1563
        %v1565 = vlaneseq
        %v1566 = vshrl.u32 %v1565, 7
        %v1567 = vsub.s32 4, %v1566
        %v1568 = vrot.slane %v1514, %v1567
        %v1569 = vlaneseq
        %v1570 = vshrl.u32 %v1569, 7
        %v1571 = vsub.s32 5, %v1570
        %v1572 = vrot.slane %v1514, %v1571
        %v1573 = vlaneseq
        %v1574 = vshrl.u32 %v1573, 7
        %v1575 = vsub.s32 6, %v1574
        %v1576 = vrot.slane %v1514, %v1575
        %v1577 = vlaneseq
        %v1578 = vshrl.u32 %v1577, 7
        %v1579 = vsub.s32 7, %v1578
        %v1580 = vrot.slane %v1514, %v1579
        %v1597 = vrcp.pop %v1520
        %v1598 = vmul.f32 %v1338, %v1597
        %v1599 = vrcp.pop %v1524
        %v1600 = vmul.f32 %v1339, %v1599
        %v1601 = vrcp.pop %v1528
        %v1602 = vmul.f32 %v1340, %v1601
        %v1603 = vrcp.pop %v1532
        %v1604 = vmul.f32 %v1341, %v1603
        %v1605 = vrcp.pop %v1536
        %v1606 = vmul.f32 %v1342, %v1605
        %v1607 = vrcp.pop %v1540
        %v1608 = vmul.f32 %v1343, %v1607
        %v1609 = vrcp.pop %v1544
        %v1610 = vmul.f32 %v1344, %v1609
        %v1611 = vrcp.pop %v1548
        %v1612 = vmul.f32 %v1345, %v1611
        %v1613 = vrcp.pop %v1552
        %v1614 = vmul.f32 %v1346, %v1613
        %v1615 = vrcp.pop %v1556
        %v1616 = vmul.f32 %v1347, %v1615
        %v1617 = vrcp.pop %v1560
        %v1618 = vmul.f32 %v1348, %v1617
        %v1619 = vrcp.pop %v1564
        %v1620 = vmul.f32 %v1349, %v1619
        %v1621 = vrcp.pop %v1568
        %v1622 = vmul.f32 %v1350, %v1621
        %v1623 = vrcp.pop %v1572
        %v1624 = vmul.f32 %v1351, %v1623
        %v1625 = vrcp.pop %v1576
        %v1626 = vmul.f32 %v1352, %v1625
        %v1627 = vrcp.pop %v1580
        %v1628 = vmul.f32 %v1353, %v1627
        %1637 = vset.pattern.permute.xlu0 0
        %1638 = vperm.xlu0 %1637, %v1598
        %v1639 = vpop.permute.xlu0 %1638
        %1640 = vset.pattern.permute.xlu0 0
        %1641 = vperm.xlu0 %1640, %v1600
        %v1642 = vpop.permute.xlu0 %1641
        %1643 = vset.pattern.permute.xlu0 0
        %1644 = vperm.xlu0 %1643, %v1602
        %v1645 = vpop.permute.xlu0 %1644
        %1646 = vset.pattern.permute.xlu0 0
        %1647 = vperm.xlu0 %1646, %v1604
        %v1648 = vpop.permute.xlu0 %1647
        %1649 = vset.pattern.permute.xlu0 0
        %1650 = vperm.xlu0 %1649, %v1606
        %v1651 = vpop.permute.xlu0 %1650
        %1652 = vset.pattern.permute.xlu0 0
        %1653 = vperm.xlu0 %1652, %v1608
        %v1654 = vpop.permute.xlu0 %1653
        %1655 = vset.pattern.permute.xlu0 0
        %1656 = vperm.xlu0 %1655, %v1610
        %v1657 = vpop.permute.xlu0 %1656
        %1658 = vset.pattern.permute.xlu0 0
        %1659 = vperm.xlu0 %1658, %v1612
        %v1660 = vpop.permute.xlu0 %1659
        %v1661 = vlaneseq
        %v1662 = vshrl.u32 %v1661, 7
        %v1663 = vsub.s32 %v1419, %v1662
        %v1664 = vrot.slane %v1639, %v1663
        %v1665 = vlaneseq
        %v1666 = vshrl.u32 %v1665, 7
        %v1667 = vsub.s32 %v1419, %v1666
        %v1668 = vrot.slane %v1642, %v1667
        %v1669 = vlaneseq
        %v1670 = vshrl.u32 %v1669, 7
        %v1671 = vsub.s32 %v1419, %v1670
        %v1672 = vrot.slane %v1645, %v1671
        %v1673 = vlaneseq
        %v1674 = vshrl.u32 %v1673, 7
        %v1675 = vsub.s32 %v1419, %v1674
        %v1676 = vrot.slane %v1648, %v1675
        %v1677 = vlaneseq
        %v1678 = vshrl.u32 %v1677, 7
        %v1679 = vsub.s32 %v1419, %v1678
        %v1680 = vrot.slane %v1651, %v1679
        %v1681 = vlaneseq
        %v1682 = vshrl.u32 %v1681, 7
        %v1683 = vsub.s32 %v1419, %v1682
        %v1684 = vrot.slane %v1654, %v1683
        %v1685 = vlaneseq
        %v1686 = vshrl.u32 %v1685, 7
        %v1687 = vsub.s32 %v1419, %v1686
        %v1688 = vrot.slane %v1657, %v1687
        %v1689 = vlaneseq
        %v1690 = vshrl.u32 %v1689, 7
        %v1691 = vsub.s32 %v1419, %v1690
        %v1692 = vrot.slane %v1660, %v1691
        %v1693 = vsel %vm1484, %v1668, %v1664
        %v1694 = vsel %vm1486, %v1672, %v1693
        %v1695 = vsel %vm1488, %v1676, %v1694
        %v1696 = vsel %vm1490, %v1680, %v1695
        %v1697 = vsel %vm1492, %v1684, %v1696
        %v1698 = vsel %vm1494, %v1688, %v1697
        %v1699 = vsel %vm1496, %v1692, %v1698
        %v1700 = vsel %vm474, %v1699, 0
        %1702 = vmatprep.subr.mxu0 0.0
        %1703 = vmatpush1.msra.mxu0 %v597
        %1704 = vmatprep.subr.mxu0 0.0
        %1705 = vmatpush1.msra.mxu0 0.0
        %1706 = vmatprep.subr.mxu0 0.0
        %1707 = vmatpush1.msra.mxu0 0.0
        %1708 = vmatprep.subr.mxu0 0.0
        %1709 = vmatpush1.msra.mxu0 0.0
        %1710 = vmatprep.subr.mxu0 0.0
        %1711 = vmatpush1.msra.mxu0 0.0
        %1712 = vmatprep.subr.mxu0 0.0
        %1713 = vmatpush1.msra.mxu0 0.0
        %1714 = vmatprep.subr.mxu0 0.0
        %1715 = vmatpush1.msra.mxu0 0.0
        %1716 = vmatprep.subr.mxu0 0.0
        %1717 = vmatpush1.msra.mxu0 0.0
        %1718 = vmatprep.subr.mxu0 0.0
        %1719 = vmatpush1.msra.mxu0 0.0
        %1720 = vmatprep.subr.mxu0 0.0
        %1721 = vmatpush1.msra.mxu0 0.0
        %1722 = vmatprep.subr.mxu0 0.0
        %1723 = vmatpush1.msra.mxu0 0.0
        %1724 = vmatprep.subr.mxu0 0.0
        %1725 = vmatpush1.msra.mxu0 0.0
        %1726 = vmatprep.subr.mxu0 0.0
        %1727 = vmatpush1.msra.mxu0 0.0
        %1728 = vmatprep.subr.mxu0 0.0
        %1729 = vmatpush1.msra.mxu0 0.0
        %1730 = vmatprep.subr.mxu0 0.0
        %1731 = vmatpush1.msra.mxu0 0.0
        %1732 = vmatprep.subr.mxu0 0.0
        %1733 = vmatpush1.msra.mxu0 0.0
        %1734 = vmatprep.subr.mxu0 0.0
        %1735 = vmatpush1.msra.mxu0 0.0
        %1736 = vmatprep.subr.mxu0 0.0
        %1737 = vmatpush1.msra.mxu0 0.0
        %1738 = vmatprep.subr.mxu0 0.0
        %1739 = vmatpush1.msra.mxu0 0.0
        %1740 = vmatprep.subr.mxu0 0.0
        %1741 = vmatpush1.msra.mxu0 0.0
        %1742 = vmatprep.subr.mxu0 0.0
        %1743 = vmatpush1.msra.mxu0 0.0
        %1744 = vmatprep.subr.mxu0 0.0
        %1745 = vmatpush1.msra.mxu0 0.0
        %1746 = vmatprep.subr.mxu0 0.0
        %1747 = vmatpush1.msra.mxu0 0.0
        %1748 = vmatprep.subr.mxu0 0.0
        %1749 = vmatpush1.msra.mxu0 0.0
        %1750 = vmatprep.subr.mxu0 0.0
        %1751 = vmatpush1.msra.mxu0 0.0
        %1752 = vmatprep.subr.mxu0 0.0
        %1753 = vmatpush1.msra.mxu0 0.0
        %1754 = vmatprep.subr.mxu0 0.0
        %1755 = vmatpush1.msra.mxu0 0.0
        %1756 = vmatprep.subr.mxu0 0.0
        %1757 = vmatpush1.msra.mxu0 0.0
        %1758 = vmatprep.subr.mxu0 0.0
        %1759 = vmatpush1.msra.mxu0 0.0
        %1760 = vmatprep.subr.mxu0 0.0
        %1761 = vmatpush1.msra.mxu0 0.0
        %1762 = vmatprep.subr.mxu0 0.0
        %1763 = vmatpush1.msra.mxu0 0.0
        %1764 = vmatprep.subr.mxu0 0.0
        %1765 = vmatpush1.msra.mxu0 0.0
        %1766 = vmatprep.mubr.f32.mxu0 0.0
        %1767 = vmatmul.mubr.f32.gmra.mrb[0].mxu0 %v1700
        %v1768 = vpop.f32.mrb[0].mxu0
        %v1769 = vadd.f32 0.0, %v1768
        %v1770 = vpop.f32.mrb[0].mxu0
        %1771 = vdwg.mxu0
        %1780 = vset.pattern.permute.xlu0 0
        %1781 = vperm.xlu0 %1780, %v1614
        %v1782 = vpop.permute.xlu0 %1781
        %1783 = vset.pattern.permute.xlu0 0
        %1784 = vperm.xlu0 %1783, %v1616
        %v1785 = vpop.permute.xlu0 %1784
        %1786 = vset.pattern.permute.xlu0 0
        %1787 = vperm.xlu0 %1786, %v1618
        %v1788 = vpop.permute.xlu0 %1787
        %1789 = vset.pattern.permute.xlu0 0
        %1790 = vperm.xlu0 %1789, %v1620
        %v1791 = vpop.permute.xlu0 %1790
        %1792 = vset.pattern.permute.xlu0 0
        %1793 = vperm.xlu0 %1792, %v1622
        %v1794 = vpop.permute.xlu0 %1793
        %1795 = vset.pattern.permute.xlu0 0
        %1796 = vperm.xlu0 %1795, %v1624
        %v1797 = vpop.permute.xlu0 %1796
        %1798 = vset.pattern.permute.xlu0 0
        %1799 = vperm.xlu0 %1798, %v1626
        %v1800 = vpop.permute.xlu0 %1799
        %1801 = vset.pattern.permute.xlu0 0
        %1802 = vperm.xlu0 %1801, %v1628
        %v1803 = vpop.permute.xlu0 %1802
        %v1804 = vlaneseq
        %v1805 = vshrl.u32 %v1804, 7
        %v1806 = vsub.s32 %v1419, %v1805
        %v1807 = vrot.slane %v1782, %v1806
        %v1808 = vlaneseq
        %v1809 = vshrl.u32 %v1808, 7
        %v1810 = vsub.s32 %v1419, %v1809
        %v1811 = vrot.slane %v1785, %v1810
        %v1812 = vlaneseq
        %v1813 = vshrl.u32 %v1812, 7
        %v1814 = vsub.s32 %v1419, %v1813
        %v1815 = vrot.slane %v1788, %v1814
        %v1816 = vlaneseq
        %v1817 = vshrl.u32 %v1816, 7
        %v1818 = vsub.s32 %v1419, %v1817
        %v1819 = vrot.slane %v1791, %v1818
        %v1820 = vlaneseq
        %v1821 = vshrl.u32 %v1820, 7
        %v1822 = vsub.s32 %v1419, %v1821
        %v1823 = vrot.slane %v1794, %v1822
        %v1824 = vlaneseq
        %v1825 = vshrl.u32 %v1824, 7
        %v1826 = vsub.s32 %v1419, %v1825
        %v1827 = vrot.slane %v1797, %v1826
        %v1828 = vlaneseq
        %v1829 = vshrl.u32 %v1828, 7
        %v1830 = vsub.s32 %v1419, %v1829
        %v1831 = vrot.slane %v1800, %v1830
        %v1832 = vlaneseq
        %v1833 = vshrl.u32 %v1832, 7
        %v1834 = vsub.s32 %v1419, %v1833
        %v1835 = vrot.slane %v1803, %v1834
        %v1836 = vsel %vm1484, %v1811, %v1807
        %v1837 = vsel %vm1486, %v1815, %v1836
        %v1838 = vsel %vm1488, %v1819, %v1837
        %v1839 = vsel %vm1490, %v1823, %v1838
        %v1840 = vsel %vm1492, %v1827, %v1839
        %v1841 = vsel %vm1494, %v1831, %v1840
        %v1842 = vsel %vm1496, %v1835, %v1841
        %v1843 = vsel %vm474, %v1842, 0
        %1845 = vmatprep.subr.mxu0 0.0
        %1846 = vmatpush1.msra.mxu0 %v598
        %1847 = vmatprep.subr.mxu0 0.0
        %1848 = vmatpush1.msra.mxu0 0.0
        %1849 = vmatprep.subr.mxu0 0.0
        %1850 = vmatpush1.msra.mxu0 0.0
        %1851 = vmatprep.subr.mxu0 0.0
        %1852 = vmatpush1.msra.mxu0 0.0
        %1853 = vmatprep.subr.mxu0 0.0
        %1854 = vmatpush1.msra.mxu0 0.0
        %1855 = vmatprep.subr.mxu0 0.0
        %1856 = vmatpush1.msra.mxu0 0.0
        %1857 = vmatprep.subr.mxu0 0.0
        %1858 = vmatpush1.msra.mxu0 0.0
        %1859 = vmatprep.subr.mxu0 0.0
        %1860 = vmatpush1.msra.mxu0 0.0
        %1861 = vmatprep.subr.mxu0 0.0
        %1862 = vmatpush1.msra.mxu0 0.0
        %1863 = vmatprep.subr.mxu0 0.0
        %1864 = vmatpush1.msra.mxu0 0.0
        %1865 = vmatprep.subr.mxu0 0.0
        %1866 = vmatpush1.msra.mxu0 0.0
        %1867 = vmatprep.subr.mxu0 0.0
        %1868 = vmatpush1.msra.mxu0 0.0
        %1869 = vmatprep.subr.mxu0 0.0
        %1870 = vmatpush1.msra.mxu0 0.0
        %1871 = vmatprep.subr.mxu0 0.0
        %1872 = vmatpush1.msra.mxu0 0.0
        %1873 = vmatprep.subr.mxu0 0.0
        %1874 = vmatpush1.msra.mxu0 0.0
        %1875 = vmatprep.subr.mxu0 0.0
        %1876 = vmatpush1.msra.mxu0 0.0
        %1877 = vmatprep.subr.mxu0 0.0
        %1878 = vmatpush1.msra.mxu0 0.0
        %1879 = vmatprep.subr.mxu0 0.0
        %1880 = vmatpush1.msra.mxu0 0.0
        %1881 = vmatprep.subr.mxu0 0.0
        %1882 = vmatpush1.msra.mxu0 0.0
        %1883 = vmatprep.subr.mxu0 0.0
        %1884 = vmatpush1.msra.mxu0 0.0
        %1885 = vmatprep.subr.mxu0 0.0
        %1886 = vmatpush1.msra.mxu0 0.0
        %1887 = vmatprep.subr.mxu0 0.0
        %1888 = vmatpush1.msra.mxu0 0.0
        %1889 = vmatprep.subr.mxu0 0.0
        %1890 = vmatpush1.msra.mxu0 0.0
        %1891 = vmatprep.subr.mxu0 0.0
        %1892 = vmatpush1.msra.mxu0 0.0
        %1893 = vmatprep.subr.mxu0 0.0
        %1894 = vmatpush1.msra.mxu0 0.0
        %1895 = vmatprep.subr.mxu0 0.0
        %1896 = vmatpush1.msra.mxu0 0.0
        %1897 = vmatprep.subr.mxu0 0.0
        %1898 = vmatpush1.msra.mxu0 0.0
        %1899 = vmatprep.subr.mxu0 0.0
        %1900 = vmatpush1.msra.mxu0 0.0
        %1901 = vmatprep.subr.mxu0 0.0
        %1902 = vmatpush1.msra.mxu0 0.0
        %1903 = vmatprep.subr.mxu0 0.0
        %1904 = vmatpush1.msra.mxu0 0.0
        %1905 = vmatprep.subr.mxu0 0.0
        %1906 = vmatpush1.msra.mxu0 0.0
        %1907 = vmatprep.subr.mxu0 0.0
        %1908 = vmatpush1.msra.mxu0 0.0
        %1909 = vmatprep.mubr.f32.mxu0 0.0
        %1910 = vmatmul.mubr.f32.gmra.mrb[0].mxu0 %v1843
        %v1911 = vpop.f32.mrb[0].mxu0
        %v1912 = vadd.f32 0.0, %v1911
        %v1913 = vpop.f32.mrb[0].mxu0
        %1914 = vdwg.mxu0
        %1915 = vrot.lane.b32.xlu0 %v597, 32
        %v1916 = vpop.permute.xlu0 %1915
        %1917 = vrot.lane.b32.xlu0 %v598, 32
        %v1918 = vpop.permute.xlu0 %1917
        %v1921 = vsel %vm603, %v1769, %v1916
        %v1922 = vsel %vm603, %v1912, %v1918
        %v1923 = vld [vmem:[#allocation7] sm:$0xff]
        %v1924 = vld [vmem:[#allocation7 + $0x8] sm:$0xff]
        %v1925 = vld [vmem:[#allocation7 + $0x10] sm:$0xff]
        %v1926 = vld [vmem:[#allocation7 + $0x18] sm:$0xff]
        %v1927 = vld [vmem:[#allocation7 + $0x20] sm:$0xff]
        %v1928 = vld [vmem:[#allocation7 + $0x28] sm:$0xff]
        %v1929 = vld [vmem:[#allocation7 + $0x30] sm:$0xff]
        %v1930 = vld [vmem:[#allocation7 + $0x38] sm:$0xff]
        %vm1931 = vcmask 523264
        %v1933 = vsel %vm1931, %v1921, 0
        %v1936 = vsel %vm1931, %v1922, 0
        %1938 = vmatprep.subr.mxu0 0.0
        %1939 = vmatpush1.msra.mxu0 %v1923
        %1940 = vmatprep.subr.mxu0 0.0
        %1941 = vmatpush1.msra.mxu0 %v1924
        %1942 = vmatprep.subr.mxu0 0.0
        %1943 = vmatpush1.msra.mxu0 %v1925
        %1944 = vmatprep.subr.mxu0 0.0
        %1945 = vmatpush1.msra.mxu0 %v1926
        %1946 = vmatprep.subr.mxu0 0.0
        %1947 = vmatpush1.msra.mxu0 %v1927
        %1948 = vmatprep.subr.mxu0 0.0
        %1949 = vmatpush1.msra.mxu0 %v1928
        %1950 = vmatprep.subr.mxu0 0.0
        %1951 = vmatpush1.msra.mxu0 %v1929
        %1952 = vmatprep.subr.mxu0 0.0
        %1953 = vmatpush1.msra.mxu0 %v1930
        %1954 = vmatprep.subr.mxu0 0.0
        %1955 = vmatpush1.msra.mxu0 0.0
        %1956 = vmatprep.subr.mxu0 0.0
        %1957 = vmatpush1.msra.mxu0 0.0
        %1958 = vmatprep.subr.mxu0 0.0
        %1959 = vmatpush1.msra.mxu0 0.0
        %1960 = vmatprep.subr.mxu0 0.0
        %1961 = vmatpush1.msra.mxu0 0.0
        %1962 = vmatprep.subr.mxu0 0.0
        %1963 = vmatpush1.msra.mxu0 0.0
        %1964 = vmatprep.subr.mxu0 0.0
        %1965 = vmatpush1.msra.mxu0 0.0
        %1966 = vmatprep.subr.mxu0 0.0
        %1967 = vmatpush1.msra.mxu0 0.0
        %1968 = vmatprep.subr.mxu0 0.0
        %1969 = vmatpush1.msra.mxu0 0.0
        %1970 = vmatprep.subr.mxu0 0.0
        %1971 = vmatpush1.msra.mxu0 0.0
        %1972 = vmatprep.subr.mxu0 0.0
        %1973 = vmatpush1.msra.mxu0 0.0
        %1974 = vmatprep.subr.mxu0 0.0
        %1975 = vmatpush1.msra.mxu0 0.0
        %1976 = vmatprep.subr.mxu0 0.0
        %1977 = vmatpush1.msra.mxu0 0.0
        %1978 = vmatprep.subr.mxu0 0.0
        %1979 = vmatpush1.msra.mxu0 0.0
        %1980 = vmatprep.subr.mxu0 0.0
        %1981 = vmatpush1.msra.mxu0 0.0
        %1982 = vmatprep.subr.mxu0 0.0
        %1983 = vmatpush1.msra.mxu0 0.0
        %1984 = vmatprep.subr.mxu0 0.0
        %1985 = vmatpush1.msra.mxu0 0.0
        %1986 = vmatprep.subr.mxu0 0.0
        %1987 = vmatpush1.msra.mxu0 0.0
        %1988 = vmatprep.subr.mxu0 0.0
        %1989 = vmatpush1.msra.mxu0 0.0
        %1990 = vmatprep.subr.mxu0 0.0
        %1991 = vmatpush1.msra.mxu0 0.0
        %1992 = vmatprep.subr.mxu0 0.0
        %1993 = vmatpush1.msra.mxu0 0.0
        %1994 = vmatprep.subr.mxu0 0.0
        %1995 = vmatpush1.msra.mxu0 0.0
        %1996 = vmatprep.subr.mxu0 0.0
        %1997 = vmatpush1.msra.mxu0 0.0
        %1998 = vmatprep.subr.mxu0 0.0
        %1999 = vmatpush1.msra.mxu0 0.0
        %2000 = vmatprep.subr.mxu0 0.0
        %2001 = vmatpush1.msra.mxu0 0.0
        %2002 = vmatprep.mubr.f32.mxu0 0.0
        %2003 = vmatmul.mubr.f32.gmra.mrb[0].mxu0 %v1933
        %v2004 = vpop.f32.mrb[0].mxu0
        %v2005 = vadd.f32 0.0, %v2004
        %v2006 = vpop.f32.mrb[0].mxu0
        %2007 = vmatprep.mubr.f32.mxu0 0.0
        %2008 = vmatmul.mubr.f32.gmra.mrb[0].mxu0 %v1936
        %v2009 = vpop.f32.mrb[0].mxu0
        %v2010 = vadd.f32 0.0, %v2009
        %v2011 = vpop.f32.mrb[0].mxu0
        %2012 = vdwg.mxu0
        %v2013 = vsel %vm603, %v2005, 0.0
        %v2014 = vsel %vm603, %v2010, 0.0
        %v2015 = vadd.f32 %v2013, %v2014
        %v2016 = vrot.slane %v2015, 4
        %v2017 = vadd.f32 %v2015, %v2016
        %v2018 = vrot.slane %v2017, 2
        %v2019 = vadd.f32 %v2017, %v2018
        %v2020 = vrot.slane %v2019, 1
        %v2021 = vadd.f32 %v2019, %v2020
        %v2022 = vmul.f32 %v2005, %v2005
        %v2023 = vmul.f32 %v2010, %v2010
        %v2024 = vsel %vm603, %v2022, 0.0
        %v2025 = vsel %vm603, %v2023, 0.0
        %v2026 = vadd.f32 %v2024, %v2025
        %v2027 = vrot.slane %v2026, 4
        %v2028 = vadd.f32 %v2026, %v2027
        %v2029 = vrot.slane %v2028, 2
        %v2030 = vadd.f32 %v2028, %v2029
        %v2031 = vrot.slane %v2030, 1
        %v2032 = vadd.f32 %v2030, %v2031
        %v2033 = vmul.f32 %v2021, 0.0625
        %v2034 = vmul.f32 %v2032, 0.0625
        %v2035 = vmul.f32 %v2033, %v2033
        %v2036 = vsub.f32 %v2034, %v2035
        %v2037 = vld [vmem:[#allocation9 + $0x2] sm:$0x1]
        %v2038 = vadd.f32 %v2036, 1e-05
        %v2039 = vrsqrt.pop %v2038
        %v2040 = vmul.f32 %v2037, %v2039
        %v2041 = vlaneseq
        %v2042 = vshrl.u32 %v2041, 7
        %v2043 = vsub.s32 0, %v2042
        %v2044 = vrot.slane %v2040, %v2043
        %v2045 = vmul.f32 %v2005, %v2044
        %v2046 = vmul.f32 %v2010, %v2044
        %v2047 = vld [vmem:[#allocation9 + $0x5] sm:$0x1]
        %v2048 = vmul.f32 %v2033, %v2040
        %v2049 = vsub.f32 %v2047, %v2048
        %v2050 = vlaneseq
        %v2051 = vshrl.u32 %v2050, 7
        %v2052 = vsub.s32 0, %v2051
        %v2053 = vrot.slane %v2049, %v2052
        %v2054 = vadd.f32 %v2045, %v2053
        %v2055 = vadd.f32 %v2046, %v2053
        %v2056 = vld [vmem:[#allocation9 + $0xa] sm:$0x1]
        %v2057 = vlaneseq
        %v2058 = vshrl.u32 %v2057, 7
        %v2059 = vsub.s32 0, %v2058
        %v2060 = vrot.slane %v2056, %v2059
        %v2061 = vmul.f32 %v2054, %v2060
        %v2062 = vmul.f32 %v2055, %v2060
        %2063 = vmatprep.subr.mxu0 0.0
        %2064 = vmatpush1.msra.mxu0 %v2054
        %2065 = vmatprep.subr.mxu0 0.0
        %2066 = vmatpush1.msra.mxu0 0.0
        %2067 = vmatprep.subr.mxu0 0.0
        %2068 = vmatpush1.msra.mxu0 0.0
        %2069 = vmatprep.subr.mxu0 0.0
        %2070 = vmatpush1.msra.mxu0 0.0
        %2071 = vmatprep.subr.mxu0 0.0
        %2072 = vmatpush1.msra.mxu0 0.0
        %2073 = vmatprep.subr.mxu0 0.0
        %2074 = vmatpush1.msra.mxu0 0.0
        %2075 = vmatprep.subr.mxu0 0.0
        %2076 = vmatpush1.msra.mxu0 0.0
        %2077 = vmatprep.subr.mxu0 0.0
        %2078 = vmatpush1.msra.mxu0 0.0
        %2079 = vmatprep.subr.mxu0 0.0
        %2080 = vmatpush1.msra.mxu0 0.0
        %2081 = vmatprep.subr.mxu0 0.0
        %2082 = vmatpush1.msra.mxu0 0.0
        %2083 = vmatprep.subr.mxu0 0.0
        %2084 = vmatpush1.msra.mxu0 0.0
        %2085 = vmatprep.subr.mxu0 0.0
        %2086 = vmatpush1.msra.mxu0 0.0
        %2087 = vmatprep.subr.mxu0 0.0
        %2088 = vmatpush1.msra.mxu0 0.0
        %2089 = vmatprep.subr.mxu0 0.0
        %2090 = vmatpush1.msra.mxu0 0.0
        %2091 = vmatprep.subr.mxu0 0.0
        %2092 = vmatpush1.msra.mxu0 0.0
        %2093 = vmatprep.subr.mxu0 0.0
        %2094 = vmatpush1.msra.mxu0 0.0
        %2095 = vmatprep.subr.mxu0 0.0
        %2096 = vmatpush1.msra.mxu0 0.0
        %2097 = vmatprep.subr.mxu0 0.0
        %2098 = vmatpush1.msra.mxu0 0.0
        %2099 = vmatprep.subr.mxu0 0.0
        %2100 = vmatpush1.msra.mxu0 0.0
        %2101 = vmatprep.subr.mxu0 0.0
        %2102 = vmatpush1.msra.mxu0 0.0
        %2103 = vmatprep.subr.mxu0 0.0
        %2104 = vmatpush1.msra.mxu0 0.0
        %2105 = vmatprep.subr.mxu0 0.0
        %2106 = vmatpush1.msra.mxu0 0.0
        %2107 = vmatprep.subr.mxu0 0.0
        %2108 = vmatpush1.msra.mxu0 0.0
        %2109 = vmatprep.subr.mxu0 0.0
        %2110 = vmatpush1.msra.mxu0 0.0
        %2111 = vmatprep.subr.mxu0 0.0
        %2112 = vmatpush1.msra.mxu0 0.0
        %2113 = vmatprep.subr.mxu0 0.0
        %2114 = vmatpush1.msra.mxu0 0.0
        %2115 = vmatprep.subr.mxu0 0.0
        %2116 = vmatpush1.msra.mxu0 0.0
        %2117 = vmatprep.subr.mxu0 0.0
        %2118 = vmatpush1.msra.mxu0 0.0
        %2119 = vmatprep.subr.mxu0 0.0
        %2120 = vmatpush1.msra.mxu0 0.0
        %2121 = vmatprep.subr.mxu0 0.0
        %2122 = vmatpush1.msra.mxu0 0.0
        %2123 = vmatprep.subr.mxu0 0.0
        %2124 = vmatpush1.msra.mxu0 0.0
        %2125 = vmatprep.subr.mxu0 0.0
        %2126 = vmatpush1.msra.mxu0 0.0
        %2127 = vmatprep.mubr.f32.mxu0 0.0
        %2128 = vmatmul.mubr.f32.gmra.mrb[0].mxu0 %v1700
        %v2129 = vpop.f32.mrb[0].mxu0
        %v2130 = vadd.f32 0.0, %v2129
        %v2131 = vpop.f32.mrb[0].mxu0
        %2132 = vdwg.mxu0
        %2133 = vmatprep.subr.mxu0 0.0
        %2134 = vmatpush1.msra.mxu0 %v2055
        %2135 = vmatprep.subr.mxu0 0.0
        %2136 = vmatpush1.msra.mxu0 0.0
        %2137 = vmatprep.subr.mxu0 0.0
        %2138 = vmatpush1.msra.mxu0 0.0
        %2139 = vmatprep.subr.mxu0 0.0
        %2140 = vmatpush1.msra.mxu0 0.0
        %2141 = vmatprep.subr.mxu0 0.0
        %2142 = vmatpush1.msra.mxu0 0.0
        %2143 = vmatprep.subr.mxu0 0.0
        %2144 = vmatpush1.msra.mxu0 0.0
        %2145 = vmatprep.subr.mxu0 0.0
        %2146 = vmatpush1.msra.mxu0 0.0
        %2147 = vmatprep.subr.mxu0 0.0
        %2148 = vmatpush1.msra.mxu0 0.0
        %2149 = vmatprep.subr.mxu0 0.0
        %2150 = vmatpush1.msra.mxu0 0.0
        %2151 = vmatprep.subr.mxu0 0.0
        %2152 = vmatpush1.msra.mxu0 0.0
        %2153 = vmatprep.subr.mxu0 0.0
        %2154 = vmatpush1.msra.mxu0 0.0
        %2155 = vmatprep.subr.mxu0 0.0
        %2156 = vmatpush1.msra.mxu0 0.0
        %2157 = vmatprep.subr.mxu0 0.0
        %2158 = vmatpush1.msra.mxu0 0.0
        %2159 = vmatprep.subr.mxu0 0.0
        %2160 = vmatpush1.msra.mxu0 0.0
        %2161 = vmatprep.subr.mxu0 0.0
        %2162 = vmatpush1.msra.mxu0 0.0
        %2163 = vmatprep.subr.mxu0 0.0
        %2164 = vmatpush1.msra.mxu0 0.0
        %2165 = vmatprep.subr.mxu0 0.0
        %2166 = vmatpush1.msra.mxu0 0.0
        %2167 = vmatprep.subr.mxu0 0.0
        %2168 = vmatpush1.msra.mxu0 0.0
        %2169 = vmatprep.subr.mxu0 0.0
        %2170 = vmatpush1.msra.mxu0 0.0
        %2171 = vmatprep.subr.mxu0 0.0
        %2172 = vmatpush1.msra.mxu0 0.0
        %2173 = vmatprep.subr.mxu0 0.0
        %2174 = vmatpush1.msra.mxu0 0.0
        %2175 = vmatprep.subr.mxu0 0.0
        %2176 = vmatpush1.msra.mxu0 0.0
        %2177 = vmatprep.subr.mxu0 0.0
        %2178 = vmatpush1.msra.mxu0 0.0
        %2179 = vmatprep.subr.mxu0 0.0
        %2180 = vmatpush1.msra.mxu0 0.0
        %2181 = vmatprep.subr.mxu0 0.0
        %2182 = vmatpush1.msra.mxu0 0.0
        %2183 = vmatprep.subr.mxu0 0.0
        %2184 = vmatpush1.msra.mxu0 0.0
        %2185 = vmatprep.subr.mxu0 0.0
        %2186 = vmatpush1.msra.mxu0 0.0
        %2187 = vmatprep.subr.mxu0 0.0
        %2188 = vmatpush1.msra.mxu0 0.0
        %2189 = vmatprep.subr.mxu0 0.0
        %2190 = vmatpush1.msra.mxu0 0.0
        %2191 = vmatprep.subr.mxu0 0.0
        %2192 = vmatpush1.msra.mxu0 0.0
        %2193 = vmatprep.subr.mxu0 0.0
        %2194 = vmatpush1.msra.mxu0 0.0
        %2195 = vmatprep.subr.mxu0 0.0
        %2196 = vmatpush1.msra.mxu0 0.0
        %2197 = vmatprep.mubr.f32.mxu0 0.0
        %2198 = vmatmul.mubr.f32.gmra.mrb[0].mxu0 %v1843
        %v2199 = vpop.f32.mrb[0].mxu0
        %v2200 = vadd.f32 0.0, %v2199
        %v2201 = vpop.f32.mrb[0].mxu0
        %2202 = vdwg.mxu0
        %2205 = vrot.lane.b32.xlu0 %v2054, 32
        %v2206 = vpop.permute.xlu0 %2205
        %2207 = vrot.lane.b32.xlu0 %v2055, 32
        %v2208 = vpop.permute.xlu0 %2207
        %v2211 = vsel %vm603, %v2130, %v2206
        %v2212 = vsel %vm603, %v2200, %v2208
        %v2213 = vld [vmem:[#allocation7] sm:$0xff]
        %v2214 = vld [vmem:[#allocation7 + $0x8] sm:$0xff]
        %v2215 = vld [vmem:[#allocation7 + $0x10] sm:$0xff]
        %v2216 = vld [vmem:[#allocation7 + $0x18] sm:$0xff]
        %v2217 = vld [vmem:[#allocation7 + $0x20] sm:$0xff]
        %v2218 = vld [vmem:[#allocation7 + $0x28] sm:$0xff]
        %v2219 = vld [vmem:[#allocation7 + $0x30] sm:$0xff]
        %v2220 = vld [vmem:[#allocation7 + $0x38] sm:$0xff]
        %2229 = vrot.lane.b32.xlu0 %v2213, 96
        %v2230 = vpop.permute.xlu0 %2229
        %2231 = vrot.lane.b32.xlu0 %v2214, 96
        %v2232 = vpop.permute.xlu0 %2231
        %2233 = vrot.lane.b32.xlu0 %v2215, 96
        %v2234 = vpop.permute.xlu0 %2233
        %2235 = vrot.lane.b32.xlu0 %v2216, 96
        %v2236 = vpop.permute.xlu0 %2235
        %2237 = vrot.lane.b32.xlu0 %v2217, 96
        %v2238 = vpop.permute.xlu0 %2237
        %2239 = vrot.lane.b32.xlu0 %v2218, 96
        %v2240 = vpop.permute.xlu0 %2239
        %2241 = vrot.lane.b32.xlu0 %v2219, 96
        %v2242 = vpop.permute.xlu0 %2241
        %2243 = vrot.lane.b32.xlu0 %v2220, 96
        %v2244 = vpop.permute.xlu0 %2243
        %v2254 = vsel %vm1931, %v2211, 0
        %v2257 = vsel %vm1931, %v2212, 0
        %2259 = vmatprep.subr.mxu0 0.0
        %2260 = vmatpush1.msra.mxu0 %v2230
        %2261 = vmatprep.subr.mxu0 0.0
        %2262 = vmatpush1.msra.mxu0 %v2232
        %2263 = vmatprep.subr.mxu0 0.0
        %2264 = vmatpush1.msra.mxu0 %v2234
        %2265 = vmatprep.subr.mxu0 0.0
        %2266 = vmatpush1.msra.mxu0 %v2236
        %2267 = vmatprep.subr.mxu0 0.0
        %2268 = vmatpush1.msra.mxu0 %v2238
        %2269 = vmatprep.subr.mxu0 0.0
        %2270 = vmatpush1.msra.mxu0 %v2240
        %2271 = vmatprep.subr.mxu0 0.0
        %2272 = vmatpush1.msra.mxu0 %v2242
        %2273 = vmatprep.subr.mxu0 0.0
        %2274 = vmatpush1.msra.mxu0 %v2244
        %2275 = vmatprep.subr.mxu0 0.0
        %2276 = vmatpush1.msra.mxu0 0.0
        %2277 = vmatprep.subr.mxu0 0.0
        %2278 = vmatpush1.msra.mxu0 0.0
        %2279 = vmatprep.subr.mxu0 0.0
        %2280 = vmatpush1.msra.mxu0 0.0
        %2281 = vmatprep.subr.mxu0 0.0
        %2282 = vmatpush1.msra.mxu0 0.0
        %2283 = vmatprep.subr.mxu0 0.0
        %2284 = vmatpush1.msra.mxu0 0.0
        %2285 = vmatprep.subr.mxu0 0.0
        %2286 = vmatpush1.msra.mxu0 0.0
        %2287 = vmatprep.subr.mxu0 0.0
        %2288 = vmatpush1.msra.mxu0 0.0
        %2289 = vmatprep.subr.mxu0 0.0
        %2290 = vmatpush1.msra.mxu0 0.0
        %2291 = vmatprep.subr.mxu0 0.0
        %2292 = vmatpush1.msra.mxu0 0.0
        %2293 = vmatprep.subr.mxu0 0.0
        %2294 = vmatpush1.msra.mxu0 0.0
        %2295 = vmatprep.subr.mxu0 0.0
        %2296 = vmatpush1.msra.mxu0 0.0
        %2297 = vmatprep.subr.mxu0 0.0
        %2298 = vmatpush1.msra.mxu0 0.0
        %2299 = vmatprep.subr.mxu0 0.0
        %2300 = vmatpush1.msra.mxu0 0.0
        %2301 = vmatprep.subr.mxu0 0.0
        %2302 = vmatpush1.msra.mxu0 0.0
        %2303 = vmatprep.subr.mxu0 0.0
        %2304 = vmatpush1.msra.mxu0 0.0
        %2305 = vmatprep.subr.mxu0 0.0
        %2306 = vmatpush1.msra.mxu0 0.0
        %2307 = vmatprep.subr.mxu0 0.0
        %2308 = vmatpush1.msra.mxu0 0.0
        %2309 = vmatprep.subr.mxu0 0.0
        %2310 = vmatpush1.msra.mxu0 0.0
        %2311 = vmatprep.subr.mxu0 0.0
        %2312 = vmatpush1.msra.mxu0 0.0
        %2313 = vmatprep.subr.mxu0 0.0
        %2314 = vmatpush1.msra.mxu0 0.0
        %2315 = vmatprep.subr.mxu0 0.0
        %2316 = vmatpush1.msra.mxu0 0.0
        %2317 = vmatprep.subr.mxu0 0.0
        %2318 = vmatpush1.msra.mxu0 0.0
        %2319 = vmatprep.subr.mxu0 0.0
        %2320 = vmatpush1.msra.mxu0 0.0
        %2321 = vmatprep.subr.mxu0 0.0
        %2322 = vmatpush1.msra.mxu0 0.0
        %2323 = vmatprep.mubr.f32.mxu0 0.0
        %2324 = vmatmul.mubr.f32.gmra.mrb[0].mxu0 %v2254
        %v2325 = vpop.f32.mrb[0].mxu0
        %v2326 = vadd.f32 0.0, %v2325
        %v2327 = vpop.f32.mrb[0].mxu0
        %2328 = vmatprep.mubr.f32.mxu0 0.0
        %2329 = vmatmul.mubr.f32.gmra.mrb[0].mxu0 %v2257
        %v2330 = vpop.f32.mrb[0].mxu0
        %v2331 = vadd.f32 0.0, %v2330
        %v2332 = vpop.f32.mrb[0].mxu0
        %2333 = vdwg.mxu0
        %v2334 = vsel %vm603, %v2326, 0.0
        %v2335 = vsel %vm603, %v2331, 0.0
        %v2336 = vadd.f32 %v2334, %v2335
        %v2337 = vrot.slane %v2336, 4
        %v2338 = vadd.f32 %v2336, %v2337
        %v2339 = vrot.slane %v2338, 2
        %v2340 = vadd.f32 %v2338, %v2339
        %v2341 = vrot.slane %v2340, 1
        %v2342 = vadd.f32 %v2340, %v2341
        %v2343 = vmul.f32 %v2326, %v2326
        %v2344 = vmul.f32 %v2331, %v2331
        %v2345 = vsel %vm603, %v2343, 0.0
        %v2346 = vsel %vm603, %v2344, 0.0
        %v2347 = vadd.f32 %v2345, %v2346
        %v2348 = vrot.slane %v2347, 4
        %v2349 = vadd.f32 %v2347, %v2348
        %v2350 = vrot.slane %v2349, 2
        %v2351 = vadd.f32 %v2349, %v2350
        %v2352 = vrot.slane %v2351, 1
        %v2353 = vadd.f32 %v2351, %v2352
        %v2354 = vmul.f32 %v2342, 0.0625
        %v2355 = vmul.f32 %v2353, 0.0625
        %v2356 = vmul.f32 %v2354, %v2354
        %v2357 = vsub.f32 %v2355, %v2356
        %v2358 = vld [vmem:[#allocation9 + $0x3] sm:$0x1]
        %v2359 = vadd.f32 %v2357, 1e-05
        %v2360 = vrsqrt.pop %v2359
        %v2361 = vmul.f32 %v2358, %v2360
        %v2362 = vlaneseq
        %v2363 = vshrl.u32 %v2362, 7
        %v2364 = vsub.s32 0, %v2363
        %v2365 = vrot.slane %v2361, %v2364
        %v2366 = vmul.f32 %v2326, %v2365
        %v2367 = vmul.f32 %v2331, %v2365
        %v2368 = vld [vmem:[#allocation9 + $0x6] sm:$0x1]
        %v2369 = vmul.f32 %v2354, %v2361
        %v2370 = vsub.f32 %v2368, %v2369
        %v2371 = vlaneseq
        %v2372 = vshrl.u32 %v2371, 7
        %v2373 = vsub.s32 0, %v2372
        %v2374 = vrot.slane %v2370, %v2373
        %v2375 = vadd.f32 %v2366, %v2374
        %v2376 = vadd.f32 %v2367, %v2374
        %v2377 = vld [vmem:[#allocation9 + $0xb] sm:$0x1]
        %v2378 = vlaneseq
        %v2379 = vshrl.u32 %v2378, 7
        %v2380 = vsub.s32 0, %v2379
        %v2381 = vrot.slane %v2377, %v2380
        %v2382 = vmul.f32 %v2375, %v2381
        %v2383 = vmul.f32 %v2376, %v2381
        %v2384 = vadd.f32 %v2061, %v2382
        %v2385 = vadd.f32 %v2062, %v2383
        %2386 = vmatprep.subr.mxu0 0.0
        %2387 = vmatpush1.msra.mxu0 %v2375
        %2388 = vmatprep.subr.mxu0 0.0
        %2389 = vmatpush1.msra.mxu0 0.0
        %2390 = vmatprep.subr.mxu0 0.0
        %2391 = vmatpush1.msra.mxu0 0.0
        %2392 = vmatprep.subr.mxu0 0.0
        %2393 = vmatpush1.msra.mxu0 0.0
        %2394 = vmatprep.subr.mxu0 0.0
        %2395 = vmatpush1.msra.mxu0 0.0
        %2396 = vmatprep.subr.mxu0 0.0
        %2397 = vmatpush1.msra.mxu0 0.0
        %2398 = vmatprep.subr.mxu0 0.0
        %2399 = vmatpush1.msra.mxu0 0.0
        %2400 = vmatprep.subr.mxu0 0.0
        %2401 = vmatpush1.msra.mxu0 0.0
        %2402 = vmatprep.subr.mxu0 0.0
        %2403 = vmatpush1.msra.mxu0 0.0
        %2404 = vmatprep.subr.mxu0 0.0
        %2405 = vmatpush1.msra.mxu0 0.0
        %2406 = vmatprep.subr.mxu0 0.0
        %2407 = vmatpush1.msra.mxu0 0.0
        %2408 = vmatprep.subr.mxu0 0.0
        %2409 = vmatpush1.msra.mxu0 0.0
        %2410 = vmatprep.subr.mxu0 0.0
        %2411 = vmatpush1.msra.mxu0 0.0
        %2412 = vmatprep.subr.mxu0 0.0
        %2413 = vmatpush1.msra.mxu0 0.0
        %2414 = vmatprep.subr.mxu0 0.0
        %2415 = vmatpush1.msra.mxu0 0.0
        %2416 = vmatprep.subr.mxu0 0.0
        %2417 = vmatpush1.msra.mxu0 0.0
        %2418 = vmatprep.subr.mxu0 0.0
        %2419 = vmatpush1.msra.mxu0 0.0
        %2420 = vmatprep.subr.mxu0 0.0
        %2421 = vmatpush1.msra.mxu0 0.0
        %2422 = vmatprep.subr.mxu0 0.0
        %2423 = vmatpush1.msra.mxu0 0.0
        %2424 = vmatprep.subr.mxu0 0.0
        %2425 = vmatpush1.msra.mxu0 0.0
        %2426 = vmatprep.subr.mxu0 0.0
        %2427 = vmatpush1.msra.mxu0 0.0
        %2428 = vmatprep.subr.mxu0 0.0
        %2429 = vmatpush1.msra.mxu0 0.0
        %2430 = vmatprep.subr.mxu0 0.0
        %2431 = vmatpush1.msra.mxu0 0.0
        %2432 = vmatprep.subr.mxu0 0.0
        %2433 = vmatpush1.msra.mxu0 0.0
        %2434 = vmatprep.subr.mxu0 0.0
        %2435 = vmatpush1.msra.mxu0 0.0
        %2436 = vmatprep.subr.mxu0 0.0
        %2437 = vmatpush1.msra.mxu0 0.0
        %2438 = vmatprep.subr.mxu0 0.0
        %2439 = vmatpush1.msra.mxu0 0.0
        %2440 = vmatprep.subr.mxu0 0.0
        %2441 = vmatpush1.msra.mxu0 0.0
        %2442 = vmatprep.subr.mxu0 0.0
        %2443 = vmatpush1.msra.mxu0 0.0
        %2444 = vmatprep.subr.mxu0 0.0
        %2445 = vmatpush1.msra.mxu0 0.0
        %2446 = vmatprep.subr.mxu0 0.0
        %2447 = vmatpush1.msra.mxu0 0.0
        %2448 = vmatprep.subr.mxu0 0.0
        %2449 = vmatpush1.msra.mxu0 0.0
        %2450 = vmatprep.mubr.f32.mxu0 0.0
        %2451 = vmatmul.mubr.f32.gmra.mrb[0].mxu0 %v1700
        %v2452 = vpop.f32.mrb[0].mxu0
        %v2453 = vadd.f32 0.0, %v2452
        %v2454 = vpop.f32.mrb[0].mxu0
        %2455 = vdwg.mxu0
        %2456 = vmatprep.subr.mxu0 0.0
        %2457 = vmatpush1.msra.mxu0 %v2376
        %2458 = vmatprep.subr.mxu0 0.0
        %2459 = vmatpush1.msra.mxu0 0.0
        %2460 = vmatprep.subr.mxu0 0.0
        %2461 = vmatpush1.msra.mxu0 0.0
        %2462 = vmatprep.subr.mxu0 0.0
        %2463 = vmatpush1.msra.mxu0 0.0
        %2464 = vmatprep.subr.mxu0 0.0
        %2465 = vmatpush1.msra.mxu0 0.0
        %2466 = vmatprep.subr.mxu0 0.0
        %2467 = vmatpush1.msra.mxu0 0.0
        %2468 = vmatprep.subr.mxu0 0.0
        %2469 = vmatpush1.msra.mxu0 0.0
        %2470 = vmatprep.subr.mxu0 0.0
        %2471 = vmatpush1.msra.mxu0 0.0
        %2472 = vmatprep.subr.mxu0 0.0
        %2473 = vmatpush1.msra.mxu0 0.0
        %2474 = vmatprep.subr.mxu0 0.0
        %2475 = vmatpush1.msra.mxu0 0.0
        %2476 = vmatprep.subr.mxu0 0.0
        %2477 = vmatpush1.msra.mxu0 0.0
        %2478 = vmatprep.subr.mxu0 0.0
        %2479 = vmatpush1.msra.mxu0 0.0
        %2480 = vmatprep.subr.mxu0 0.0
        %2481 = vmatpush1.msra.mxu0 0.0
        %2482 = vmatprep.subr.mxu0 0.0
        %2483 = vmatpush1.msra.mxu0 0.0
        %2484 = vmatprep.subr.mxu0 0.0
        %2485 = vmatpush1.msra.mxu0 0.0
        %2486 = vmatprep.subr.mxu0 0.0
        %2487 = vmatpush1.msra.mxu0 0.0
        %2488 = vmatprep.subr.mxu0 0.0
        %2489 = vmatpush1.msra.mxu0 0.0
        %2490 = vmatprep.subr.mxu0 0.0
        %2491 = vmatpush1.msra.mxu0 0.0
        %2492 = vmatprep.subr.mxu0 0.0
        %2493 = vmatpush1.msra.mxu0 0.0
        %2494 = vmatprep.subr.mxu0 0.0
        %2495 = vmatpush1.msra.mxu0 0.0
        %2496 = vmatprep.subr.mxu0 0.0
        %2497 = vmatpush1.msra.mxu0 0.0
        %2498 = vmatprep.subr.mxu0 0.0
        %2499 = vmatpush1.msra.mxu0 0.0
        %2500 = vmatprep.subr.mxu0 0.0
        %2501 = vmatpush1.msra.mxu0 0.0
        %2502 = vmatprep.subr.mxu0 0.0
        %2503 = vmatpush1.msra.mxu0 0.0
        %2504 = vmatprep.subr.mxu0 0.0
        %2505 = vmatpush1.msra.mxu0 0.0
        %2506 = vmatprep.subr.mxu0 0.0
        %2507 = vmatpush1.msra.mxu0 0.0
        %2508 = vmatprep.subr.mxu0 0.0
        %2509 = vmatpush1.msra.mxu0 0.0
        %2510 = vmatprep.subr.mxu0 0.0
        %2511 = vmatpush1.msra.mxu0 0.0
        %2512 = vmatprep.subr.mxu0 0.0
        %2513 = vmatpush1.msra.mxu0 0.0
        %2514 = vmatprep.subr.mxu0 0.0
        %2515 = vmatpush1.msra.mxu0 0.0
        %2516 = vmatprep.subr.mxu0 0.0
        %2517 = vmatpush1.msra.mxu0 0.0
        %2518 = vmatprep.subr.mxu0 0.0
        %2519 = vmatpush1.msra.mxu0 0.0
        %2520 = vmatprep.mubr.f32.mxu0 0.0
        %2521 = vmatmul.mubr.f32.gmra.mrb[0].mxu0 %v1843
        %v2522 = vpop.f32.mrb[0].mxu0
        %v2523 = vadd.f32 0.0, %v2522
        %v2524 = vpop.f32.mrb[0].mxu0
        %2525 = vdwg.mxu0
        %2528 = vrot.lane.b32.xlu0 %v2375, 32
        %v2529 = vpop.permute.xlu0 %2528
        %2530 = vrot.lane.b32.xlu0 %v2376, 32
        %v2531 = vpop.permute.xlu0 %2530
        %v2534 = vsel %vm603, %v2453, %v2529
        %v2535 = vsel %vm603, %v2523, %v2531
        %v2536 = vld [vmem:[#allocation7] sm:$0xff]
        %v2537 = vld [vmem:[#allocation7 + $0x8] sm:$0xff]
        %v2538 = vld [vmem:[#allocation7 + $0x10] sm:$0xff]
        %v2539 = vld [vmem:[#allocation7 + $0x18] sm:$0xff]
        %v2540 = vld [vmem:[#allocation7 + $0x20] sm:$0xff]
        %v2541 = vld [vmem:[#allocation7 + $0x28] sm:$0xff]
        %v2542 = vld [vmem:[#allocation7 + $0x30] sm:$0xff]
        %v2543 = vld [vmem:[#allocation7 + $0x38] sm:$0xff]
        %2552 = vrot.lane.b32.xlu0 %v2536, 64
        %v2553 = vpop.permute.xlu0 %2552
        %2554 = vrot.lane.b32.xlu0 %v2537, 64
        %v2555 = vpop.permute.xlu0 %2554
        %2556 = vrot.lane.b32.xlu0 %v2538, 64
        %v2557 = vpop.permute.xlu0 %2556
        %2558 = vrot.lane.b32.xlu0 %v2539, 64
        %v2559 = vpop.permute.xlu0 %2558
        %2560 = vrot.lane.b32.xlu0 %v2540, 64
        %v2561 = vpop.permute.xlu0 %2560
        %2562 = vrot.lane.b32.xlu0 %v2541, 64
        %v2563 = vpop.permute.xlu0 %2562
        %2564 = vrot.lane.b32.xlu0 %v2542, 64
        %v2565 = vpop.permute.xlu0 %2564
        %2566 = vrot.lane.b32.xlu0 %v2543, 64
        %v2567 = vpop.permute.xlu0 %2566
        %v2577 = vsel %vm1931, %v2534, 0
        %v2580 = vsel %vm1931, %v2535, 0
        %2582 = vmatprep.subr.mxu0 0.0
        %2583 = vmatpush1.msra.mxu0 %v2553
        %2584 = vmatprep.subr.mxu0 0.0
        %2585 = vmatpush1.msra.mxu0 %v2555
        %2586 = vmatprep.subr.mxu0 0.0
        %2587 = vmatpush1.msra.mxu0 %v2557
        %2588 = vmatprep.subr.mxu0 0.0
        %2589 = vmatpush1.msra.mxu0 %v2559
        %2590 = vmatprep.subr.mxu0 0.0
        %2591 = vmatpush1.msra.mxu0 %v2561
        %2592 = vmatprep.subr.mxu0 0.0
        %2593 = vmatpush1.msra.mxu0 %v2563
        %2594 = vmatprep.subr.mxu0 0.0
        %2595 = vmatpush1.msra.mxu0 %v2565
        %2596 = vmatprep.subr.mxu0 0.0
        %2597 = vmatpush1.msra.mxu0 %v2567
        %2598 = vmatprep.subr.mxu0 0.0
        %2599 = vmatpush1.msra.mxu0 0.0
        %2600 = vmatprep.subr.mxu0 0.0
        %2601 = vmatpush1.msra.mxu0 0.0
        %2602 = vmatprep.subr.mxu0 0.0
        %2603 = vmatpush1.msra.mxu0 0.0
        %2604 = vmatprep.subr.mxu0 0.0
        %2605 = vmatpush1.msra.mxu0 0.0
        %2606 = vmatprep.subr.mxu0 0.0
        %2607 = vmatpush1.msra.mxu0 0.0
        %2608 = vmatprep.subr.mxu0 0.0
        %2609 = vmatpush1.msra.mxu0 0.0
        %2610 = vmatprep.subr.mxu0 0.0
        %2611 = vmatpush1.msra.mxu0 0.0
        %2612 = vmatprep.subr.mxu0 0.0
        %2613 = vmatpush1.msra.mxu0 0.0
        %2614 = vmatprep.subr.mxu0 0.0
        %2615 = vmatpush1.msra.mxu0 0.0
        %2616 = vmatprep.subr.mxu0 0.0
        %2617 = vmatpush1.msra.mxu0 0.0
        %2618 = vmatprep.subr.mxu0 0.0
        %2619 = vmatpush1.msra.mxu0 0.0
        %2620 = vmatprep.subr.mxu0 0.0
        %2621 = vmatpush1.msra.mxu0 0.0
        %2622 = vmatprep.subr.mxu0 0.0
        %2623 = vmatpush1.msra.mxu0 0.0
        %2624 = vmatprep.subr.mxu0 0.0
        %2625 = vmatpush1.msra.mxu0 0.0
        %2626 = vmatprep.subr.mxu0 0.0
        %2627 = vmatpush1.msra.mxu0 0.0
        %2628 = vmatprep.subr.mxu0 0.0
        %2629 = vmatpush1.msra.mxu0 0.0
        %2630 = vmatprep.subr.mxu0 0.0
        %2631 = vmatpush1.msra.mxu0 0.0
        %2632 = vmatprep.subr.mxu0 0.0
        %2633 = vmatpush1.msra.mxu0 0.0
        %2634 = vmatprep.subr.mxu0 0.0
        %2635 = vmatpush1.msra.mxu0 0.0
        %2636 = vmatprep.subr.mxu0 0.0
        %2637 = vmatpush1.msra.mxu0 0.0
        %2638 = vmatprep.subr.mxu0 0.0
        %2639 = vmatpush1.msra.mxu0 0.0
        %2640 = vmatprep.subr.mxu0 0.0
        %2641 = vmatpush1.msra.mxu0 0.0
        %2642 = vmatprep.subr.mxu0 0.0
        %2643 = vmatpush1.msra.mxu0 0.0
        %2644 = vmatprep.subr.mxu0 0.0
        %2645 = vmatpush1.msra.mxu0 0.0
        %2646 = vmatprep.mubr.f32.mxu0 0.0
        %2647 = vmatmul.mubr.f32.gmra.mrb[0].mxu0 %v2577
        %v2648 = vpop.f32.mrb[0].mxu0
        %v2649 = vadd.f32 0.0, %v2648
        %v2650 = vpop.f32.mrb[0].mxu0
        %2651 = vmatprep.mubr.f32.mxu0 0.0
        %2652 = vmatmul.mubr.f32.gmra.mrb[0].mxu0 %v2580
        %v2653 = vpop.f32.mrb[0].mxu0
        %v2654 = vadd.f32 0.0, %v2653
        %v2655 = vpop.f32.mrb[0].mxu0
        %2656 = vdwg.mxu0
        %v2657 = vsel %vm603, %v2649, 0.0
        %v2658 = vsel %vm603, %v2654, 0.0
        %v2659 = vadd.f32 %v2657, %v2658
        %v2660 = vrot.slane %v2659, 4
        %v2661 = vadd.f32 %v2659, %v2660
        %v2662 = vrot.slane %v2661, 2
        %v2663 = vadd.f32 %v2661, %v2662
        %v2664 = vrot.slane %v2663, 1
        %v2665 = vadd.f32 %v2663, %v2664
        %v2666 = vmul.f32 %v2649, %v2649
        %v2667 = vmul.f32 %v2654, %v2654
        %v2668 = vsel %vm603, %v2666, 0.0
        %v2669 = vsel %vm603, %v2667, 0.0
        %v2670 = vadd.f32 %v2668, %v2669
        %v2671 = vrot.slane %v2670, 4
        %v2672 = vadd.f32 %v2670, %v2671
        %v2673 = vrot.slane %v2672, 2
        %v2674 = vadd.f32 %v2672, %v2673
        %v2675 = vrot.slane %v2674, 1
        %v2676 = vadd.f32 %v2674, %v2675
        %v2677 = vmul.f32 %v2665, 0.0625
        %v2678 = vmul.f32 %v2676, 0.0625
        %v2679 = vmul.f32 %v2677, %v2677
        %v2680 = vsub.f32 %v2678, %v2679
        %v2681 = vld [vmem:[#allocation9 + $0x4] sm:$0x1]
        %v2682 = vadd.f32 %v2680, 1e-05
        %v2683 = vrsqrt.pop %v2682
        %v2684 = vmul.f32 %v2681, %v2683
        %v2685 = vlaneseq
        %v2686 = vshrl.u32 %v2685, 7
        %v2687 = vsub.s32 0, %v2686
        %v2688 = vrot.slane %v2684, %v2687
        %v2689 = vmul.f32 %v2649, %v2688
        %v2690 = vmul.f32 %v2654, %v2688
        %v2691 = vld [vmem:[#allocation9 + $0x7] sm:$0x1]
        %v2692 = vmul.f32 %v2677, %v2684
        %v2693 = vsub.f32 %v2691, %v2692
        %v2694 = vlaneseq
        %v2695 = vshrl.u32 %v2694, 7
        %v2696 = vsub.s32 0, %v2695
        %v2697 = vrot.slane %v2693, %v2696
        %v2698 = vadd.f32 %v2689, %v2697
        %v2699 = vadd.f32 %v2690, %v2697
        %v2700 = vld [vmem:[#allocation9 + $0xc] sm:$0x1]
        %v2701 = vlaneseq
        %v2702 = vshrl.u32 %v2701, 7
        %v2703 = vsub.s32 0, %v2702
        %v2704 = vrot.slane %v2700, %v2703
        %v2705 = vmul.f32 %v2698, %v2704
        %v2706 = vmul.f32 %v2699, %v2704
        %v2707 = vadd.f32 %v2384, %v2705
        %v2708 = vadd.f32 %v2385, %v2706
        %v2709 = vld [vmem:[#allocation9 + $0xd] sm:$0x1]
        %v2710 = vlaneseq
        %v2711 = vshrl.u32 %v2710, 7
        %v2712 = vsub.s32 0, %v2711
        %v2713 = vrot.slane %v2709, %v2712
        %v2714 = vadd.f32 %v2707, %v2713
        %v2715 = vadd.f32 %v2708, %v2713
        %v2716 = vmax.f32 %v2714, 0.0
        %v2717 = vmax.f32 %v2715, 0.0
        %v2719 = vrot.slane %v2716, 7
        %v2722 = vrot.slane %v2717, 6
        %vm2724 = vcmask 1040384
        %v2725 = vsel %vm2724, %v2719, %v2722
        %v2726 = vld [vmem:[#allocation9 + $0x10] sm:$0xff]
        %v2727 = vld [vmem:[#allocation9 + $0x18] sm:$0xff]
        %v2730 = vunpack.c.l.s4 1966171168
        %v2731 = vunpack.c.0.s8 %v2730
        %v2732 = vlaneseq
        %v2733 = vshrl.u32 %v2732, 7
        %v2734 = vsub.s32 %v2731, %v2733
        %v2735 = vrot.slane %v2725, %v2734
        %v2736 = vcombine.high %v2735, %v2735
        %v2738 = vunpack.c.l.s4 1966171168
        %v2739 = vunpack.c.0.s8 %v2738
        %v2740 = vlaneseq
        %v2741 = vshrl.u32 %v2740, 7
        %v2742 = vsub.s32 %v2739, %v2741
        %v2743 = vrot.slane %v2735, %v2742
        %v2745 = vunpack.c.l.s4 1966171168
        %v2746 = vunpack.c.0.s8 %v2745
        %v2747 = vlaneseq
        %v2748 = vshrl.u32 %v2747, 7
        %v2749 = vsub.s32 %v2746, %v2748
        %v2750 = vrot.slane %v2736, %v2749
        %v2751 = vlaneseq
        %v2752 = vshrl.u32 %v2751, 7
        %v2753 = vsub.s32 0, %v2752
        %v2754 = vrot.slane %v2743, %v2753
        %v2755 = vlaneseq
        %v2756 = vshrl.u32 %v2755, 7
        %v2757 = vsub.s32 0, %v2756
        %v2758 = vrot.slane %v2750, %v2757
        %v2761 = vmul.f32 %v2754, %v2726
        %v2762 = vmul.f32 %v2754, %v2727
        %v2763 = vmul.f32 %v2758, %v2726
        %v2764 = vmul.f32 %v2758, %v2727
        %v2765 = vsel %vm603, %v2761, 0.0
        %2766 = vadd.xlane.f32.xlu0 %v2765
        %v2767 = vpop.xlane.xlu0 %2766
        %v2768 = vsel %vm603, %v2762, 0.0
        %2769 = vadd.xlane.f32.xlu0 %v2768
        %v2770 = vpop.xlane.xlu0 %2769
        %v2771 = vsel %vm603, %v2763, 0.0
        %2772 = vadd.xlane.f32.xlu0 %v2771
        %v2773 = vpop.xlane.xlu0 %2772
        %v2774 = vsel %vm603, %v2764, 0.0
        %2775 = vadd.xlane.f32.xlu0 %v2774
        %v2776 = vpop.xlane.xlu0 %2775
        %v2777 = vld [vmem:[#allocation9 + $0x8] sm:$0x1]
        %v2778 = vlaneseq
        %v2779 = vshrl.u32 %v2778, 7
        %v2780 = vsub.s32 0, %v2779
        %v2781 = vrot.slane %v2777, %v2780
        %2784 = vbcast.lane.b32.xlu0 %v2781, 256
        %v2785 = vpop.permute.xlu0 %2784
        %s2787 = sor.u32 256, 8
        %2788 = vbcast.lane.b32.xlu0 %v2781, %s2787
        %v2789 = vpop.permute.xlu0 %2788
        %v2792 = vadd.f32 %v2767, %v2785
        %v2793 = vadd.f32 %v2770, %v2789
        %v2794 = vadd.f32 %v2773, %v2785
        %v2795 = vadd.f32 %v2776, %v2789
        %v2796 = vmax.f32 %v2792, 0.0
        %v2797 = vmax.f32 %v2793, 0.0
        %v2798 = vmax.f32 %v2794, 0.0
        %v2799 = vmax.f32 %v2795, 0.0
        %v2800 = vld [vmem:[#allocation9 + $0x9] sm:$0x1]
        %v2801 = vlaneseq
        %v2802 = vshrl.u32 %v2801, 7
        %v2803 = vsub.s32 0, %v2802
        %v2804 = vrot.slane %v2800, %v2803
        %2807 = vbcast.lane.b32.xlu0 %v2804, 256
        %v2808 = vpop.permute.xlu0 %2807
        %s2810 = sor.u32 256, 8
        %2811 = vbcast.lane.b32.xlu0 %v2804, %s2810
        %v2812 = vpop.permute.xlu0 %2811
        %v2815 = vmul.f32 %v2796, %v2808
        %v2816 = vmul.f32 %v2797, %v2812
        %v2817 = vmul.f32 %v2798, %v2808
        %v2818 = vmul.f32 %v2799, %v2812
        %2823 = vset.pattern.permute.xlu0 0
        %2824 = vperm.xlu0 %2823, %v2815
        %v2825 = vpop.permute.xlu0 %2824
        %2826 = vset.pattern.permute.xlu0 0
        %2827 = vperm.xlu0 %2826, %v2816
        %v2828 = vpop.permute.xlu0 %2827
        %2829 = vset.pattern.permute.xlu0 0
        %2830 = vperm.xlu0 %2829, %v2817
        %v2831 = vpop.permute.xlu0 %2830
        %2832 = vset.pattern.permute.xlu0 0
        %2833 = vperm.xlu0 %2832, %v2818
        %v2834 = vpop.permute.xlu0 %2833
        %v2835 = vlaneseq
        %v2836 = vshrl.u32 %v2835, 7
        %v2837 = vsub.s32 %v1419, %v2836
        %v2838 = vrot.slane %v2825, %v2837
        %v2839 = vadd.s32 %v1419, 4294967288
        %v2840 = vlaneseq
        %v2841 = vshrl.u32 %v2840, 7
        %v2842 = vsub.s32 %v2839, %v2841
        %v2843 = vrot.slane %v2828, %v2842
        %vm2844 = vcmask 130112
        %v2845 = vsel %vm2844, %v2843, %v2838
        %v2846 = vlaneseq
        %v2847 = vshrl.u32 %v2846, 7
        %v2848 = vsub.s32 %v1419, %v2847
        %v2849 = vrot.slane %v2831, %v2848
        %v2850 = vlaneseq
        %v2851 = vshrl.u32 %v2850, 7
        %v2852 = vsub.s32 %v2839, %v2851
        %v2853 = vrot.slane %v2834, %v2852
        %v2854 = vsel %vm2844, %v2853, %v2849
        %v2855 = vsel %vm1484, %v2854, %v2845
        %vm2857 = vcmask 123904
        %v2858 = vsel %vm2857, %v2855, 0.0
        %2859 = vadd.xlane.f32.xlu0 %v2858
        %v2860 = vpop.xlane.xlu0 %2859
        %v2861 = vld [vmem:[#allocation9 + $0xe] sm:$0x1]
        %v2862 = vlaneseq
        %v2863 = vshrl.u32 %v2862, 7
        %v2864 = vsub.s32 0, %v2863
        %v2865 = vrot.slane %v2861, %v2864
        %v2866 = vadd.f32 %v2860, %v2865
        %vm2867 = vcmask 1024
        %2868 = vst.msk [vmem:[%s423] sm:$0x3] %vm2867, %v2866
        %p2869 = scmp.lt.s32.totalorder %s23, 3
        %s2870 = scalar_select %p2869, %s23, 3
        %s2871 = smul.addr %s2870, 2
        %s2872 = scalar_lea.vmem %s9, %s2871
        // Predicated region
        $region77: #{timegnn_forward.1} parent=55 // pred_check
          %p2873 = pneg %p240
        $region78: #{timegnn_forward.1} parent=55 // pred_check_branch
          %2875 = sbr.rel (%p2873) target = $region80
        $region79: #{timegnn_forward.1} parent=55 // pred_region
          _
        $region80: #{timegnn_forward.1} parent=55 // pred_fallthru
          _
      $region56: #{timegnn_forward.1} parent=5 // pred_fallthru
        _
      %p2876 = scmp.le.s32.totalorder 2, %s18
      // Predicated region
      $region81: #{timegnn_forward.1} parent=5 // pred_check
        %p2877 = pneg %p2876
      $region82: #{timegnn_forward.1} parent=5 // pred_check_branch
        %2879 = sbr.rel (%p2877) target = $region84
      $region83: #{timegnn_forward.1} parent=5 // pred_region
        %s2880 = ssub.s32 %s18, 2
        // Predicated region
        $region85: #{timegnn_forward.1} parent=83 // pred_check
          %p2881 = pneg %p246
        $region86: #{timegnn_forward.1} parent=83 // pred_check_branch
          %2883 = sbr.rel (%p2881) target = $region88
        $region87: #{timegnn_forward.1} parent=83 // pred_region
          %p2884 = scmp.lt.s32.totalorder %s24, 3
          %s2885 = scalar_select %p2884, %s24, 3
          %s2886 = smul.addr %s2885, 2
          %s2887 = scalar_lea.vmem %s9, %s2886
        $region88: #{timegnn_forward.1} parent=83 // pred_fallthru
          _
      $region84: #{timegnn_forward.1} parent=5 // pred_fallthru
        _
    $region6: #{timegnn_forward.1} parent=1 // loop_footer
      %s22 = sadd.s32 1, %s18
    $region7: #{timegnn_forward.1} parent=1 // loop_footer_branch
      %17 = sbr.rel target = $region3
    $region8: #{timegnn_forward.1} parent=1 // loop_exit
      _
    %2888 = vsyncpa [#allocation3], 1
    %s2889 = scalar_lea.sflag [#allocation3], 1
    %2890 = vsyncpa %s2889, 1
    %2891 = vsyncpa [#allocation5], 1
    %2892 = vsyncpa [#allocation8], 1

</llo_original>
